<compile_context>
chip_gen: v6e
topology: v6e:2x2x1
jax: 0.10.0
libtpu: 0.0.40
codegen_flags: <defaults>
</compile_context>

<pallas_src>
import math
import jax
import jax.numpy as jnp
from jax import lax
from jax.experimental import pallas as pl
from jax.experimental.pallas import tpu as pltpu

# ---- small synthetic config (mirrors cfg.*) ----
VOCAB = 30          # cfg.vocab_size
N_SEG = 2           # cfg.n_segments
DIM = 32            # cfg.dim
N_HEADS = 4         # cfg.n_heads
DIM_FF = 64         # cfg.dim_ff
N_LAYERS = 2        # cfg.n_layers
MAX_LEN = 8         # cfg.max_len
CLASS_VEC_LEN = 4   # cfg.class_vec_len
BATCH = 2
EPS = 1e-12         # pytorchic-bert LayerNorm variance_epsilon


# ---------------- in-kernel helpers ----------------
def _layer_norm(x, g, b):
    u = jnp.mean(x, axis=-1, keepdims=True)
    xc = x - u
    s = jnp.mean(xc * xc, axis=-1, keepdims=True)
    return g * (xc * lax.rsqrt(s + EPS)) + b


def _gelu(x):
    # tanh-approximate GELU (EUP tanh instead of a ~10-op VALU erf poly).
    # TODO(synk): deviates from exact erf GELU by ~1e-3 max abs (accepted).
    c = math.sqrt(2.0 / math.pi)
    return 0.5 * x * (1.0 + jnp.tanh(c * (x + 0.044715 * x * x * x)))


def _softmax_rows(scores):
    m = jnp.max(scores, axis=-1, keepdims=True)
    e = jnp.exp(scores - m)
    return e * pl.reciprocal(jnp.sum(e, axis=-1, keepdims=True), approx=True)


# ---------------- fused Pallas kernel ----------------
def fused_bert_ae_kernel(x_ref, bias_ref, embln_ref,
                         wqkv_ref, bqkv_ref, wo_ref, bo_ref, ln_ref,
                         wf1_ref, bf1_ref, wf2_ref, bf2_ref,
                         aew1_ref, aeb1_ref, aew2_ref, aeb2_ref,
                         r2_ref, h_ref):
    """Whole BertAEModel forward on one (B*S, D) token slab held in VMEM."""
    N, D = x_ref.shape              # N = B*S tokens
    B, SD = h_ref.shape
    S = SD // D
    H = N_HEADS
    dk = D // H
    scale = 1.0 / math.sqrt(dk)

    bias = bias_ref[...]            # (N, N) additive attention bias, hoisted once
    embln = embln_ref[...]
    h = _layer_norm(x_ref[...], embln[0:1, :], embln[1:2, :])   # embedding LN

    for l in range(N_LAYERS):       # static, tiny
        wqkv = wqkv_ref[l]          # (D, 3D) fused Wq|Wk|Wv
        bqkv = bqkv_ref[l]          # (1, 3D)
        wo = wo_ref[l]
        bo = bo_ref[l]
        wf1 = wf1_ref[l]
        bf1 = bf1_ref[l]
        wf2 = wf2_ref[l]
        bf2 = bf2_ref[l]
        ln = ln_ref[l]              # (4, D): g1, be1, g2, be2
        g1, be1, g2, be2 = ln[0:1, :], ln[1:2, :], ln[2:3, :], ln[3:4, :]

        # one fused QKV projection for all batches/tokens
        qkv = jnp.dot(h, wqkv, preferred_element_type=jnp.float32) + bqkv  # (N, 3D)

        ctx_parts = []
        for hd in range(H):         # static head loop, batched over B via bias
            qh = qkv[:, hd * dk:(hd + 1) * dk]
            kh = qkv[:, D + hd * dk:D + (hd + 1) * dk]
            vh = qkv[:, 2 * D + hd * dk:2 * D + (hd + 1) * dk]
            scores = lax.dot_general(
                qh, kh, (((1,), (1,)), ((), ())),
                preferred_element_type=jnp.float32) * scale + bias          # (N, N)
            p = _softmax_rows(scores)
            ctx_parts.append(jnp.dot(p, vh, preferred_element_type=jnp.float32))
        ctx = jnp.concatenate(ctx_parts, axis=-1)                           # (N, D)

        attn = jnp.dot(ctx, wo, preferred_element_type=jnp.float32) + bo
        h1 = _layer_norm(h + attn, g1, be1)
        ffh = _gelu(jnp.dot(h1, wf1, preferred_element_type=jnp.float32) + bf1)
        ff = jnp.dot(ffh, wf2, preferred_element_type=jnp.float32) + bf2
        h = _layer_norm(h1 + ff, g2, be2)

    # lane-dense flatten (B*S, D) -> (B, S*D): single 256-lane slab store.
    r1 = jnp.concatenate(
        [jnp.concatenate([h[b * S + s: b * S + s + 1, :] for s in range(S)],
                         axis=1)
         for b in range(B)], axis=0)                                        # (B, S*D)
    h_ref[...] = r1

    # AE head: (B, S*D) -> (B, S) -> (B, C)
    xae = jnp.dot(r1, aew1_ref[...],
                  preferred_element_type=jnp.float32) + aeb1_ref[...]
    r2_ref[...] = jnp.dot(xae, aew2_ref[...],
                          preferred_element_type=jnp.float32) + aeb2_ref[...]


# ---------------- parameters ----------------
def init_params(key):
    keys = iter(jax.random.split(key, 16))

    def nrm(shape):
        return 0.02 * jax.random.normal(next(keys), shape, dtype=jnp.float32)

    L, D, F, S = N_LAYERS, DIM, DIM_FF, MAX_LEN
    ln_rows = jnp.stack([jnp.ones(D), jnp.zeros(D),
                         jnp.ones(D), jnp.zeros(D)]).astype(jnp.float32)    # (4, D)
    params = {
        "tok_embed": nrm((VOCAB, D)),
        "pos_embed": nrm((S, D)),
        "seg_embed": nrm((N_SEG, D)),
        "emb_ln": jnp.concatenate([jnp.ones((1, D), jnp.float32),
                                   jnp.zeros((1, D), jnp.float32)], axis=0),
        # per-layer weights stacked along a leading layer axis, QKV fused
        "wqkv": nrm((L, D, 3 * D)),
        "bqkv": jnp.zeros((L, 1, 3 * D), jnp.float32),
        "wo": nrm((L, D, D)),
        "bo": jnp.zeros((L, 1, D), jnp.float32),
        "ln": jnp.stack([ln_rows] * L, axis=0),                             # (L, 4, D)
        "wf1": nrm((L, D, F)),
        "bf1": jnp.zeros((L, 1, F), jnp.float32),
        "wf2": nrm((L, F, D)),
        "bf2": jnp.zeros((L, 1, D), jnp.float32),
        # AE head
        "ae_w1": nrm((S * D, S)),
        "ae_b1": jnp.zeros((1, S), jnp.float32),
        "ae_w2": nrm((S, CLASS_VEC_LEN)),
        "ae_b2": jnp.zeros((1, CLASS_VEC_LEN), jnp.float32),
    }
    return params


# ---------------- forward (BertAEModel.forward) ----------------
def bert_ae_forward(params, input_ids, segment_ids, input_mask):
    B, S = input_ids.shape
    D = DIM

    # Embedding gathers (glue), summed into the (B*S, D) token slab. Dropout = eval.
    pos = jnp.arange(S)
    e = (params["tok_embed"][input_ids]
         + params["pos_embed"][pos][None, :, :]
         + params["seg_embed"][segment_ids]).astype(jnp.float32)
    x2 = e.reshape(B * S, D)

    # Additive attention bias, computed once (glue): key-padding mask plus a
    # block-diagonal cross-batch mask (-10000 => contributes exactly 0 after exp).
    mask_f = input_mask.astype(jnp.float32).reshape(B * S)
    key_bias = -10000.0 * (1.0 - mask_f)[None, :]                 # (1, B*S)
    bidx = jnp.repeat(jnp.arange(B), S)
    block = jnp.where(bidx[:, None] == bidx[None, :], 0.0, -10000.0)
    attn_bias = (key_bias + block).astype(jnp.float32)            # (B*S, B*S)

    n_in = 16
    r2, h_flat = pl.pallas_call(
        fused_bert_ae_kernel,
        out_shape=(jax.ShapeDtypeStruct((B, CLASS_VEC_LEN), jnp.float32),
                   jax.ShapeDtypeStruct((B, S * D), jnp.float32)),
        in_specs=[pl.BlockSpec(memory_space=pltpu.MemorySpace.VMEM)] * n_in,
        out_specs=(pl.BlockSpec(memory_space=pltpu.MemorySpace.VMEM),
                   pl.BlockSpec(memory_space=pltpu.MemorySpace.VMEM)),
    )(x2, attn_bias, params["emb_ln"],
      params["wqkv"], params["bqkv"], params["wo"], params["bo"], params["ln"],
      params["wf1"], params["bf1"], params["wf2"], params["bf2"],
      params["ae_w1"], params["ae_b1"], params["ae_w2"], params["ae_b2"])

    h = h_flat.reshape(B, S, D)    # free metadata reshape (row-major consistent)
    return r2, h


if __name__ == "__main__":
    key = jax.random.PRNGKey(0)
    pkey, ikey, skey = jax.random.split(key, 3)
    params = init_params(pkey)

    input_ids = jax.random.randint(ikey, (BATCH, MAX_LEN), 0, VOCAB,
                                   dtype=jnp.int32)
    segment_ids = jax.random.randint(skey, (BATCH, MAX_LEN), 0, N_SEG,
                                     dtype=jnp.int32)
    input_mask = jnp.ones((BATCH, MAX_LEN), jnp.int32)
    input_mask = input_mask.at[1, MAX_LEN - 2:].set(0)   # some padding in batch 1

    fwd = jax.jit(bert_ae_forward)
    r2, h = fwd(params, input_ids, segment_ids, input_mask)
    jax.block_until_ready((r2, h))

    assert r2.shape == (BATCH, CLASS_VEC_LEN), r2.shape
    assert h.shape == (BATCH, MAX_LEN, DIM), h.shape
    assert bool(jnp.all(jnp.isfinite(r2))) and bool(jnp.all(jnp.isfinite(h)))
    print("KERNEL_OK")
</pallas_src>

<mosaic_0001>
module attributes {stable_mosaic.version = 11 : i64} {
  func.func @fused_bert_ae_kernel(%arg0: memref<16x32xf32, #tpu.memory_space<vmem>>, %arg1: memref<16x16xf32, #tpu.memory_space<vmem>>, %arg2: memref<2x32xf32, #tpu.memory_space<vmem>>, %arg3: memref<2x32x96xf32, #tpu.memory_space<vmem>>, %arg4: memref<2x1x96xf32, #tpu.memory_space<vmem>>, %arg5: memref<2x32x32xf32, #tpu.memory_space<vmem>>, %arg6: memref<2x1x32xf32, #tpu.memory_space<vmem>>, %arg7: memref<2x4x32xf32, #tpu.memory_space<vmem>>, %arg8: memref<2x32x64xf32, #tpu.memory_space<vmem>>, %arg9: memref<2x1x64xf32, #tpu.memory_space<vmem>>, %arg10: memref<2x64x32xf32, #tpu.memory_space<vmem>>, %arg11: memref<2x1x32xf32, #tpu.memory_space<vmem>>, %arg12: memref<256x8xf32, #tpu.memory_space<vmem>>, %arg13: memref<1x8xf32, #tpu.memory_space<vmem>>, %arg14: memref<8x4xf32, #tpu.memory_space<vmem>>, %arg15: memref<1x4xf32, #tpu.memory_space<vmem>>, %arg16: memref<2x4xf32, #tpu.memory_space<vmem>>, %arg17: memref<2x256xf32, #tpu.memory_space<vmem>>) attributes {dimension_semantics = [], scalar_prefetch = 0 : i64, scratch_operands = 0 : i64, tpu.core_type = #tpu.core_type<tc>} {
    %c0 = arith.constant 0 : index
    %c0_0 = arith.constant 0 : index
    %0 = vector.load %arg1[%c0, %c0_0] : memref<16x16xf32, #tpu.memory_space<vmem>>, vector<16x16xf32>
    %c0_1 = arith.constant 0 : index
    %c0_2 = arith.constant 0 : index
    %1 = vector.load %arg2[%c0_1, %c0_2] : memref<2x32xf32, #tpu.memory_space<vmem>>, vector<2x32xf32>
    %c0_3 = arith.constant 0 : index
    %c0_4 = arith.constant 0 : index
    %2 = vector.load %arg0[%c0_3, %c0_4] : memref<16x32xf32, #tpu.memory_space<vmem>>, vector<16x32xf32>
    %3 = vector.extract_strided_slice %1 {offsets = [0, 0], sizes = [1, 32], strides = [1, 1]} : vector<2x32xf32> to vector<1x32xf32>
    %4 = vector.extract_strided_slice %1 {offsets = [1, 0], sizes = [1, 32], strides = [1, 1]} : vector<2x32xf32> to vector<1x32xf32>
    %cst = arith.constant dense<0.000000e+00> : vector<16xf32>
    %5 = vector.multi_reduction <add>, %2, %cst [1] : vector<16x32xf32> to vector<16xf32>
    %6 = vector.shape_cast %5 : vector<16xf32> to vector<16x1xf32>
    %cst_5 = arith.constant 3.200000e+01 : f32
    %7 = vector.broadcast %cst_5 : f32 to vector<16x1xf32>
    %8 = arith.divf %6, %7 : vector<16x1xf32>
    %9 = vector.broadcast %8 : vector<16x1xf32> to vector<16x32xf32>
    %10 = arith.subf %2, %9 : vector<16x32xf32>
    %11 = arith.mulf %10, %10 : vector<16x32xf32>
    %cst_6 = arith.constant dense<0.000000e+00> : vector<16xf32>
    %12 = vector.multi_reduction <add>, %11, %cst_6 [1] : vector<16x32xf32> to vector<16xf32>
    %13 = vector.shape_cast %12 : vector<16xf32> to vector<16x1xf32>
    %cst_7 = arith.constant 3.200000e+01 : f32
    %14 = vector.broadcast %cst_7 : f32 to vector<16x1xf32>
    %15 = arith.divf %13, %14 : vector<16x1xf32>
    %cst_8 = arith.constant 9.99999996E-13 : f32
    %16 = vector.broadcast %cst_8 : f32 to vector<16x1xf32>
    %17 = arith.addf %15, %16 : vector<16x1xf32>
    %18 = math.rsqrt %17 : vector<16x1xf32>
    %19 = vector.broadcast %18 : vector<16x1xf32> to vector<16x32xf32>
    %20 = arith.mulf %10, %19 : vector<16x32xf32>
    %21 = vector.broadcast %3 : vector<1x32xf32> to vector<16x32xf32>
    %22 = arith.mulf %21, %20 : vector<16x32xf32>
    %23 = vector.broadcast %4 : vector<1x32xf32> to vector<16x32xf32>
    %24 = arith.addf %22, %23 : vector<16x32xf32>
    %c0_9 = arith.constant 0 : index
    %c0_10 = arith.constant 0 : index
    %c0_11 = arith.constant 0 : index
    %25 = vector.load %arg3[%c0_9, %c0_10, %c0_11] : memref<2x32x96xf32, #tpu.memory_space<vmem>>, vector<1x32x96xf32>
    %26 = vector.shape_cast %25 : vector<1x32x96xf32> to vector<32x96xf32>
    %c0_12 = arith.constant 0 : index
    %c0_13 = arith.constant 0 : index
    %c0_14 = arith.constant 0 : index
    %27 = vector.load %arg4[%c0_12, %c0_13, %c0_14] : memref<2x1x96xf32, #tpu.memory_space<vmem>>, vector<1x1x96xf32>
    %28 = vector.shape_cast %27 : vector<1x1x96xf32> to vector<1x96xf32>
    %c0_15 = arith.constant 0 : index
    %c0_16 = arith.constant 0 : index
    %c0_17 = arith.constant 0 : index
    %29 = vector.load %arg5[%c0_15, %c0_16, %c0_17] : memref<2x32x32xf32, #tpu.memory_space<vmem>>, vector<1x32x32xf32>
    %30 = vector.shape_cast %29 : vector<1x32x32xf32> to vector<32x32xf32>
    %c0_18 = arith.constant 0 : index
    %c0_19 = arith.constant 0 : index
    %c0_20 = arith.constant 0 : index
    %31 = vector.load %arg6[%c0_18, %c0_19, %c0_20] : memref<2x1x32xf32, #tpu.memory_space<vmem>>, vector<1x1x32xf32>
    %32 = vector.shape_cast %31 : vector<1x1x32xf32> to vector<1x32xf32>
    %c0_21 = arith.constant 0 : index
    %c0_22 = arith.constant 0 : index
    %c0_23 = arith.constant 0 : index
    %33 = vector.load %arg8[%c0_21, %c0_22, %c0_23] : memref<2x32x64xf32, #tpu.memory_space<vmem>>, vector<1x32x64xf32>
    %34 = vector.shape_cast %33 : vector<1x32x64xf32> to vector<32x64xf32>
    %c0_24 = arith.constant 0 : index
    %c0_25 = arith.constant 0 : index
    %c0_26 = arith.constant 0 : index
    %35 = vector.load %arg9[%c0_24, %c0_25, %c0_26] : memref<2x1x64xf32, #tpu.memory_space<vmem>>, vector<1x1x64xf32>
    %36 = vector.shape_cast %35 : vector<1x1x64xf32> to vector<1x64xf32>
    %c0_27 = arith.constant 0 : index
    %c0_28 = arith.constant 0 : index
    %c0_29 = arith.constant 0 : index
    %37 = vector.load %arg10[%c0_27, %c0_28, %c0_29] : memref<2x64x32xf32, #tpu.memory_space<vmem>>, vector<1x64x32xf32>
    %38 = vector.shape_cast %37 : vector<1x64x32xf32> to vector<64x32xf32>
    %c0_30 = arith.constant 0 : index
    %c0_31 = arith.constant 0 : index
    %c0_32 = arith.constant 0 : index
    %39 = vector.load %arg11[%c0_30, %c0_31, %c0_32] : memref<2x1x32xf32, #tpu.memory_space<vmem>>, vector<1x1x32xf32>
    %40 = vector.shape_cast %39 : vector<1x1x32xf32> to vector<1x32xf32>
    %c0_33 = arith.constant 0 : index
    %c0_34 = arith.constant 0 : index
    %c0_35 = arith.constant 0 : index
    %41 = vector.load %arg7[%c0_33, %c0_34, %c0_35] : memref<2x4x32xf32, #tpu.memory_space<vmem>>, vector<1x4x32xf32>
    %42 = vector.shape_cast %41 : vector<1x4x32xf32> to vector<4x32xf32>
    %43 = vector.extract_strided_slice %42 {offsets = [0, 0], sizes = [1, 32], strides = [1, 1]} : vector<4x32xf32> to vector<1x32xf32>
    %44 = vector.extract_strided_slice %42 {offsets = [1, 0], sizes = [1, 32], strides = [1, 1]} : vector<4x32xf32> to vector<1x32xf32>
    %45 = vector.extract_strided_slice %42 {offsets = [2, 0], sizes = [1, 32], strides = [1, 1]} : vector<4x32xf32> to vector<1x32xf32>
    %46 = vector.extract_strided_slice %42 {offsets = [3, 0], sizes = [1, 32], strides = [1, 1]} : vector<4x32xf32> to vector<1x32xf32>
    %cst_36 = arith.constant dense<0.000000e+00> : vector<16x96xf32>
    %47 = tpu.matmul %24, %26, %cst_36 {dimension_numbers = #tpu.dot_dimension_numbers<[1], [0], [0], [1], [0, 0, 1, 1], [], []>} : vector<16x32xf32>, vector<32x96xf32>, vector<16x96xf32> -> vector<16x96xf32>
    %48 = vector.broadcast %28 : vector<1x96xf32> to vector<16x96xf32>
    %49 = arith.addf %47, %48 : vector<16x96xf32>
    %50 = vector.extract_strided_slice %49 {offsets = [0, 0], sizes = [16, 8], strides = [1, 1]} : vector<16x96xf32> to vector<16x8xf32>
    %51 = vector.extract_strided_slice %49 {offsets = [0, 32], sizes = [16, 8], strides = [1, 1]} : vector<16x96xf32> to vector<16x8xf32>
    %52 = vector.extract_strided_slice %49 {offsets = [0, 64], sizes = [16, 8], strides = [1, 1]} : vector<16x96xf32> to vector<16x8xf32>
    %cst_37 = arith.constant dense<0.000000e+00> : vector<16x16xf32>
    %53 = tpu.matmul %50, %51, %cst_37 {dimension_numbers = #tpu.dot_dimension_numbers<[1], [1], [0], [0], [0, 0, 1, 0], [], []>} : vector<16x8xf32>, vector<16x8xf32>, vector<16x16xf32> -> vector<16x16xf32>
    %cst_38 = arith.constant 0.353553385 : f32
    %54 = vector.broadcast %cst_38 : f32 to vector<16x16xf32>
    %55 = arith.mulf %53, %54 : vector<16x16xf32>
    %56 = arith.addf %55, %0 : vector<16x16xf32>
    %cst_39 = arith.constant dense<0xFF800000> : vector<16xf32>
    %57 = vector.multi_reduction <maximumf>, %56, %cst_39 [1] : vector<16x16xf32> to vector<16xf32>
    %58 = vector.shape_cast %57 : vector<16xf32> to vector<16x1xf32>
    %59 = vector.broadcast %58 : vector<16x1xf32> to vector<16x16xf32>
    %60 = arith.subf %56, %59 : vector<16x16xf32>
    %61 = math.exp %60 : vector<16x16xf32>
    %cst_40 = arith.constant dense<0.000000e+00> : vector<16xf32>
    %62 = vector.multi_reduction <add>, %61, %cst_40 [1] : vector<16x16xf32> to vector<16xf32>
    %63 = vector.shape_cast %62 : vector<16xf32> to vector<16x1xf32>
    %64 = tpu.reciprocal %63 {approx = true} : vector<16x1xf32> -> vector<16x1xf32>
    %65 = vector.broadcast %64 : vector<16x1xf32> to vector<16x16xf32>
    %66 = arith.mulf %61, %65 : vector<16x16xf32>
    %cst_41 = arith.constant dense<0.000000e+00> : vector<16x8xf32>
    %67 = tpu.matmul %66, %52, %cst_41 {dimension_numbers = #tpu.dot_dimension_numbers<[1], [0], [0], [1], [0, 0, 1, 1], [], []>} : vector<16x16xf32>, vector<16x8xf32>, vector<16x8xf32> -> vector<16x8xf32>
    %68 = vector.extract_strided_slice %49 {offsets = [0, 8], sizes = [16, 8], strides = [1, 1]} : vector<16x96xf32> to vector<16x8xf32>
    %69 = vector.extract_strided_slice %49 {offsets = [0, 40], sizes = [16, 8], strides = [1, 1]} : vector<16x96xf32> to vector<16x8xf32>
    %70 = vector.extract_strided_slice %49 {offsets = [0, 72], sizes = [16, 8], strides = [1, 1]} : vector<16x96xf32> to vector<16x8xf32>
    %cst_42 = arith.constant dense<0.000000e+00> : vector<16x16xf32>
    %71 = tpu.matmul %68, %69, %cst_42 {dimension_numbers = #tpu.dot_dimension_numbers<[1], [1], [0], [0], [0, 0, 1, 0], [], []>} : vector<16x8xf32>, vector<16x8xf32>, vector<16x16xf32> -> vector<16x16xf32>
    %cst_43 = arith.constant 0.353553385 : f32
    %72 = vector.broadcast %cst_43 : f32 to vector<16x16xf32>
    %73 = arith.mulf %71, %72 : vector<16x16xf32>
    %74 = arith.addf %73, %0 : vector<16x16xf32>
    %cst_44 = arith.constant dense<0xFF800000> : vector<16xf32>
    %75 = vector.multi_reduction <maximumf>, %74, %cst_44 [1] : vector<16x16xf32> to vector<16xf32>
    %76 = vector.shape_cast %75 : vector<16xf32> to vector<16x1xf32>
    %77 = vector.broadcast %76 : vector<16x1xf32> to vector<16x16xf32>
    %78 = arith.subf %74, %77 : vector<16x16xf32>
    %79 = math.exp %78 : vector<16x16xf32>
    %cst_45 = arith.constant dense<0.000000e+00> : vector<16xf32>
    %80 = vector.multi_reduction <add>, %79, %cst_45 [1] : vector<16x16xf32> to vector<16xf32>
    %81 = vector.shape_cast %80 : vector<16xf32> to vector<16x1xf32>
    %82 = tpu.reciprocal %81 {approx = true} : vector<16x1xf32> -> vector<16x1xf32>
    %83 = vector.broadcast %82 : vector<16x1xf32> to vector<16x16xf32>
    %84 = arith.mulf %79, %83 : vector<16x16xf32>
    %cst_46 = arith.constant dense<0.000000e+00> : vector<16x8xf32>
    %85 = tpu.matmul %84, %70, %cst_46 {dimension_numbers = #tpu.dot_dimension_numbers<[1], [0], [0], [1], [0, 0, 1, 1], [], []>} : vector<16x16xf32>, vector<16x8xf32>, vector<16x8xf32> -> vector<16x8xf32>
    %86 = vector.extract_strided_slice %49 {offsets = [0, 16], sizes = [16, 8], strides = [1, 1]} : vector<16x96xf32> to vector<16x8xf32>
    %87 = vector.extract_strided_slice %49 {offsets = [0, 48], sizes = [16, 8], strides = [1, 1]} : vector<16x96xf32> to vector<16x8xf32>
    %88 = vector.extract_strided_slice %49 {offsets = [0, 80], sizes = [16, 8], strides = [1, 1]} : vector<16x96xf32> to vector<16x8xf32>
    %cst_47 = arith.constant dense<0.000000e+00> : vector<16x16xf32>
    %89 = tpu.matmul %86, %87, %cst_47 {dimension_numbers = #tpu.dot_dimension_numbers<[1], [1], [0], [0], [0, 0, 1, 0], [], []>} : vector<16x8xf32>, vector<16x8xf32>, vector<16x16xf32> -> vector<16x16xf32>
    %cst_48 = arith.constant 0.353553385 : f32
    %90 = vector.broadcast %cst_48 : f32 to vector<16x16xf32>
    %91 = arith.mulf %89, %90 : vector<16x16xf32>
    %92 = arith.addf %91, %0 : vector<16x16xf32>
    %cst_49 = arith.constant dense<0xFF800000> : vector<16xf32>
    %93 = vector.multi_reduction <maximumf>, %92, %cst_49 [1] : vector<16x16xf32> to vector<16xf32>
    %94 = vector.shape_cast %93 : vector<16xf32> to vector<16x1xf32>
    %95 = vector.broadcast %94 : vector<16x1xf32> to vector<16x16xf32>
    %96 = arith.subf %92, %95 : vector<16x16xf32>
    %97 = math.exp %96 : vector<16x16xf32>
    %cst_50 = arith.constant dense<0.000000e+00> : vector<16xf32>
    %98 = vector.multi_reduction <add>, %97, %cst_50 [1] : vector<16x16xf32> to vector<16xf32>
    %99 = vector.shape_cast %98 : vector<16xf32> to vector<16x1xf32>
    %100 = tpu.reciprocal %99 {approx = true} : vector<16x1xf32> -> vector<16x1xf32>
    %101 = vector.broadcast %100 : vector<16x1xf32> to vector<16x16xf32>
    %102 = arith.mulf %97, %101 : vector<16x16xf32>
    %cst_51 = arith.constant dense<0.000000e+00> : vector<16x8xf32>
    %103 = tpu.matmul %102, %88, %cst_51 {dimension_numbers = #tpu.dot_dimension_numbers<[1], [0], [0], [1], [0, 0, 1, 1], [], []>} : vector<16x16xf32>, vector<16x8xf32>, vector<16x8xf32> -> vector<16x8xf32>
    %104 = vector.extract_strided_slice %49 {offsets = [0, 24], sizes = [16, 8], strides = [1, 1]} : vector<16x96xf32> to vector<16x8xf32>
    %105 = vector.extract_strided_slice %49 {offsets = [0, 56], sizes = [16, 8], strides = [1, 1]} : vector<16x96xf32> to vector<16x8xf32>
    %106 = vector.extract_strided_slice %49 {offsets = [0, 88], sizes = [16, 8], strides = [1, 1]} : vector<16x96xf32> to vector<16x8xf32>
    %cst_52 = arith.constant dense<0.000000e+00> : vector<16x16xf32>
    %107 = tpu.matmul %104, %105, %cst_52 {dimension_numbers = #tpu.dot_dimension_numbers<[1], [1], [0], [0], [0, 0, 1, 0], [], []>} : vector<16x8xf32>, vector<16x8xf32>, vector<16x16xf32> -> vector<16x16xf32>
    %cst_53 = arith.constant 0.353553385 : f32
    %108 = vector.broadcast %cst_53 : f32 to vector<16x16xf32>
    %109 = arith.mulf %107, %108 : vector<16x16xf32>
    %110 = arith.addf %109, %0 : vector<16x16xf32>
    %cst_54 = arith.constant dense<0xFF800000> : vector<16xf32>
    %111 = vector.multi_reduction <maximumf>, %110, %cst_54 [1] : vector<16x16xf32> to vector<16xf32>
    %112 = vector.shape_cast %111 : vector<16xf32> to vector<16x1xf32>
    %113 = vector.broadcast %112 : vector<16x1xf32> to vector<16x16xf32>
    %114 = arith.subf %110, %113 : vector<16x16xf32>
    %115 = math.exp %114 : vector<16x16xf32>
    %cst_55 = arith.constant dense<0.000000e+00> : vector<16xf32>
    %116 = vector.multi_reduction <add>, %115, %cst_55 [1] : vector<16x16xf32> to vector<16xf32>
    %117 = vector.shape_cast %116 : vector<16xf32> to vector<16x1xf32>
    %118 = tpu.reciprocal %117 {approx = true} : vector<16x1xf32> -> vector<16x1xf32>
    %119 = vector.broadcast %118 : vector<16x1xf32> to vector<16x16xf32>
    %120 = arith.mulf %115, %119 : vector<16x16xf32>
    %cst_56 = arith.constant dense<0.000000e+00> : vector<16x8xf32>
    %121 = tpu.matmul %120, %106, %cst_56 {dimension_numbers = #tpu.dot_dimension_numbers<[1], [0], [0], [1], [0, 0, 1, 1], [], []>} : vector<16x16xf32>, vector<16x8xf32>, vector<16x8xf32> -> vector<16x8xf32>
    %122 = tpu.concatenate %67, %85, %103, %121 in 1 : vector<16x8xf32>, vector<16x8xf32>, vector<16x8xf32>, vector<16x8xf32> -> vector<16x32xf32>
    %cst_57 = arith.constant dense<0.000000e+00> : vector<16x32xf32>
    %123 = tpu.matmul %122, %30, %cst_57 {dimension_numbers = #tpu.dot_dimension_numbers<[1], [0], [0], [1], [0, 0, 1, 1], [], []>} : vector<16x32xf32>, vector<32x32xf32>, vector<16x32xf32> -> vector<16x32xf32>
    %124 = vector.broadcast %32 : vector<1x32xf32> to vector<16x32xf32>
    %125 = arith.addf %123, %124 : vector<16x32xf32>
    %126 = arith.addf %24, %125 : vector<16x32xf32>
    %cst_58 = arith.constant dense<0.000000e+00> : vector<16xf32>
    %127 = vector.multi_reduction <add>, %126, %cst_58 [1] : vector<16x32xf32> to vector<16xf32>
    %128 = vector.shape_cast %127 : vector<16xf32> to vector<16x1xf32>
    %cst_59 = arith.constant 3.200000e+01 : f32
    %129 = vector.broadcast %cst_59 : f32 to vector<16x1xf32>
    %130 = arith.divf %128, %129 : vector<16x1xf32>
    %131 = vector.broadcast %130 : vector<16x1xf32> to vector<16x32xf32>
    %132 = arith.subf %126, %131 : vector<16x32xf32>
    %133 = arith.mulf %132, %132 : vector<16x32xf32>
    %cst_60 = arith.constant dense<0.000000e+00> : vector<16xf32>
    %134 = vector.multi_reduction <add>, %133, %cst_60 [1] : vector<16x32xf32> to vector<16xf32>
    %135 = vector.shape_cast %134 : vector<16xf32> to vector<16x1xf32>
    %cst_61 = arith.constant 3.200000e+01 : f32
    %136 = vector.broadcast %cst_61 : f32 to vector<16x1xf32>
    %137 = arith.divf %135, %136 : vector<16x1xf32>
    %cst_62 = arith.constant 9.99999996E-13 : f32
    %138 = vector.broadcast %cst_62 : f32 to vector<16x1xf32>
    %139 = arith.addf %137, %138 : vector<16x1xf32>
    %140 = math.rsqrt %139 : vector<16x1xf32>
    %141 = vector.broadcast %140 : vector<16x1xf32> to vector<16x32xf32>
    %142 = arith.mulf %132, %141 : vector<16x32xf32>
    %143 = vector.broadcast %43 : vector<1x32xf32> to vector<16x32xf32>
    %144 = arith.mulf %143, %142 : vector<16x32xf32>
    %145 = vector.broadcast %44 : vector<1x32xf32> to vector<16x32xf32>
    %146 = arith.addf %144, %145 : vector<16x32xf32>
    %cst_63 = arith.constant dense<0.000000e+00> : vector<16x64xf32>
    %147 = tpu.matmul %146, %34, %cst_63 {dimension_numbers = #tpu.dot_dimension_numbers<[1], [0], [0], [1], [0, 0, 1, 1], [], []>} : vector<16x32xf32>, vector<32x64xf32>, vector<16x64xf32> -> vector<16x64xf32>
    %148 = vector.broadcast %36 : vector<1x64xf32> to vector<16x64xf32>
    %149 = arith.addf %147, %148 : vector<16x64xf32>
    %cst_64 = arith.constant 5.000000e-01 : f32
    %150 = vector.broadcast %cst_64 : f32 to vector<16x64xf32>
    %151 = arith.mulf %150, %149 : vector<16x64xf32>
    %cst_65 = arith.constant 4.471500e-02 : f32
    %152 = vector.broadcast %cst_65 : f32 to vector<16x64xf32>
    %153 = arith.mulf %152, %149 : vector<16x64xf32>
    %154 = arith.mulf %153, %149 : vector<16x64xf32>
    %155 = arith.mulf %154, %149 : vector<16x64xf32>
    %156 = arith.addf %149, %155 : vector<16x64xf32>
    %cst_66 = arith.constant 0.797884583 : f32
    %157 = vector.broadcast %cst_66 : f32 to vector<16x64xf32>
    %158 = arith.mulf %157, %156 : vector<16x64xf32>
    %159 = math.tanh %158 : vector<16x64xf32>
    %cst_67 = arith.constant 1.000000e+00 : f32
    %160 = vector.broadcast %cst_67 : f32 to vector<16x64xf32>
    %161 = arith.addf %160, %159 : vector<16x64xf32>
    %162 = arith.mulf %151, %161 : vector<16x64xf32>
    %cst_68 = arith.constant dense<0.000000e+00> : vector<16x32xf32>
    %163 = tpu.matmul %162, %38, %cst_68 {dimension_numbers = #tpu.dot_dimension_numbers<[1], [0], [0], [1], [0, 0, 1, 1], [], []>} : vector<16x64xf32>, vector<64x32xf32>, vector<16x32xf32> -> vector<16x32xf32>
    %164 = vector.broadcast %40 : vector<1x32xf32> to vector<16x32xf32>
    %165 = arith.addf %163, %164 : vector<16x32xf32>
    %166 = arith.addf %146, %165 : vector<16x32xf32>
    %cst_69 = arith.constant dense<0.000000e+00> : vector<16xf32>
    %167 = vector.multi_reduction <add>, %166, %cst_69 [1] : vector<16x32xf32> to vector<16xf32>
    %168 = vector.shape_cast %167 : vector<16xf32> to vector<16x1xf32>
    %cst_70 = arith.constant 3.200000e+01 : f32
    %169 = vector.broadcast %cst_70 : f32 to vector<16x1xf32>
    %170 = arith.divf %168, %169 : vector<16x1xf32>
    %171 = vector.broadcast %170 : vector<16x1xf32> to vector<16x32xf32>
    %172 = arith.subf %166, %171 : vector<16x32xf32>
    %173 = arith.mulf %172, %172 : vector<16x32xf32>
    %cst_71 = arith.constant dense<0.000000e+00> : vector<16xf32>
    %174 = vector.multi_reduction <add>, %173, %cst_71 [1] : vector<16x32xf32> to vector<16xf32>
    %175 = vector.shape_cast %174 : vector<16xf32> to vector<16x1xf32>
    %cst_72 = arith.constant 3.200000e+01 : f32
    %176 = vector.broadcast %cst_72 : f32 to vector<16x1xf32>
    %177 = arith.divf %175, %176 : vector<16x1xf32>
    %cst_73 = arith.constant 9.99999996E-13 : f32
    %178 = vector.broadcast %cst_73 : f32 to vector<16x1xf32>
    %179 = arith.addf %177, %178 : vector<16x1xf32>
    %180 = math.rsqrt %179 : vector<16x1xf32>
    %181 = vector.broadcast %180 : vector<16x1xf32> to vector<16x32xf32>
    %182 = arith.mulf %172, %181 : vector<16x32xf32>
    %183 = vector.broadcast %45 : vector<1x32xf32> to vector<16x32xf32>
    %184 = arith.mulf %183, %182 : vector<16x32xf32>
    %185 = vector.broadcast %46 : vector<1x32xf32> to vector<16x32xf32>
    %186 = arith.addf %184, %185 : vector<16x32xf32>
    %c1 = arith.constant 1 : index
    %c0_74 = arith.constant 0 : index
    %c0_75 = arith.constant 0 : index
    %187 = vector.load %arg3[%c1, %c0_74, %c0_75] : memref<2x32x96xf32, #tpu.memory_space<vmem>>, vector<1x32x96xf32>
    %188 = vector.shape_cast %187 : vector<1x32x96xf32> to vector<32x96xf32>
    %c1_76 = arith.constant 1 : index
    %c0_77 = arith.constant 0 : index
    %c0_78 = arith.constant 0 : index
    %189 = vector.load %arg4[%c1_76, %c0_77, %c0_78] : memref<2x1x96xf32, #tpu.memory_space<vmem>>, vector<1x1x96xf32>
    %190 = vector.shape_cast %189 : vector<1x1x96xf32> to vector<1x96xf32>
    %c1_79 = arith.constant 1 : index
    %c0_80 = arith.constant 0 : index
    %c0_81 = arith.constant 0 : index
    %191 = vector.load %arg5[%c1_79, %c0_80, %c0_81] : memref<2x32x32xf32, #tpu.memory_space<vmem>>, vector<1x32x32xf32>
    %192 = vector.shape_cast %191 : vector<1x32x32xf32> to vector<32x32xf32>
    %c1_82 = arith.constant 1 : index
    %c0_83 = arith.constant 0 : index
    %c0_84 = arith.constant 0 : index
    %193 = vector.load %arg6[%c1_82, %c0_83, %c0_84] : memref<2x1x32xf32, #tpu.memory_space<vmem>>, vector<1x1x32xf32>
    %194 = vector.shape_cast %193 : vector<1x1x32xf32> to vector<1x32xf32>
    %c1_85 = arith.constant 1 : index
    %c0_86 = arith.constant 0 : index
    %c0_87 = arith.constant 0 : index
    %195 = vector.load %arg8[%c1_85, %c0_86, %c0_87] : memref<2x32x64xf32, #tpu.memory_space<vmem>>, vector<1x32x64xf32>
    %196 = vector.shape_cast %195 : vector<1x32x64xf32> to vector<32x64xf32>
    %c1_88 = arith.constant 1 : index
    %c0_89 = arith.constant 0 : index
    %c0_90 = arith.constant 0 : index
    %197 = vector.load %arg9[%c1_88, %c0_89, %c0_90] : memref<2x1x64xf32, #tpu.memory_space<vmem>>, vector<1x1x64xf32>
    %198 = vector.shape_cast %197 : vector<1x1x64xf32> to vector<1x64xf32>
    %c1_91 = arith.constant 1 : index
    %c0_92 = arith.constant 0 : index
    %c0_93 = arith.constant 0 : index
    %199 = vector.load %arg10[%c1_91, %c0_92, %c0_93] : memref<2x64x32xf32, #tpu.memory_space<vmem>>, vector<1x64x32xf32>
    %200 = vector.shape_cast %199 : vector<1x64x32xf32> to vector<64x32xf32>
    %c1_94 = arith.constant 1 : index
    %c0_95 = arith.constant 0 : index
    %c0_96 = arith.constant 0 : index
    %201 = vector.load %arg11[%c1_94, %c0_95, %c0_96] : memref<2x1x32xf32, #tpu.memory_space<vmem>>, vector<1x1x32xf32>
    %202 = vector.shape_cast %201 : vector<1x1x32xf32> to vector<1x32xf32>
    %c1_97 = arith.constant 1 : index
    %c0_98 = arith.constant 0 : index
    %c0_99 = arith.constant 0 : index
    %203 = vector.load %arg7[%c1_97, %c0_98, %c0_99] : memref<2x4x32xf32, #tpu.memory_space<vmem>>, vector<1x4x32xf32>
    %204 = vector.shape_cast %203 : vector<1x4x32xf32> to vector<4x32xf32>
    %205 = vector.extract_strided_slice %204 {offsets = [0, 0], sizes = [1, 32], strides = [1, 1]} : vector<4x32xf32> to vector<1x32xf32>
    %206 = vector.extract_strided_slice %204 {offsets = [1, 0], sizes = [1, 32], strides = [1, 1]} : vector<4x32xf32> to vector<1x32xf32>
    %207 = vector.extract_strided_slice %204 {offsets = [2, 0], sizes = [1, 32], strides = [1, 1]} : vector<4x32xf32> to vector<1x32xf32>
    %208 = vector.extract_strided_slice %204 {offsets = [3, 0], sizes = [1, 32], strides = [1, 1]} : vector<4x32xf32> to vector<1x32xf32>
    %cst_100 = arith.constant dense<0.000000e+00> : vector<16x96xf32>
    %209 = tpu.matmul %186, %188, %cst_100 {dimension_numbers = #tpu.dot_dimension_numbers<[1], [0], [0], [1], [0, 0, 1, 1], [], []>} : vector<16x32xf32>, vector<32x96xf32>, vector<16x96xf32> -> vector<16x96xf32>
    %210 = vector.broadcast %190 : vector<1x96xf32> to vector<16x96xf32>
    %211 = arith.addf %209, %210 : vector<16x96xf32>
    %212 = vector.extract_strided_slice %211 {offsets = [0, 0], sizes = [16, 8], strides = [1, 1]} : vector<16x96xf32> to vector<16x8xf32>
    %213 = vector.extract_strided_slice %211 {offsets = [0, 32], sizes = [16, 8], strides = [1, 1]} : vector<16x96xf32> to vector<16x8xf32>
    %214 = vector.extract_strided_slice %211 {offsets = [0, 64], sizes = [16, 8], strides = [1, 1]} : vector<16x96xf32> to vector<16x8xf32>
    %cst_101 = arith.constant dense<0.000000e+00> : vector<16x16xf32>
    %215 = tpu.matmul %212, %213, %cst_101 {dimension_numbers = #tpu.dot_dimension_numbers<[1], [1], [0], [0], [0, 0, 1, 0], [], []>} : vector<16x8xf32>, vector<16x8xf32>, vector<16x16xf32> -> vector<16x16xf32>
    %cst_102 = arith.constant 0.353553385 : f32
    %216 = vector.broadcast %cst_102 : f32 to vector<16x16xf32>
    %217 = arith.mulf %215, %216 : vector<16x16xf32>
    %218 = arith.addf %217, %0 : vector<16x16xf32>
    %cst_103 = arith.constant dense<0xFF800000> : vector<16xf32>
    %219 = vector.multi_reduction <maximumf>, %218, %cst_103 [1] : vector<16x16xf32> to vector<16xf32>
    %220 = vector.shape_cast %219 : vector<16xf32> to vector<16x1xf32>
    %221 = vector.broadcast %220 : vector<16x1xf32> to vector<16x16xf32>
    %222 = arith.subf %218, %221 : vector<16x16xf32>
    %223 = math.exp %222 : vector<16x16xf32>
    %cst_104 = arith.constant dense<0.000000e+00> : vector<16xf32>
    %224 = vector.multi_reduction <add>, %223, %cst_104 [1] : vector<16x16xf32> to vector<16xf32>
    %225 = vector.shape_cast %224 : vector<16xf32> to vector<16x1xf32>
    %226 = tpu.reciprocal %225 {approx = true} : vector<16x1xf32> -> vector<16x1xf32>
    %227 = vector.broadcast %226 : vector<16x1xf32> to vector<16x16xf32>
    %228 = arith.mulf %223, %227 : vector<16x16xf32>
    %cst_105 = arith.constant dense<0.000000e+00> : vector<16x8xf32>
    %229 = tpu.matmul %228, %214, %cst_105 {dimension_numbers = #tpu.dot_dimension_numbers<[1], [0], [0], [1], [0, 0, 1, 1], [], []>} : vector<16x16xf32>, vector<16x8xf32>, vector<16x8xf32> -> vector<16x8xf32>
    %230 = vector.extract_strided_slice %211 {offsets = [0, 8], sizes = [16, 8], strides = [1, 1]} : vector<16x96xf32> to vector<16x8xf32>
    %231 = vector.extract_strided_slice %211 {offsets = [0, 40], sizes = [16, 8], strides = [1, 1]} : vector<16x96xf32> to vector<16x8xf32>
    %232 = vector.extract_strided_slice %211 {offsets = [0, 72], sizes = [16, 8], strides = [1, 1]} : vector<16x96xf32> to vector<16x8xf32>
    %cst_106 = arith.constant dense<0.000000e+00> : vector<16x16xf32>
    %233 = tpu.matmul %230, %231, %cst_106 {dimension_numbers = #tpu.dot_dimension_numbers<[1], [1], [0], [0], [0, 0, 1, 0], [], []>} : vector<16x8xf32>, vector<16x8xf32>, vector<16x16xf32> -> vector<16x16xf32>
    %cst_107 = arith.constant 0.353553385 : f32
    %234 = vector.broadcast %cst_107 : f32 to vector<16x16xf32>
    %235 = arith.mulf %233, %234 : vector<16x16xf32>
    %236 = arith.addf %235, %0 : vector<16x16xf32>
    %cst_108 = arith.constant dense<0xFF800000> : vector<16xf32>
    %237 = vector.multi_reduction <maximumf>, %236, %cst_108 [1] : vector<16x16xf32> to vector<16xf32>
    %238 = vector.shape_cast %237 : vector<16xf32> to vector<16x1xf32>
    %239 = vector.broadcast %238 : vector<16x1xf32> to vector<16x16xf32>
    %240 = arith.subf %236, %239 : vector<16x16xf32>
    %241 = math.exp %240 : vector<16x16xf32>
    %cst_109 = arith.constant dense<0.000000e+00> : vector<16xf32>
    %242 = vector.multi_reduction <add>, %241, %cst_109 [1] : vector<16x16xf32> to vector<16xf32>
    %243 = vector.shape_cast %242 : vector<16xf32> to vector<16x1xf32>
    %244 = tpu.reciprocal %243 {approx = true} : vector<16x1xf32> -> vector<16x1xf32>
    %245 = vector.broadcast %244 : vector<16x1xf32> to vector<16x16xf32>
    %246 = arith.mulf %241, %245 : vector<16x16xf32>
    %cst_110 = arith.constant dense<0.000000e+00> : vector<16x8xf32>
    %247 = tpu.matmul %246, %232, %cst_110 {dimension_numbers = #tpu.dot_dimension_numbers<[1], [0], [0], [1], [0, 0, 1, 1], [], []>} : vector<16x16xf32>, vector<16x8xf32>, vector<16x8xf32> -> vector<16x8xf32>
    %248 = vector.extract_strided_slice %211 {offsets = [0, 16], sizes = [16, 8], strides = [1, 1]} : vector<16x96xf32> to vector<16x8xf32>
    %249 = vector.extract_strided_slice %211 {offsets = [0, 48], sizes = [16, 8], strides = [1, 1]} : vector<16x96xf32> to vector<16x8xf32>
    %250 = vector.extract_strided_slice %211 {offsets = [0, 80], sizes = [16, 8], strides = [1, 1]} : vector<16x96xf32> to vector<16x8xf32>
    %cst_111 = arith.constant dense<0.000000e+00> : vector<16x16xf32>
    %251 = tpu.matmul %248, %249, %cst_111 {dimension_numbers = #tpu.dot_dimension_numbers<[1], [1], [0], [0], [0, 0, 1, 0], [], []>} : vector<16x8xf32>, vector<16x8xf32>, vector<16x16xf32> -> vector<16x16xf32>
    %cst_112 = arith.constant 0.353553385 : f32
    %252 = vector.broadcast %cst_112 : f32 to vector<16x16xf32>
    %253 = arith.mulf %251, %252 : vector<16x16xf32>
    %254 = arith.addf %253, %0 : vector<16x16xf32>
    %cst_113 = arith.constant dense<0xFF800000> : vector<16xf32>
    %255 = vector.multi_reduction <maximumf>, %254, %cst_113 [1] : vector<16x16xf32> to vector<16xf32>
    %256 = vector.shape_cast %255 : vector<16xf32> to vector<16x1xf32>
    %257 = vector.broadcast %256 : vector<16x1xf32> to vector<16x16xf32>
    %258 = arith.subf %254, %257 : vector<16x16xf32>
    %259 = math.exp %258 : vector<16x16xf32>
    %cst_114 = arith.constant dense<0.000000e+00> : vector<16xf32>
    %260 = vector.multi_reduction <add>, %259, %cst_114 [1] : vector<16x16xf32> to vector<16xf32>
    %261 = vector.shape_cast %260 : vector<16xf32> to vector<16x1xf32>
    %262 = tpu.reciprocal %261 {approx = true} : vector<16x1xf32> -> vector<16x1xf32>
    %263 = vector.broadcast %262 : vector<16x1xf32> to vector<16x16xf32>
    %264 = arith.mulf %259, %263 : vector<16x16xf32>
    %cst_115 = arith.constant dense<0.000000e+00> : vector<16x8xf32>
    %265 = tpu.matmul %264, %250, %cst_115 {dimension_numbers = #tpu.dot_dimension_numbers<[1], [0], [0], [1], [0, 0, 1, 1], [], []>} : vector<16x16xf32>, vector<16x8xf32>, vector<16x8xf32> -> vector<16x8xf32>
    %266 = vector.extract_strided_slice %211 {offsets = [0, 24], sizes = [16, 8], strides = [1, 1]} : vector<16x96xf32> to vector<16x8xf32>
    %267 = vector.extract_strided_slice %211 {offsets = [0, 56], sizes = [16, 8], strides = [1, 1]} : vector<16x96xf32> to vector<16x8xf32>
    %268 = vector.extract_strided_slice %211 {offsets = [0, 88], sizes = [16, 8], strides = [1, 1]} : vector<16x96xf32> to vector<16x8xf32>
    %cst_116 = arith.constant dense<0.000000e+00> : vector<16x16xf32>
    %269 = tpu.matmul %266, %267, %cst_116 {dimension_numbers = #tpu.dot_dimension_numbers<[1], [1], [0], [0], [0, 0, 1, 0], [], []>} : vector<16x8xf32>, vector<16x8xf32>, vector<16x16xf32> -> vector<16x16xf32>
    %cst_117 = arith.constant 0.353553385 : f32
    %270 = vector.broadcast %cst_117 : f32 to vector<16x16xf32>
    %271 = arith.mulf %269, %270 : vector<16x16xf32>
    %272 = arith.addf %271, %0 : vector<16x16xf32>
    %cst_118 = arith.constant dense<0xFF800000> : vector<16xf32>
    %273 = vector.multi_reduction <maximumf>, %272, %cst_118 [1] : vector<16x16xf32> to vector<16xf32>
    %274 = vector.shape_cast %273 : vector<16xf32> to vector<16x1xf32>
    %275 = vector.broadcast %274 : vector<16x1xf32> to vector<16x16xf32>
    %276 = arith.subf %272, %275 : vector<16x16xf32>
    %277 = math.exp %276 : vector<16x16xf32>
    %cst_119 = arith.constant dense<0.000000e+00> : vector<16xf32>
    %278 = vector.multi_reduction <add>, %277, %cst_119 [1] : vector<16x16xf32> to vector<16xf32>
    %279 = vector.shape_cast %278 : vector<16xf32> to vector<16x1xf32>
    %280 = tpu.reciprocal %279 {approx = true} : vector<16x1xf32> -> vector<16x1xf32>
    %281 = vector.broadcast %280 : vector<16x1xf32> to vector<16x16xf32>
    %282 = arith.mulf %277, %281 : vector<16x16xf32>
    %cst_120 = arith.constant dense<0.000000e+00> : vector<16x8xf32>
    %283 = tpu.matmul %282, %268, %cst_120 {dimension_numbers = #tpu.dot_dimension_numbers<[1], [0], [0], [1], [0, 0, 1, 1], [], []>} : vector<16x16xf32>, vector<16x8xf32>, vector<16x8xf32> -> vector<16x8xf32>
    %284 = tpu.concatenate %229, %247, %265, %283 in 1 : vector<16x8xf32>, vector<16x8xf32>, vector<16x8xf32>, vector<16x8xf32> -> vector<16x32xf32>
    %cst_121 = arith.constant dense<0.000000e+00> : vector<16x32xf32>
    %285 = tpu.matmul %284, %192, %cst_121 {dimension_numbers = #tpu.dot_dimension_numbers<[1], [0], [0], [1], [0, 0, 1, 1], [], []>} : vector<16x32xf32>, vector<32x32xf32>, vector<16x32xf32> -> vector<16x32xf32>
    %286 = vector.broadcast %194 : vector<1x32xf32> to vector<16x32xf32>
    %287 = arith.addf %285, %286 : vector<16x32xf32>
    %288 = arith.addf %186, %287 : vector<16x32xf32>
    %cst_122 = arith.constant dense<0.000000e+00> : vector<16xf32>
    %289 = vector.multi_reduction <add>, %288, %cst_122 [1] : vector<16x32xf32> to vector<16xf32>
    %290 = vector.shape_cast %289 : vector<16xf32> to vector<16x1xf32>
    %cst_123 = arith.constant 3.200000e+01 : f32
    %291 = vector.broadcast %cst_123 : f32 to vector<16x1xf32>
    %292 = arith.divf %290, %291 : vector<16x1xf32>
    %293 = vector.broadcast %292 : vector<16x1xf32> to vector<16x32xf32>
    %294 = arith.subf %288, %293 : vector<16x32xf32>
    %295 = arith.mulf %294, %294 : vector<16x32xf32>
    %cst_124 = arith.constant dense<0.000000e+00> : vector<16xf32>
    %296 = vector.multi_reduction <add>, %295, %cst_124 [1] : vector<16x32xf32> to vector<16xf32>
    %297 = vector.shape_cast %296 : vector<16xf32> to vector<16x1xf32>
    %cst_125 = arith.constant 3.200000e+01 : f32
    %298 = vector.broadcast %cst_125 : f32 to vector<16x1xf32>
    %299 = arith.divf %297, %298 : vector<16x1xf32>
    %cst_126 = arith.constant 9.99999996E-13 : f32
    %300 = vector.broadcast %cst_126 : f32 to vector<16x1xf32>
    %301 = arith.addf %299, %300 : vector<16x1xf32>
    %302 = math.rsqrt %301 : vector<16x1xf32>
    %303 = vector.broadcast %302 : vector<16x1xf32> to vector<16x32xf32>
    %304 = arith.mulf %294, %303 : vector<16x32xf32>
    %305 = vector.broadcast %205 : vector<1x32xf32> to vector<16x32xf32>
    %306 = arith.mulf %305, %304 : vector<16x32xf32>
    %307 = vector.broadcast %206 : vector<1x32xf32> to vector<16x32xf32>
    %308 = arith.addf %306, %307 : vector<16x32xf32>
    %cst_127 = arith.constant dense<0.000000e+00> : vector<16x64xf32>
    %309 = tpu.matmul %308, %196, %cst_127 {dimension_numbers = #tpu.dot_dimension_numbers<[1], [0], [0], [1], [0, 0, 1, 1], [], []>} : vector<16x32xf32>, vector<32x64xf32>, vector<16x64xf32> -> vector<16x64xf32>
    %310 = vector.broadcast %198 : vector<1x64xf32> to vector<16x64xf32>
    %311 = arith.addf %309, %310 : vector<16x64xf32>
    %cst_128 = arith.constant 5.000000e-01 : f32
    %312 = vector.broadcast %cst_128 : f32 to vector<16x64xf32>
    %313 = arith.mulf %312, %311 : vector<16x64xf32>
    %cst_129 = arith.constant 4.471500e-02 : f32
    %314 = vector.broadcast %cst_129 : f32 to vector<16x64xf32>
    %315 = arith.mulf %314, %311 : vector<16x64xf32>
    %316 = arith.mulf %315, %311 : vector<16x64xf32>
    %317 = arith.mulf %316, %311 : vector<16x64xf32>
    %318 = arith.addf %311, %317 : vector<16x64xf32>
    %cst_130 = arith.constant 0.797884583 : f32
    %319 = vector.broadcast %cst_130 : f32 to vector<16x64xf32>
    %320 = arith.mulf %319, %318 : vector<16x64xf32>
    %321 = math.tanh %320 : vector<16x64xf32>
    %cst_131 = arith.constant 1.000000e+00 : f32
    %322 = vector.broadcast %cst_131 : f32 to vector<16x64xf32>
    %323 = arith.addf %322, %321 : vector<16x64xf32>
    %324 = arith.mulf %313, %323 : vector<16x64xf32>
    %cst_132 = arith.constant dense<0.000000e+00> : vector<16x32xf32>
    %325 = tpu.matmul %324, %200, %cst_132 {dimension_numbers = #tpu.dot_dimension_numbers<[1], [0], [0], [1], [0, 0, 1, 1], [], []>} : vector<16x64xf32>, vector<64x32xf32>, vector<16x32xf32> -> vector<16x32xf32>
    %326 = vector.broadcast %202 : vector<1x32xf32> to vector<16x32xf32>
    %327 = arith.addf %325, %326 : vector<16x32xf32>
    %328 = arith.addf %308, %327 : vector<16x32xf32>
    %cst_133 = arith.constant dense<0.000000e+00> : vector<16xf32>
    %329 = vector.multi_reduction <add>, %328, %cst_133 [1] : vector<16x32xf32> to vector<16xf32>
    %330 = vector.shape_cast %329 : vector<16xf32> to vector<16x1xf32>
    %cst_134 = arith.constant 3.200000e+01 : f32
    %331 = vector.broadcast %cst_134 : f32 to vector<16x1xf32>
    %332 = arith.divf %330, %331 : vector<16x1xf32>
    %333 = vector.broadcast %332 : vector<16x1xf32> to vector<16x32xf32>
    %334 = arith.subf %328, %333 : vector<16x32xf32>
    %335 = arith.mulf %334, %334 : vector<16x32xf32>
    %cst_135 = arith.constant dense<0.000000e+00> : vector<16xf32>
    %336 = vector.multi_reduction <add>, %335, %cst_135 [1] : vector<16x32xf32> to vector<16xf32>
    %337 = vector.shape_cast %336 : vector<16xf32> to vector<16x1xf32>
    %cst_136 = arith.constant 3.200000e+01 : f32
    %338 = vector.broadcast %cst_136 : f32 to vector<16x1xf32>
    %339 = arith.divf %337, %338 : vector<16x1xf32>
    %cst_137 = arith.constant 9.99999996E-13 : f32
    %340 = vector.broadcast %cst_137 : f32 to vector<16x1xf32>
    %341 = arith.addf %339, %340 : vector<16x1xf32>
    %342 = math.rsqrt %341 : vector<16x1xf32>
    %343 = vector.broadcast %342 : vector<16x1xf32> to vector<16x32xf32>
    %344 = arith.mulf %334, %343 : vector<16x32xf32>
    %345 = vector.broadcast %207 : vector<1x32xf32> to vector<16x32xf32>
    %346 = arith.mulf %345, %344 : vector<16x32xf32>
    %347 = vector.broadcast %208 : vector<1x32xf32> to vector<16x32xf32>
    %348 = arith.addf %346, %347 : vector<16x32xf32>
    %349 = vector.extract_strided_slice %348 {offsets = [0, 0], sizes = [1, 32], strides = [1, 1]} : vector<16x32xf32> to vector<1x32xf32>
    %350 = vector.extract_strided_slice %348 {offsets = [1, 0], sizes = [1, 32], strides = [1, 1]} : vector<16x32xf32> to vector<1x32xf32>
    %351 = vector.extract_strided_slice %348 {offsets = [2, 0], sizes = [1, 32], strides = [1, 1]} : vector<16x32xf32> to vector<1x32xf32>
    %352 = vector.extract_strided_slice %348 {offsets = [3, 0], sizes = [1, 32], strides = [1, 1]} : vector<16x32xf32> to vector<1x32xf32>
    %353 = vector.extract_strided_slice %348 {offsets = [4, 0], sizes = [1, 32], strides = [1, 1]} : vector<16x32xf32> to vector<1x32xf32>
    %354 = vector.extract_strided_slice %348 {offsets = [5, 0], sizes = [1, 32], strides = [1, 1]} : vector<16x32xf32> to vector<1x32xf32>
    %355 = vector.extract_strided_slice %348 {offsets = [6, 0], sizes = [1, 32], strides = [1, 1]} : vector<16x32xf32> to vector<1x32xf32>
    %356 = vector.extract_strided_slice %348 {offsets = [7, 0], sizes = [1, 32], strides = [1, 1]} : vector<16x32xf32> to vector<1x32xf32>
    %357 = tpu.concatenate %349, %350, %351, %352, %353, %354, %355, %356 in 1 : vector<1x32xf32>, vector<1x32xf32>, vector<1x32xf32>, vector<1x32xf32>, vector<1x32xf32>, vector<1x32xf32>, vector<1x32xf32>, vector<1x32xf32> -> vector<1x256xf32>
    %358 = vector.extract_strided_slice %348 {offsets = [8, 0], sizes = [1, 32], strides = [1, 1]} : vector<16x32xf32> to vector<1x32xf32>
    %359 = vector.extract_strided_slice %348 {offsets = [9, 0], sizes = [1, 32], strides = [1, 1]} : vector<16x32xf32> to vector<1x32xf32>
    %360 = vector.extract_strided_slice %348 {offsets = [10, 0], sizes = [1, 32], strides = [1, 1]} : vector<16x32xf32> to vector<1x32xf32>
    %361 = vector.extract_strided_slice %348 {offsets = [11, 0], sizes = [1, 32], strides = [1, 1]} : vector<16x32xf32> to vector<1x32xf32>
    %362 = vector.extract_strided_slice %348 {offsets = [12, 0], sizes = [1, 32], strides = [1, 1]} : vector<16x32xf32> to vector<1x32xf32>
    %363 = vector.extract_strided_slice %348 {offsets = [13, 0], sizes = [1, 32], strides = [1, 1]} : vector<16x32xf32> to vector<1x32xf32>
    %364 = vector.extract_strided_slice %348 {offsets = [14, 0], sizes = [1, 32], strides = [1, 1]} : vector<16x32xf32> to vector<1x32xf32>
    %365 = vector.extract_strided_slice %348 {offsets = [15, 0], sizes = [1, 32], strides = [1, 1]} : vector<16x32xf32> to vector<1x32xf32>
    %366 = tpu.concatenate %358, %359, %360, %361, %362, %363, %364, %365 in 1 : vector<1x32xf32>, vector<1x32xf32>, vector<1x32xf32>, vector<1x32xf32>, vector<1x32xf32>, vector<1x32xf32>, vector<1x32xf32>, vector<1x32xf32> -> vector<1x256xf32>
    %367 = tpu.concatenate %357, %366 in 0 : vector<1x256xf32>, vector<1x256xf32> -> vector<2x256xf32>
    %c0_138 = arith.constant 0 : index
    %c0_139 = arith.constant 0 : index
    %368 = vector.load %arg17[%c0_138, %c0_139] : memref<2x256xf32, #tpu.memory_space<vmem>>, vector<2x256xf32>
    tpu.vector_store %arg17[%c0_138, %c0_139], %367 {strides = array<i32>} : memref<2x256xf32, #tpu.memory_space<vmem>>, vector<2x256xf32>,
    %c0_140 = arith.constant 0 : index
    %c0_141 = arith.constant 0 : index
    %369 = vector.load %arg12[%c0_140, %c0_141] : memref<256x8xf32, #tpu.memory_space<vmem>>, vector<256x8xf32>
    %cst_142 = arith.constant dense<0.000000e+00> : vector<2x8xf32>
    %370 = tpu.matmul %367, %369, %cst_142 {dimension_numbers = #tpu.dot_dimension_numbers<[1], [0], [0], [1], [0, 0, 1, 1], [], []>} : vector<2x256xf32>, vector<256x8xf32>, vector<2x8xf32> -> vector<2x8xf32>
    %c0_143 = arith.constant 0 : index
    %c0_144 = arith.constant 0 : index
    %371 = vector.load %arg13[%c0_143, %c0_144] : memref<1x8xf32, #tpu.memory_space<vmem>>, vector<1x8xf32>
    %372 = vector.broadcast %371 : vector<1x8xf32> to vector<2x8xf32>
    %373 = arith.addf %370, %372 : vector<2x8xf32>
    %c0_145 = arith.constant 0 : index
    %c0_146 = arith.constant 0 : index
    %374 = vector.load %arg14[%c0_145, %c0_146] : memref<8x4xf32, #tpu.memory_space<vmem>>, vector<8x4xf32>
    %cst_147 = arith.constant dense<0.000000e+00> : vector<2x4xf32>
    %375 = tpu.matmul %373, %374, %cst_147 {dimension_numbers = #tpu.dot_dimension_numbers<[1], [0], [0], [1], [0, 0, 1, 1], [], []>} : vector<2x8xf32>, vector<8x4xf32>, vector<2x4xf32> -> vector<2x4xf32>
    %c0_148 = arith.constant 0 : index
    %c0_149 = arith.constant 0 : index
    %376 = vector.load %arg15[%c0_148, %c0_149] : memref<1x4xf32, #tpu.memory_space<vmem>>, vector<1x4xf32>
    %377 = vector.broadcast %376 : vector<1x4xf32> to vector<2x4xf32>
    %378 = arith.addf %375, %377 : vector<2x4xf32>
    %c0_150 = arith.constant 0 : index
    %c0_151 = arith.constant 0 : index
    %379 = vector.load %arg16[%c0_150, %c0_151] : memref<2x4xf32, #tpu.memory_space<vmem>>, vector<2x4xf32>
    tpu.vector_store %arg16[%c0_150, %c0_151], %378 {strides = array<i32>} : memref<2x4xf32, #tpu.memory_space<vmem>>, vector<2x4xf32>,
    return
  }
}

</mosaic_0001>

<llo_original>
// kernel: bert_ae_forward.1
$region0: #{bert_ae_forward.1}
  #allocation0 [shape = 'u32[]', space=smem, size = 0x4, offset = 0x4, fixed_abs, tag = 'smem constant byte address 0x4 - core index']
  #allocation1 [shape = 'u32[144,128]{1,0:T(1,128)}', space=vmem, size = 0x12000, scoped, tag = 'internal scratch']
  %s0 = inlined_call_operand.vmem [shape: f32[16,32], index: 0, kind: input, shape index: {}]
  %s1 = inlined_call_operand.vmem [shape: f32[16,16], index: 1, kind: input, shape index: {}]
  %s2 = inlined_call_operand.vmem [shape: f32[2,32], index: 2, kind: input, shape index: {}]
  %s3 = inlined_call_operand.vmem [shape: f32[2,32,96], index: 3, kind: input, shape index: {}]
  %s4 = inlined_call_operand.vmem [shape: f32[2,1,96], index: 4, kind: input, shape index: {}]
  %s5 = inlined_call_operand.vmem [shape: f32[2,32,32], index: 5, kind: input, shape index: {}]
  %s6 = inlined_call_operand.vmem [shape: f32[2,1,32], index: 6, kind: input, shape index: {}]
  %s7 = inlined_call_operand.vmem [shape: f32[2,4,32], index: 7, kind: input, shape index: {}]
  %s8 = inlined_call_operand.vmem [shape: f32[2,32,64], index: 8, kind: input, shape index: {}]
  %s9 = inlined_call_operand.vmem [shape: f32[2,1,64], index: 9, kind: input, shape index: {}]
  %s10 = inlined_call_operand.vmem [shape: f32[2,64,32], index: 10, kind: input, shape index: {}]
  %s11 = inlined_call_operand.vmem [shape: f32[2,1,32], index: 11, kind: input, shape index: {}]
  %s12 = inlined_call_operand.vmem [shape: f32[256,8], index: 12, kind: input, shape index: {}]
  %s13 = inlined_call_operand.vmem [shape: f32[1,8], index: 13, kind: input, shape index: {}]
  %s14 = inlined_call_operand.vmem [shape: f32[8,4], index: 14, kind: input, shape index: {}]
  %s15 = inlined_call_operand.vmem [shape: f32[1,4], index: 15, kind: input, shape index: {}]
  %s16 = inlined_call_operand.hbm [shape: f32[2,4], index: 16, kind: output, shape index: {0}]
  %s17 = inlined_call_operand.vmem [shape: f32[2,256], index: 17, kind: output, shape index: {1}]
  %18 = xla_tuple %s16, %s17
  %s19 = sld [smem:[#allocation0]]
  $region82: #{bert_ae_forward.1} parent=0
    _
  %s21 = ssub.s32 1, %s19
  %s22 = scalar_select 0, %s21, %s19
  $region1: #{bert_ae_forward.1} parent=0
    #allocation2 [shape = 'u8[1024]{0}', space=vmem, size = 0x400, scoped, tag = 'output window, operand 0, single buffered']
    #allocation3 [shape = 's32[1]{0}', space=sflag, size = 0x4, scoped, tag = 'scoped memory for bert_ae_forward.1']
    %23 = vsyncpa [#allocation3], 0
    // Predicated region
    $region2: #{bert_ae_forward.1} parent=1 // pred_check
      _
    $region3: #{bert_ae_forward.1} parent=1 // pred_check_branch
      %25 = sbr.rel (0) target = $region5
    $region4: #{bert_ae_forward.1} parent=1 // pred_region
      _
    $region5: #{bert_ae_forward.1} parent=1 // pred_fallthru
      _
    // Predicated region
    $region6: #{bert_ae_forward.1} parent=1 // pred_check
      _
    $region7: #{bert_ae_forward.1} parent=1 // pred_check_branch
      %27 = sbr.rel (0) target = $region9
    $region8: #{bert_ae_forward.1} parent=1 // pred_region
      _
    $region9: #{bert_ae_forward.1} parent=1 // pred_fallthru
      _
    // Predicated region
    $region10: #{bert_ae_forward.1} parent=1 // pred_check
      _
    $region11: #{bert_ae_forward.1} parent=1 // pred_check_branch
      %29 = sbr.rel (0) target = $region13
    $region12: #{bert_ae_forward.1} parent=1 // pred_region
      _
    $region13: #{bert_ae_forward.1} parent=1 // pred_fallthru
      _
    // Predicated region
    $region14: #{bert_ae_forward.1} parent=1 // pred_check
      _
    $region15: #{bert_ae_forward.1} parent=1 // pred_check_branch
      %31 = sbr.rel (0) target = $region17
    $region16: #{bert_ae_forward.1} parent=1 // pred_region
      _
    $region17: #{bert_ae_forward.1} parent=1 // pred_fallthru
      _
    // Predicated region
    $region18: #{bert_ae_forward.1} parent=1 // pred_check
      _
    $region19: #{bert_ae_forward.1} parent=1 // pred_check_branch
      %33 = sbr.rel (0) target = $region21
    $region20: #{bert_ae_forward.1} parent=1 // pred_region
      _
    $region21: #{bert_ae_forward.1} parent=1 // pred_fallthru
      _
    // Predicated region
    $region22: #{bert_ae_forward.1} parent=1 // pred_check
      _
    $region23: #{bert_ae_forward.1} parent=1 // pred_check_branch
      %35 = sbr.rel (0) target = $region25
    $region24: #{bert_ae_forward.1} parent=1 // pred_region
      _
    $region25: #{bert_ae_forward.1} parent=1 // pred_fallthru
      _
    // Predicated region
    $region26: #{bert_ae_forward.1} parent=1 // pred_check
      _
    $region27: #{bert_ae_forward.1} parent=1 // pred_check_branch
      %37 = sbr.rel (0) target = $region29
    $region28: #{bert_ae_forward.1} parent=1 // pred_region
      _
    $region29: #{bert_ae_forward.1} parent=1 // pred_fallthru
      _
    // Predicated region
    $region30: #{bert_ae_forward.1} parent=1 // pred_check
      _
    $region31: #{bert_ae_forward.1} parent=1 // pred_check_branch
      %39 = sbr.rel (0) target = $region33
    $region32: #{bert_ae_forward.1} parent=1 // pred_region
      _
    $region33: #{bert_ae_forward.1} parent=1 // pred_fallthru
      _
    // Predicated region
    $region34: #{bert_ae_forward.1} parent=1 // pred_check
      _
    $region35: #{bert_ae_forward.1} parent=1 // pred_check_branch
      %41 = sbr.rel (0) target = $region37
    $region36: #{bert_ae_forward.1} parent=1 // pred_region
      _
    $region37: #{bert_ae_forward.1} parent=1 // pred_fallthru
      _
    // Predicated region
    $region38: #{bert_ae_forward.1} parent=1 // pred_check
      _
    $region39: #{bert_ae_forward.1} parent=1 // pred_check_branch
      %43 = sbr.rel (0) target = $region41
    $region40: #{bert_ae_forward.1} parent=1 // pred_region
      _
    $region41: #{bert_ae_forward.1} parent=1 // pred_fallthru
      _
    // Predicated region
    $region42: #{bert_ae_forward.1} parent=1 // pred_check
      _
    $region43: #{bert_ae_forward.1} parent=1 // pred_check_branch
      %45 = sbr.rel (0) target = $region45
    $region44: #{bert_ae_forward.1} parent=1 // pred_region
      _
    $region45: #{bert_ae_forward.1} parent=1 // pred_fallthru
      _
    // Predicated region
    $region46: #{bert_ae_forward.1} parent=1 // pred_check
      _
    $region47: #{bert_ae_forward.1} parent=1 // pred_check_branch
      %47 = sbr.rel (0) target = $region49
    $region48: #{bert_ae_forward.1} parent=1 // pred_region
      _
    $region49: #{bert_ae_forward.1} parent=1 // pred_fallthru
      _
    // Predicated region
    $region50: #{bert_ae_forward.1} parent=1 // pred_check
      _
    $region51: #{bert_ae_forward.1} parent=1 // pred_check_branch
      %49 = sbr.rel (0) target = $region53
    $region52: #{bert_ae_forward.1} parent=1 // pred_region
      _
    $region53: #{bert_ae_forward.1} parent=1 // pred_fallthru
      _
    // Predicated region
    $region54: #{bert_ae_forward.1} parent=1 // pred_check
      _
    $region55: #{bert_ae_forward.1} parent=1 // pred_check_branch
      %51 = sbr.rel (0) target = $region57
    $region56: #{bert_ae_forward.1} parent=1 // pred_region
      _
    $region57: #{bert_ae_forward.1} parent=1 // pred_fallthru
      _
    // Predicated region
    $region58: #{bert_ae_forward.1} parent=1 // pred_check
      _
    $region59: #{bert_ae_forward.1} parent=1 // pred_check_branch
      %53 = sbr.rel (0) target = $region61
    $region60: #{bert_ae_forward.1} parent=1 // pred_region
      _
    $region61: #{bert_ae_forward.1} parent=1 // pred_fallthru
      _
    // Predicated region
    $region62: #{bert_ae_forward.1} parent=1 // pred_check
      _
    $region63: #{bert_ae_forward.1} parent=1 // pred_check_branch
      %55 = sbr.rel (0) target = $region65
    $region64: #{bert_ae_forward.1} parent=1 // pred_region
      _
    $region65: #{bert_ae_forward.1} parent=1 // pred_fallthru
      _
    %v56 = vld [vmem:[%s1] sm:$0xff]
    %v57 = vld [vmem:[%s1 + $0x8] sm:$0xff]
    %v58 = vld [vmem:[%s2] sm:$0x3]
    %v59 = vld [vmem:[%s0] sm:$0xff]
    %v60 = vld [vmem:[%s0 + $0x8] sm:$0xff]
    %vm61 = vcmask 261120
    %v62 = vsel %vm61, %v59, 0.0
    %63 = vadd.xlane.f32.xlu0 %v62
    %v64 = vpop.xlane.xlu0 %63
    %v65 = vsel %vm61, %v60, 0.0
    %66 = vadd.xlane.f32.xlu0 %v65
    %v67 = vpop.xlane.xlu0 %66
    %v68 = vrcp.pop 32.0
    %v69 = vmul.f32 %v64, %v68
    %v70 = vmul.f32 %v67, %v68
    %v71 = vsub.f32 %v59, %v69
    %v72 = vsub.f32 %v60, %v70
    %v73 = vmul.f32 %v71, %v71
    %v74 = vmul.f32 %v72, %v72
    %v75 = vsel %vm61, %v73, 0.0
    %76 = vadd.xlane.f32.xlu0 %v75
    %v77 = vpop.xlane.xlu0 %76
    %v78 = vsel %vm61, %v74, 0.0
    %79 = vadd.xlane.f32.xlu0 %v78
    %v80 = vpop.xlane.xlu0 %79
    %v81 = vmul.f32 %v77, %v68
    %v82 = vmul.f32 %v80, %v68
    %v83 = vadd.f32 %v81, 1e-12
    %v84 = vadd.f32 %v82, 1e-12
    %v85 = vrsqrt.pop %v83
    %v86 = vrsqrt.pop %v84
    %v87 = vmul.f32 %v71, %v85
    %v88 = vmul.f32 %v72, %v86
    %v89 = vlaneseq
    %v90 = vshrl.u32 %v89, 7
    %v91 = vsub.s32 0, %v90
    %v92 = vrot.slane %v58, %v91
    %v93 = vmul.f32 %v92, %v87
    %v94 = vmul.f32 %v92, %v88
    %v95 = vlaneseq
    %v96 = vshrl.u32 %v95, 7
    %v97 = vsub.s32 1, %v96
    %v98 = vrot.slane %v58, %v97
    %v99 = vadd.f32 %v93, %v98
    %v100 = vadd.f32 %v94, %v98
    %v101 = vld [vmem:[%s3] sm:$0xff]
    %v102 = vld [vmem:[%s3 + $0x8] sm:$0xff]
    %v103 = vld [vmem:[%s3 + $0x10] sm:$0xff]
    %v104 = vld [vmem:[%s3 + $0x18] sm:$0xff]
    %v105 = vld [vmem:[%s4] sm:$0x1]
    %v106 = vld [vmem:[%s5] sm:$0xff]
    %v107 = vld [vmem:[%s5 + $0x8] sm:$0xff]
    %v108 = vld [vmem:[%s5 + $0x10] sm:$0xff]
    %v109 = vld [vmem:[%s5 + $0x18] sm:$0xff]
    %v110 = vld [vmem:[%s6] sm:$0x1]
    %v111 = vld [vmem:[%s8] sm:$0xff]
    %v112 = vld [vmem:[%s8 + $0x8] sm:$0xff]
    %v113 = vld [vmem:[%s8 + $0x10] sm:$0xff]
    %v114 = vld [vmem:[%s8 + $0x18] sm:$0xff]
    %v115 = vld [vmem:[%s9] sm:$0x1]
    %v116 = vld [vmem:[%s10] sm:$0xff]
    %v117 = vld [vmem:[%s10 + $0x8] sm:$0xff]
    %v118 = vld [vmem:[%s10 + $0x10] sm:$0xff]
    %v119 = vld [vmem:[%s10 + $0x18] sm:$0xff]
    %v120 = vld [vmem:[%s10 + $0x20] sm:$0xff]
    %v121 = vld [vmem:[%s10 + $0x28] sm:$0xff]
    %v122 = vld [vmem:[%s10 + $0x30] sm:$0xff]
    %v123 = vld [vmem:[%s10 + $0x38] sm:$0xff]
    %v124 = vld [vmem:[%s11] sm:$0x1]
    %v125 = vld [vmem:[%s7] sm:$0xf]
    %v127 = vlaneseq
    %v128 = vshrl.u32 %v127, 7
    %v129 = vsub.s32 0, %v128
    %v130 = vrot.slane %v105, %v129
    %v133 = vsel %vm61, %v99, 0
    %v136 = vsel %vm61, %v100, 0
    %138 = vmatprep.subr.mxu0 0.0
    %139 = vmatpush1.msra.mxu0 0.0
    %140 = vmatprep.subr.mxu0 0.0
    %141 = vmatpush1.msra.mxu0 0.0
    %142 = vmatprep.subr.mxu0 0.0
    %143 = vmatpush1.msra.mxu0 0.0
    %144 = vmatprep.subr.mxu0 0.0
    %145 = vmatpush1.msra.mxu0 0.0
    %146 = vmatprep.subr.mxu0 0.0
    %147 = vmatpush1.msra.mxu0 0.0
    %148 = vmatprep.subr.mxu0 0.0
    %149 = vmatpush1.msra.mxu0 0.0
    %150 = vmatprep.subr.mxu0 0.0
    %151 = vmatpush1.msra.mxu0 0.0
    %152 = vmatprep.subr.mxu0 0.0
    %153 = vmatpush1.msra.mxu0 0.0
    %154 = vmatprep.subr.mxu0 0.0
    %155 = vmatpush1.msra.mxu0 0.0
    %156 = vmatprep.subr.mxu0 0.0
    %157 = vmatpush1.msra.mxu0 0.0
    %158 = vmatprep.subr.mxu0 0.0
    %159 = vmatpush1.msra.mxu0 0.0
    %160 = vmatprep.subr.mxu0 0.0
    %161 = vmatpush1.msra.mxu0 0.0
    %162 = vmatprep.subr.mxu0 0.0
    %163 = vmatpush1.msra.mxu0 %v104
    %164 = vmatprep.subr.mxu0 0.0
    %165 = vmatpush1.msra.mxu0 %v103
    %166 = vmatprep.subr.mxu0 0.0
    %167 = vmatpush1.msra.mxu0 %v102
    %168 = vmatprep.subr.mxu0 0.0
    %169 = vmatpush1.msra.mxu0 %v101
    %170 = vmatprep.subr.mxu0 0.0
    %171 = vmatpush2.msra.mxu0 0.0
    %172 = vmatprep.subr.mxu0 0.0
    %173 = vmatpush2.msra.mxu0 0.0
    %174 = vmatprep.subr.mxu0 0.0
    %175 = vmatpush2.msra.mxu0 0.0
    %176 = vmatprep.subr.mxu0 0.0
    %177 = vmatpush2.msra.mxu0 0.0
    %178 = vmatprep.subr.mxu0 0.0
    %179 = vmatpush2.msra.mxu0 0.0
    %180 = vmatprep.subr.mxu0 0.0
    %181 = vmatpush2.msra.mxu0 0.0
    %182 = vmatprep.subr.mxu0 0.0
    %183 = vmatpush2.msra.mxu0 0.0
    %184 = vmatprep.subr.mxu0 0.0
    %185 = vmatpush2.msra.mxu0 0.0
    %186 = vmatprep.subr.mxu0 0.0
    %187 = vmatpush2.msra.mxu0 0.0
    %188 = vmatprep.subr.mxu0 0.0
    %189 = vmatpush2.msra.mxu0 0.0
    %190 = vmatprep.subr.mxu0 0.0
    %191 = vmatpush2.msra.mxu0 0.0
    %192 = vmatprep.subr.mxu0 0.0
    %193 = vmatpush2.msra.mxu0 0.0
    %194 = vmatprep.subr.mxu0 0.0
    %195 = vmatpush2.msra.mxu0 0.0
    %196 = vmatprep.subr.mxu0 0.0
    %197 = vmatpush2.msra.mxu0 0.0
    %198 = vmatprep.subr.mxu0 0.0
    %199 = vmatpush2.msra.mxu0 0.0
    %200 = vmatprep.subr.mxu0 0.0
    %201 = vmatpush2.msra.mxu0 0.0
    %202 = vmatprep.mubr.f32.mxu0 0.0
    %203 = vmatmul.mubr.f32.gmra.mxu0 %v133
    %v204 = vpop.f32.mrf.mxu0
    %v205 = vadd.f32 %v130, %v204
    %v206 = vpop.f32.mrf.mxu0
    %207 = vmatprep.mubr.f32.mxu0 0.0
    %208 = vmatmul.mubr.f32.gmra.mxu0 %v136
    %v209 = vpop.f32.mrf.mxu0
    %v210 = vadd.f32 %v130, %v209
    %v211 = vpop.f32.mrf.mxu0
    %212 = vdwg.mxu0
    %215 = vrot.lane.b32.xlu0 %v205, 96
    %v216 = vpop.permute.xlu0 %215
    %217 = vrot.lane.b32.xlu0 %v210, 96
    %v218 = vpop.permute.xlu0 %217
    %vm219 = vcmask 64512
    %v220 = vsel %vm219, %v205, 0
    %v222 = vsel %vm219, %v210, 0
    %v224 = vsel %vm219, %v216, 0
    %v226 = vsel %vm219, %v218, 0
    %228 = vmatprep.subr.mxu0 0.0
    %229 = vmatpush1.xpose.msra.mxu0 0.0
    %230 = vmatprep.subr.mxu0 0.0
    %231 = vmatpush1.xpose.msra.mxu0 0.0
    %232 = vmatprep.subr.mxu0 0.0
    %233 = vmatpush1.xpose.msra.mxu0 0.0
    %234 = vmatprep.subr.mxu0 0.0
    %235 = vmatpush1.xpose.msra.mxu0 0.0
    %236 = vmatprep.subr.mxu0 0.0
    %237 = vmatpush1.xpose.msra.mxu0 0.0
    %238 = vmatprep.subr.mxu0 0.0
    %239 = vmatpush1.xpose.msra.mxu0 0.0
    %240 = vmatprep.subr.mxu0 0.0
    %241 = vmatpush1.xpose.msra.mxu0 0.0
    %242 = vmatprep.subr.mxu0 0.0
    %243 = vmatpush1.xpose.msra.mxu0 0.0
    %244 = vmatprep.subr.mxu0 0.0
    %245 = vmatpush1.xpose.msra.mxu0 0.0
    %246 = vmatprep.subr.mxu0 0.0
    %247 = vmatpush1.xpose.msra.mxu0 0.0
    %248 = vmatprep.subr.mxu0 0.0
    %249 = vmatpush1.xpose.msra.mxu0 0.0
    %250 = vmatprep.subr.mxu0 0.0
    %251 = vmatpush1.xpose.msra.mxu0 0.0
    %252 = vmatprep.subr.mxu0 0.0
    %253 = vmatpush1.xpose.msra.mxu0 0.0
    %254 = vmatprep.subr.mxu0 0.0
    %255 = vmatpush1.xpose.msra.mxu0 0.0
    %256 = vmatprep.subr.mxu0 0.0
    %257 = vmatpush1.xpose.msra.mxu0 %v226
    %258 = vmatprep.subr.mxu0 0.0
    %259 = vmatpush1.xpose.msra.mxu0 %v224
    %260 = vmatprep.subr.mxu0 0.0
    %261 = vmatpush2.xpose.msra.mxu0 0.0
    %262 = vmatprep.subr.mxu0 0.0
    %263 = vmatpush2.xpose.msra.mxu0 0.0
    %264 = vmatprep.subr.mxu0 0.0
    %265 = vmatpush2.xpose.msra.mxu0 0.0
    %266 = vmatprep.subr.mxu0 0.0
    %267 = vmatpush2.xpose.msra.mxu0 0.0
    %268 = vmatprep.subr.mxu0 0.0
    %269 = vmatpush2.xpose.msra.mxu0 0.0
    %270 = vmatprep.subr.mxu0 0.0
    %271 = vmatpush2.xpose.msra.mxu0 0.0
    %272 = vmatprep.subr.mxu0 0.0
    %273 = vmatpush2.xpose.msra.mxu0 0.0
    %274 = vmatprep.subr.mxu0 0.0
    %275 = vmatpush2.xpose.msra.mxu0 0.0
    %276 = vmatprep.subr.mxu0 0.0
    %277 = vmatpush2.xpose.msra.mxu0 0.0
    %278 = vmatprep.subr.mxu0 0.0
    %279 = vmatpush2.xpose.msra.mxu0 0.0
    %280 = vmatprep.subr.mxu0 0.0
    %281 = vmatpush2.xpose.msra.mxu0 0.0
    %282 = vmatprep.subr.mxu0 0.0
    %283 = vmatpush2.xpose.msra.mxu0 0.0
    %284 = vmatprep.subr.mxu0 0.0
    %285 = vmatpush2.xpose.msra.mxu0 0.0
    %286 = vmatprep.subr.mxu0 0.0
    %287 = vmatpush2.xpose.msra.mxu0 0.0
    %288 = vmatprep.subr.mxu0 0.0
    %289 = vmatpush2.xpose.msra.mxu0 0.0
    %290 = vmatprep.subr.mxu0 0.0
    %291 = vmatpush2.xpose.msra.mxu0 0.0
    %292 = vmatprep.mubr.f32.mxu0 0.0
    %293 = vmatmul.mubr.f32.gmra.mxu0 %v220
    %v294 = vpop.f32.mrf.mxu0
    %v295 = vadd.f32 0.0, %v294
    %v296 = vpop.f32.mrf.mxu0
    %297 = vmatprep.mubr.f32.mxu0 0.0
    %298 = vmatmul.mubr.f32.gmra.mxu0 %v222
    %v299 = vpop.f32.mrf.mxu0
    %v300 = vadd.f32 0.0, %v299
    %v301 = vpop.f32.mrf.mxu0
    %302 = vdwg.mxu0
    %v303 = vmul.f32 %v295, 0.35355338
    %v304 = vmul.f32 %v300, 0.35355338
    %v305 = vadd.f32 %v303, %v56
    %v306 = vadd.f32 %v304, %v57
    %vm307 = vcmask 130048
    %v308 = vsel %vm307, %v305, -inf
    %309 = vmax.xlane.f32.xlu0 %v308
    %v310 = vpop.xlane.xlu0 %309
    %v311 = vsel %vm307, %v306, -inf
    %312 = vmax.xlane.f32.xlu0 %v311
    %v313 = vpop.xlane.xlu0 %312
    %v314 = vsub.f32 %v305, %v310
    %v315 = vsub.f32 %v306, %v313
    %v316 = vmul.f32 %v314, 1.442695
    %v317 = vpow.pop %v316
    %v318 = vmul.f32 %v315, 1.442695
    %v319 = vpow.pop %v318
    %v320 = vsel %vm307, %v317, 0.0
    %321 = vadd.xlane.f32.xlu0 %v320
    %v322 = vpop.xlane.xlu0 %321
    %v323 = vsel %vm307, %v319, 0.0
    %324 = vadd.xlane.f32.xlu0 %v323
    %v325 = vpop.xlane.xlu0 %324
    %v326 = vrcp.pop %v322
    %v327 = vrcp.pop %v325
    %v328 = vmul.f32 %v317, %v326
    %v329 = vmul.f32 %v319, %v327
    %330 = vrot.lane.b32.xlu0 %v205, 64
    %v331 = vpop.permute.xlu0 %330
    %332 = vrot.lane.b32.xlu0 %v210, 64
    %v333 = vpop.permute.xlu0 %332
    %v337 = vsel %vm307, %v328, 0
    %v340 = vsel %vm307, %v329, 0
    %342 = vmatprep.subr.mxu0 0.0
    %343 = vmatpush1.msra.mxu0 0.0
    %344 = vmatprep.subr.mxu0 0.0
    %345 = vmatpush1.msra.mxu0 0.0
    %346 = vmatprep.subr.mxu0 0.0
    %347 = vmatpush1.msra.mxu0 0.0
    %348 = vmatprep.subr.mxu0 0.0
    %349 = vmatpush1.msra.mxu0 0.0
    %350 = vmatprep.subr.mxu0 0.0
    %351 = vmatpush1.msra.mxu0 0.0
    %352 = vmatprep.subr.mxu0 0.0
    %353 = vmatpush1.msra.mxu0 0.0
    %354 = vmatprep.subr.mxu0 0.0
    %355 = vmatpush1.msra.mxu0 0.0
    %356 = vmatprep.subr.mxu0 0.0
    %357 = vmatpush1.msra.mxu0 0.0
    %358 = vmatprep.subr.mxu0 0.0
    %359 = vmatpush1.msra.mxu0 0.0
    %360 = vmatprep.subr.mxu0 0.0
    %361 = vmatpush1.msra.mxu0 0.0
    %362 = vmatprep.subr.mxu0 0.0
    %363 = vmatpush1.msra.mxu0 0.0
    %364 = vmatprep.subr.mxu0 0.0
    %365 = vmatpush1.msra.mxu0 0.0
    %366 = vmatprep.subr.mxu0 0.0
    %367 = vmatpush1.msra.mxu0 0.0
    %368 = vmatprep.subr.mxu0 0.0
    %369 = vmatpush1.msra.mxu0 0.0
    %370 = vmatprep.subr.mxu0 0.0
    %371 = vmatpush1.msra.mxu0 %v333
    %372 = vmatprep.subr.mxu0 0.0
    %373 = vmatpush1.msra.mxu0 %v331
    %374 = vmatprep.subr.mxu0 0.0
    %375 = vmatpush2.msra.mxu0 0.0
    %376 = vmatprep.subr.mxu0 0.0
    %377 = vmatpush2.msra.mxu0 0.0
    %378 = vmatprep.subr.mxu0 0.0
    %379 = vmatpush2.msra.mxu0 0.0
    %380 = vmatprep.subr.mxu0 0.0
    %381 = vmatpush2.msra.mxu0 0.0
    %382 = vmatprep.subr.mxu0 0.0
    %383 = vmatpush2.msra.mxu0 0.0
    %384 = vmatprep.subr.mxu0 0.0
    %385 = vmatpush2.msra.mxu0 0.0
    %386 = vmatprep.subr.mxu0 0.0
    %387 = vmatpush2.msra.mxu0 0.0
    %388 = vmatprep.subr.mxu0 0.0
    %389 = vmatpush2.msra.mxu0 0.0
    %390 = vmatprep.subr.mxu0 0.0
    %391 = vmatpush2.msra.mxu0 0.0
    %392 = vmatprep.subr.mxu0 0.0
    %393 = vmatpush2.msra.mxu0 0.0
    %394 = vmatprep.subr.mxu0 0.0
    %395 = vmatpush2.msra.mxu0 0.0
    %396 = vmatprep.subr.mxu0 0.0
    %397 = vmatpush2.msra.mxu0 0.0
    %398 = vmatprep.subr.mxu0 0.0
    %399 = vmatpush2.msra.mxu0 0.0
    %400 = vmatprep.subr.mxu0 0.0
    %401 = vmatpush2.msra.mxu0 0.0
    %402 = vmatprep.subr.mxu0 0.0
    %403 = vmatpush2.msra.mxu0 0.0
    %404 = vmatprep.subr.mxu0 0.0
    %405 = vmatpush2.msra.mxu0 0.0
    %406 = vmatprep.mubr.f32.mxu0 0.0
    %407 = vmatmul.mubr.f32.gmra.mxu0 %v337
    %v408 = vpop.f32.mrf.mxu0
    %v409 = vadd.f32 0.0, %v408
    %v410 = vpop.f32.mrf.mxu0
    %411 = vmatprep.mubr.f32.mxu0 0.0
    %412 = vmatmul.mubr.f32.gmra.mxu0 %v340
    %v413 = vpop.f32.mrf.mxu0
    %v414 = vadd.f32 0.0, %v413
    %v415 = vpop.f32.mrf.mxu0
    %416 = vdwg.mxu0
    %417 = vrot.lane.b32.xlu0 %v205, 120
    %v418 = vpop.permute.xlu0 %417
    %419 = vrot.lane.b32.xlu0 %v210, 120
    %v420 = vpop.permute.xlu0 %419
    %421 = vrot.lane.b32.xlu0 %v205, 88
    %v422 = vpop.permute.xlu0 %421
    %423 = vrot.lane.b32.xlu0 %v210, 88
    %v424 = vpop.permute.xlu0 %423
    %v425 = vsel %vm219, %v418, 0
    %v427 = vsel %vm219, %v420, 0
    %v429 = vsel %vm219, %v422, 0
    %v431 = vsel %vm219, %v424, 0
    %433 = vmatprep.subr.mxu0 0.0
    %434 = vmatpush1.xpose.msra.mxu0 0.0
    %435 = vmatprep.subr.mxu0 0.0
    %436 = vmatpush1.xpose.msra.mxu0 0.0
    %437 = vmatprep.subr.mxu0 0.0
    %438 = vmatpush1.xpose.msra.mxu0 0.0
    %439 = vmatprep.subr.mxu0 0.0
    %440 = vmatpush1.xpose.msra.mxu0 0.0
    %441 = vmatprep.subr.mxu0 0.0
    %442 = vmatpush1.xpose.msra.mxu0 0.0
    %443 = vmatprep.subr.mxu0 0.0
    %444 = vmatpush1.xpose.msra.mxu0 0.0
    %445 = vmatprep.subr.mxu0 0.0
    %446 = vmatpush1.xpose.msra.mxu0 0.0
    %447 = vmatprep.subr.mxu0 0.0
    %448 = vmatpush1.xpose.msra.mxu0 0.0
    %449 = vmatprep.subr.mxu0 0.0
    %450 = vmatpush1.xpose.msra.mxu0 0.0
    %451 = vmatprep.subr.mxu0 0.0
    %452 = vmatpush1.xpose.msra.mxu0 0.0
    %453 = vmatprep.subr.mxu0 0.0
    %454 = vmatpush1.xpose.msra.mxu0 0.0
    %455 = vmatprep.subr.mxu0 0.0
    %456 = vmatpush1.xpose.msra.mxu0 0.0
    %457 = vmatprep.subr.mxu0 0.0
    %458 = vmatpush1.xpose.msra.mxu0 0.0
    %459 = vmatprep.subr.mxu0 0.0
    %460 = vmatpush1.xpose.msra.mxu0 0.0
    %461 = vmatprep.subr.mxu0 0.0
    %462 = vmatpush1.xpose.msra.mxu0 %v431
    %463 = vmatprep.subr.mxu0 0.0
    %464 = vmatpush1.xpose.msra.mxu0 %v429
    %465 = vmatprep.subr.mxu0 0.0
    %466 = vmatpush2.xpose.msra.mxu0 0.0
    %467 = vmatprep.subr.mxu0 0.0
    %468 = vmatpush2.xpose.msra.mxu0 0.0
    %469 = vmatprep.subr.mxu0 0.0
    %470 = vmatpush2.xpose.msra.mxu0 0.0
    %471 = vmatprep.subr.mxu0 0.0
    %472 = vmatpush2.xpose.msra.mxu0 0.0
    %473 = vmatprep.subr.mxu0 0.0
    %474 = vmatpush2.xpose.msra.mxu0 0.0
    %475 = vmatprep.subr.mxu0 0.0
    %476 = vmatpush2.xpose.msra.mxu0 0.0
    %477 = vmatprep.subr.mxu0 0.0
    %478 = vmatpush2.xpose.msra.mxu0 0.0
    %479 = vmatprep.subr.mxu0 0.0
    %480 = vmatpush2.xpose.msra.mxu0 0.0
    %481 = vmatprep.subr.mxu0 0.0
    %482 = vmatpush2.xpose.msra.mxu0 0.0
    %483 = vmatprep.subr.mxu0 0.0
    %484 = vmatpush2.xpose.msra.mxu0 0.0
    %485 = vmatprep.subr.mxu0 0.0
    %486 = vmatpush2.xpose.msra.mxu0 0.0
    %487 = vmatprep.subr.mxu0 0.0
    %488 = vmatpush2.xpose.msra.mxu0 0.0
    %489 = vmatprep.subr.mxu0 0.0
    %490 = vmatpush2.xpose.msra.mxu0 0.0
    %491 = vmatprep.subr.mxu0 0.0
    %492 = vmatpush2.xpose.msra.mxu0 0.0
    %493 = vmatprep.subr.mxu0 0.0
    %494 = vmatpush2.xpose.msra.mxu0 0.0
    %495 = vmatprep.subr.mxu0 0.0
    %496 = vmatpush2.xpose.msra.mxu0 0.0
    %497 = vmatprep.mubr.f32.mxu0 0.0
    %498 = vmatmul.mubr.f32.gmra.mxu0 %v425
    %v499 = vpop.f32.mrf.mxu0
    %v500 = vadd.f32 0.0, %v499
    %v501 = vpop.f32.mrf.mxu0
    %502 = vmatprep.mubr.f32.mxu0 0.0
    %503 = vmatmul.mubr.f32.gmra.mxu0 %v427
    %v504 = vpop.f32.mrf.mxu0
    %v505 = vadd.f32 0.0, %v504
    %v506 = vpop.f32.mrf.mxu0
    %507 = vdwg.mxu0
    %v508 = vmul.f32 %v500, 0.35355338
    %v509 = vmul.f32 %v505, 0.35355338
    %v510 = vadd.f32 %v508, %v56
    %v511 = vadd.f32 %v509, %v57
    %v512 = vsel %vm307, %v510, -inf
    %513 = vmax.xlane.f32.xlu0 %v512
    %v514 = vpop.xlane.xlu0 %513
    %v515 = vsel %vm307, %v511, -inf
    %516 = vmax.xlane.f32.xlu0 %v515
    %v517 = vpop.xlane.xlu0 %516
    %v518 = vsub.f32 %v510, %v514
    %v519 = vsub.f32 %v511, %v517
    %v520 = vmul.f32 %v518, 1.442695
    %v521 = vpow.pop %v520
    %v522 = vmul.f32 %v519, 1.442695
    %v523 = vpow.pop %v522
    %v524 = vsel %vm307, %v521, 0.0
    %525 = vadd.xlane.f32.xlu0 %v524
    %v526 = vpop.xlane.xlu0 %525
    %v527 = vsel %vm307, %v523, 0.0
    %528 = vadd.xlane.f32.xlu0 %v527
    %v529 = vpop.xlane.xlu0 %528
    %v530 = vrcp.pop %v526
    %v531 = vrcp.pop %v529
    %v532 = vmul.f32 %v521, %v530
    %v533 = vmul.f32 %v523, %v531
    %534 = vrot.lane.b32.xlu0 %v205, 56
    %v535 = vpop.permute.xlu0 %534
    %536 = vrot.lane.b32.xlu0 %v210, 56
    %v537 = vpop.permute.xlu0 %536
    %v541 = vsel %vm307, %v532, 0
    %v544 = vsel %vm307, %v533, 0
    %546 = vmatprep.subr.mxu0 0.0
    %547 = vmatpush1.msra.mxu0 0.0
    %548 = vmatprep.subr.mxu0 0.0
    %549 = vmatpush1.msra.mxu0 0.0
    %550 = vmatprep.subr.mxu0 0.0
    %551 = vmatpush1.msra.mxu0 0.0
    %552 = vmatprep.subr.mxu0 0.0
    %553 = vmatpush1.msra.mxu0 0.0
    %554 = vmatprep.subr.mxu0 0.0
    %555 = vmatpush1.msra.mxu0 0.0
    %556 = vmatprep.subr.mxu0 0.0
    %557 = vmatpush1.msra.mxu0 0.0
    %558 = vmatprep.subr.mxu0 0.0
    %559 = vmatpush1.msra.mxu0 0.0
    %560 = vmatprep.subr.mxu0 0.0
    %561 = vmatpush1.msra.mxu0 0.0
    %562 = vmatprep.subr.mxu0 0.0
    %563 = vmatpush1.msra.mxu0 0.0
    %564 = vmatprep.subr.mxu0 0.0
    %565 = vmatpush1.msra.mxu0 0.0
    %566 = vmatprep.subr.mxu0 0.0
    %567 = vmatpush1.msra.mxu0 0.0
    %568 = vmatprep.subr.mxu0 0.0
    %569 = vmatpush1.msra.mxu0 0.0
    %570 = vmatprep.subr.mxu0 0.0
    %571 = vmatpush1.msra.mxu0 0.0
    %572 = vmatprep.subr.mxu0 0.0
    %573 = vmatpush1.msra.mxu0 0.0
    %574 = vmatprep.subr.mxu0 0.0
    %575 = vmatpush1.msra.mxu0 %v537
    %576 = vmatprep.subr.mxu0 0.0
    %577 = vmatpush1.msra.mxu0 %v535
    %578 = vmatprep.subr.mxu0 0.0
    %579 = vmatpush2.msra.mxu0 0.0
    %580 = vmatprep.subr.mxu0 0.0
    %581 = vmatpush2.msra.mxu0 0.0
    %582 = vmatprep.subr.mxu0 0.0
    %583 = vmatpush2.msra.mxu0 0.0
    %584 = vmatprep.subr.mxu0 0.0
    %585 = vmatpush2.msra.mxu0 0.0
    %586 = vmatprep.subr.mxu0 0.0
    %587 = vmatpush2.msra.mxu0 0.0
    %588 = vmatprep.subr.mxu0 0.0
    %589 = vmatpush2.msra.mxu0 0.0
    %590 = vmatprep.subr.mxu0 0.0
    %591 = vmatpush2.msra.mxu0 0.0
    %592 = vmatprep.subr.mxu0 0.0
    %593 = vmatpush2.msra.mxu0 0.0
    %594 = vmatprep.subr.mxu0 0.0
    %595 = vmatpush2.msra.mxu0 0.0
    %596 = vmatprep.subr.mxu0 0.0
    %597 = vmatpush2.msra.mxu0 0.0
    %598 = vmatprep.subr.mxu0 0.0
    %599 = vmatpush2.msra.mxu0 0.0
    %600 = vmatprep.subr.mxu0 0.0
    %601 = vmatpush2.msra.mxu0 0.0
    %602 = vmatprep.subr.mxu0 0.0
    %603 = vmatpush2.msra.mxu0 0.0
    %604 = vmatprep.subr.mxu0 0.0
    %605 = vmatpush2.msra.mxu0 0.0
    %606 = vmatprep.subr.mxu0 0.0
    %607 = vmatpush2.msra.mxu0 0.0
    %608 = vmatprep.subr.mxu0 0.0
    %609 = vmatpush2.msra.mxu0 0.0
    %610 = vmatprep.mubr.f32.mxu0 0.0
    %611 = vmatmul.mubr.f32.gmra.mxu0 %v541
    %v612 = vpop.f32.mrf.mxu0
    %v613 = vadd.f32 0.0, %v612
    %v614 = vpop.f32.mrf.mxu0
    %615 = vmatprep.mubr.f32.mxu0 0.0
    %616 = vmatmul.mubr.f32.gmra.mxu0 %v544
    %v617 = vpop.f32.mrf.mxu0
    %v618 = vadd.f32 0.0, %v617
    %v619 = vpop.f32.mrf.mxu0
    %620 = vdwg.mxu0
    %621 = vrot.lane.b32.xlu0 %v205, 112
    %v622 = vpop.permute.xlu0 %621
    %623 = vrot.lane.b32.xlu0 %v210, 112
    %v624 = vpop.permute.xlu0 %623
    %625 = vrot.lane.b32.xlu0 %v205, 80
    %v626 = vpop.permute.xlu0 %625
    %627 = vrot.lane.b32.xlu0 %v210, 80
    %v628 = vpop.permute.xlu0 %627
    %v629 = vsel %vm219, %v622, 0
    %v631 = vsel %vm219, %v624, 0
    %v633 = vsel %vm219, %v626, 0
    %v635 = vsel %vm219, %v628, 0
    %637 = vmatprep.subr.mxu0 0.0
    %638 = vmatpush1.xpose.msra.mxu0 0.0
    %639 = vmatprep.subr.mxu0 0.0
    %640 = vmatpush1.xpose.msra.mxu0 0.0
    %641 = vmatprep.subr.mxu0 0.0
    %642 = vmatpush1.xpose.msra.mxu0 0.0
    %643 = vmatprep.subr.mxu0 0.0
    %644 = vmatpush1.xpose.msra.mxu0 0.0
    %645 = vmatprep.subr.mxu0 0.0
    %646 = vmatpush1.xpose.msra.mxu0 0.0
    %647 = vmatprep.subr.mxu0 0.0
    %648 = vmatpush1.xpose.msra.mxu0 0.0
    %649 = vmatprep.subr.mxu0 0.0
    %650 = vmatpush1.xpose.msra.mxu0 0.0
    %651 = vmatprep.subr.mxu0 0.0
    %652 = vmatpush1.xpose.msra.mxu0 0.0
    %653 = vmatprep.subr.mxu0 0.0
    %654 = vmatpush1.xpose.msra.mxu0 0.0
    %655 = vmatprep.subr.mxu0 0.0
    %656 = vmatpush1.xpose.msra.mxu0 0.0
    %657 = vmatprep.subr.mxu0 0.0
    %658 = vmatpush1.xpose.msra.mxu0 0.0
    %659 = vmatprep.subr.mxu0 0.0
    %660 = vmatpush1.xpose.msra.mxu0 0.0
    %661 = vmatprep.subr.mxu0 0.0
    %662 = vmatpush1.xpose.msra.mxu0 0.0
    %663 = vmatprep.subr.mxu0 0.0
    %664 = vmatpush1.xpose.msra.mxu0 0.0
    %665 = vmatprep.subr.mxu0 0.0
    %666 = vmatpush1.xpose.msra.mxu0 %v635
    %667 = vmatprep.subr.mxu0 0.0
    %668 = vmatpush1.xpose.msra.mxu0 %v633
    %669 = vmatprep.subr.mxu0 0.0
    %670 = vmatpush2.xpose.msra.mxu0 0.0
    %671 = vmatprep.subr.mxu0 0.0
    %672 = vmatpush2.xpose.msra.mxu0 0.0
    %673 = vmatprep.subr.mxu0 0.0
    %674 = vmatpush2.xpose.msra.mxu0 0.0
    %675 = vmatprep.subr.mxu0 0.0
    %676 = vmatpush2.xpose.msra.mxu0 0.0
    %677 = vmatprep.subr.mxu0 0.0
    %678 = vmatpush2.xpose.msra.mxu0 0.0
    %679 = vmatprep.subr.mxu0 0.0
    %680 = vmatpush2.xpose.msra.mxu0 0.0
    %681 = vmatprep.subr.mxu0 0.0
    %682 = vmatpush2.xpose.msra.mxu0 0.0
    %683 = vmatprep.subr.mxu0 0.0
    %684 = vmatpush2.xpose.msra.mxu0 0.0
    %685 = vmatprep.subr.mxu0 0.0
    %686 = vmatpush2.xpose.msra.mxu0 0.0
    %687 = vmatprep.subr.mxu0 0.0
    %688 = vmatpush2.xpose.msra.mxu0 0.0
    %689 = vmatprep.subr.mxu0 0.0
    %690 = vmatpush2.xpose.msra.mxu0 0.0
    %691 = vmatprep.subr.mxu0 0.0
    %692 = vmatpush2.xpose.msra.mxu0 0.0
    %693 = vmatprep.subr.mxu0 0.0
    %694 = vmatpush2.xpose.msra.mxu0 0.0
    %695 = vmatprep.subr.mxu0 0.0
    %696 = vmatpush2.xpose.msra.mxu0 0.0
    %697 = vmatprep.subr.mxu0 0.0
    %698 = vmatpush2.xpose.msra.mxu0 0.0
    %699 = vmatprep.subr.mxu0 0.0
    %700 = vmatpush2.xpose.msra.mxu0 0.0
    %701 = vmatprep.mubr.f32.mxu0 0.0
    %702 = vmatmul.mubr.f32.gmra.mxu0 %v629
    %v703 = vpop.f32.mrf.mxu0
    %v704 = vadd.f32 0.0, %v703
    %v705 = vpop.f32.mrf.mxu0
    %706 = vmatprep.mubr.f32.mxu0 0.0
    %707 = vmatmul.mubr.f32.gmra.mxu0 %v631
    %v708 = vpop.f32.mrf.mxu0
    %v709 = vadd.f32 0.0, %v708
    %v710 = vpop.f32.mrf.mxu0
    %711 = vdwg.mxu0
    %v712 = vmul.f32 %v704, 0.35355338
    %v713 = vmul.f32 %v709, 0.35355338
    %v714 = vadd.f32 %v712, %v56
    %v715 = vadd.f32 %v713, %v57
    %v716 = vsel %vm307, %v714, -inf
    %717 = vmax.xlane.f32.xlu0 %v716
    %v718 = vpop.xlane.xlu0 %717
    %v719 = vsel %vm307, %v715, -inf
    %720 = vmax.xlane.f32.xlu0 %v719
    %v721 = vpop.xlane.xlu0 %720
    %v722 = vsub.f32 %v714, %v718
    %v723 = vsub.f32 %v715, %v721
    %v724 = vmul.f32 %v722, 1.442695
    %v725 = vpow.pop %v724
    %v726 = vmul.f32 %v723, 1.442695
    %v727 = vpow.pop %v726
    %v728 = vsel %vm307, %v725, 0.0
    %729 = vadd.xlane.f32.xlu0 %v728
    %v730 = vpop.xlane.xlu0 %729
    %v731 = vsel %vm307, %v727, 0.0
    %732 = vadd.xlane.f32.xlu0 %v731
    %v733 = vpop.xlane.xlu0 %732
    %v734 = vrcp.pop %v730
    %v735 = vrcp.pop %v733
    %v736 = vmul.f32 %v725, %v734
    %v737 = vmul.f32 %v727, %v735
    %738 = vrot.lane.b32.xlu0 %v205, 48
    %v739 = vpop.permute.xlu0 %738
    %740 = vrot.lane.b32.xlu0 %v210, 48
    %v741 = vpop.permute.xlu0 %740
    %v745 = vsel %vm307, %v736, 0
    %v748 = vsel %vm307, %v737, 0
    %750 = vmatprep.subr.mxu0 0.0
    %751 = vmatpush1.msra.mxu0 0.0
    %752 = vmatprep.subr.mxu0 0.0
    %753 = vmatpush1.msra.mxu0 0.0
    %754 = vmatprep.subr.mxu0 0.0
    %755 = vmatpush1.msra.mxu0 0.0
    %756 = vmatprep.subr.mxu0 0.0
    %757 = vmatpush1.msra.mxu0 0.0
    %758 = vmatprep.subr.mxu0 0.0
    %759 = vmatpush1.msra.mxu0 0.0
    %760 = vmatprep.subr.mxu0 0.0
    %761 = vmatpush1.msra.mxu0 0.0
    %762 = vmatprep.subr.mxu0 0.0
    %763 = vmatpush1.msra.mxu0 0.0
    %764 = vmatprep.subr.mxu0 0.0
    %765 = vmatpush1.msra.mxu0 0.0
    %766 = vmatprep.subr.mxu0 0.0
    %767 = vmatpush1.msra.mxu0 0.0
    %768 = vmatprep.subr.mxu0 0.0
    %769 = vmatpush1.msra.mxu0 0.0
    %770 = vmatprep.subr.mxu0 0.0
    %771 = vmatpush1.msra.mxu0 0.0
    %772 = vmatprep.subr.mxu0 0.0
    %773 = vmatpush1.msra.mxu0 0.0
    %774 = vmatprep.subr.mxu0 0.0
    %775 = vmatpush1.msra.mxu0 0.0
    %776 = vmatprep.subr.mxu0 0.0
    %777 = vmatpush1.msra.mxu0 0.0
    %778 = vmatprep.subr.mxu0 0.0
    %779 = vmatpush1.msra.mxu0 %v741
    %780 = vmatprep.subr.mxu0 0.0
    %781 = vmatpush1.msra.mxu0 %v739
    %782 = vmatprep.subr.mxu0 0.0
    %783 = vmatpush2.msra.mxu0 0.0
    %784 = vmatprep.subr.mxu0 0.0
    %785 = vmatpush2.msra.mxu0 0.0
    %786 = vmatprep.subr.mxu0 0.0
    %787 = vmatpush2.msra.mxu0 0.0
    %788 = vmatprep.subr.mxu0 0.0
    %789 = vmatpush2.msra.mxu0 0.0
    %790 = vmatprep.subr.mxu0 0.0
    %791 = vmatpush2.msra.mxu0 0.0
    %792 = vmatprep.subr.mxu0 0.0
    %793 = vmatpush2.msra.mxu0 0.0
    %794 = vmatprep.subr.mxu0 0.0
    %795 = vmatpush2.msra.mxu0 0.0
    %796 = vmatprep.subr.mxu0 0.0
    %797 = vmatpush2.msra.mxu0 0.0
    %798 = vmatprep.subr.mxu0 0.0
    %799 = vmatpush2.msra.mxu0 0.0
    %800 = vmatprep.subr.mxu0 0.0
    %801 = vmatpush2.msra.mxu0 0.0
    %802 = vmatprep.subr.mxu0 0.0
    %803 = vmatpush2.msra.mxu0 0.0
    %804 = vmatprep.subr.mxu0 0.0
    %805 = vmatpush2.msra.mxu0 0.0
    %806 = vmatprep.subr.mxu0 0.0
    %807 = vmatpush2.msra.mxu0 0.0
    %808 = vmatprep.subr.mxu0 0.0
    %809 = vmatpush2.msra.mxu0 0.0
    %810 = vmatprep.subr.mxu0 0.0
    %811 = vmatpush2.msra.mxu0 0.0
    %812 = vmatprep.subr.mxu0 0.0
    %813 = vmatpush2.msra.mxu0 0.0
    %814 = vmatprep.mubr.f32.mxu0 0.0
    %815 = vmatmul.mubr.f32.gmra.mxu0 %v745
    %v816 = vpop.f32.mrf.mxu0
    %v817 = vadd.f32 0.0, %v816
    %v818 = vpop.f32.mrf.mxu0
    %819 = vmatprep.mubr.f32.mxu0 0.0
    %820 = vmatmul.mubr.f32.gmra.mxu0 %v748
    %v821 = vpop.f32.mrf.mxu0
    %v822 = vadd.f32 0.0, %v821
    %v823 = vpop.f32.mrf.mxu0
    %824 = vdwg.mxu0
    %825 = vrot.lane.b32.xlu0 %v205, 104
    %v826 = vpop.permute.xlu0 %825
    %827 = vrot.lane.b32.xlu0 %v210, 104
    %v828 = vpop.permute.xlu0 %827
    %829 = vrot.lane.b32.xlu0 %v205, 72
    %v830 = vpop.permute.xlu0 %829
    %831 = vrot.lane.b32.xlu0 %v210, 72
    %v832 = vpop.permute.xlu0 %831
    %v833 = vsel %vm219, %v826, 0
    %v835 = vsel %vm219, %v828, 0
    %v837 = vsel %vm219, %v830, 0
    %v839 = vsel %vm219, %v832, 0
    %841 = vmatprep.subr.mxu0 0.0
    %842 = vmatpush1.xpose.msra.mxu0 0.0
    %843 = vmatprep.subr.mxu0 0.0
    %844 = vmatpush1.xpose.msra.mxu0 0.0
    %845 = vmatprep.subr.mxu0 0.0
    %846 = vmatpush1.xpose.msra.mxu0 0.0
    %847 = vmatprep.subr.mxu0 0.0
    %848 = vmatpush1.xpose.msra.mxu0 0.0
    %849 = vmatprep.subr.mxu0 0.0
    %850 = vmatpush1.xpose.msra.mxu0 0.0
    %851 = vmatprep.subr.mxu0 0.0
    %852 = vmatpush1.xpose.msra.mxu0 0.0
    %853 = vmatprep.subr.mxu0 0.0
    %854 = vmatpush1.xpose.msra.mxu0 0.0
    %855 = vmatprep.subr.mxu0 0.0
    %856 = vmatpush1.xpose.msra.mxu0 0.0
    %857 = vmatprep.subr.mxu0 0.0
    %858 = vmatpush1.xpose.msra.mxu0 0.0
    %859 = vmatprep.subr.mxu0 0.0
    %860 = vmatpush1.xpose.msra.mxu0 0.0
    %861 = vmatprep.subr.mxu0 0.0
    %862 = vmatpush1.xpose.msra.mxu0 0.0
    %863 = vmatprep.subr.mxu0 0.0
    %864 = vmatpush1.xpose.msra.mxu0 0.0
    %865 = vmatprep.subr.mxu0 0.0
    %866 = vmatpush1.xpose.msra.mxu0 0.0
    %867 = vmatprep.subr.mxu0 0.0
    %868 = vmatpush1.xpose.msra.mxu0 0.0
    %869 = vmatprep.subr.mxu0 0.0
    %870 = vmatpush1.xpose.msra.mxu0 %v839
    %871 = vmatprep.subr.mxu0 0.0
    %872 = vmatpush1.xpose.msra.mxu0 %v837
    %873 = vmatprep.subr.mxu0 0.0
    %874 = vmatpush2.xpose.msra.mxu0 0.0
    %875 = vmatprep.subr.mxu0 0.0
    %876 = vmatpush2.xpose.msra.mxu0 0.0
    %877 = vmatprep.subr.mxu0 0.0
    %878 = vmatpush2.xpose.msra.mxu0 0.0
    %879 = vmatprep.subr.mxu0 0.0
    %880 = vmatpush2.xpose.msra.mxu0 0.0
    %881 = vmatprep.subr.mxu0 0.0
    %882 = vmatpush2.xpose.msra.mxu0 0.0
    %883 = vmatprep.subr.mxu0 0.0
    %884 = vmatpush2.xpose.msra.mxu0 0.0
    %885 = vmatprep.subr.mxu0 0.0
    %886 = vmatpush2.xpose.msra.mxu0 0.0
    %887 = vmatprep.subr.mxu0 0.0
    %888 = vmatpush2.xpose.msra.mxu0 0.0
    %889 = vmatprep.subr.mxu0 0.0
    %890 = vmatpush2.xpose.msra.mxu0 0.0
    %891 = vmatprep.subr.mxu0 0.0
    %892 = vmatpush2.xpose.msra.mxu0 0.0
    %893 = vmatprep.subr.mxu0 0.0
    %894 = vmatpush2.xpose.msra.mxu0 0.0
    %895 = vmatprep.subr.mxu0 0.0
    %896 = vmatpush2.xpose.msra.mxu0 0.0
    %897 = vmatprep.subr.mxu0 0.0
    %898 = vmatpush2.xpose.msra.mxu0 0.0
    %899 = vmatprep.subr.mxu0 0.0
    %900 = vmatpush2.xpose.msra.mxu0 0.0
    %901 = vmatprep.subr.mxu0 0.0
    %902 = vmatpush2.xpose.msra.mxu0 0.0
    %903 = vmatprep.subr.mxu0 0.0
    %904 = vmatpush2.xpose.msra.mxu0 0.0
    %905 = vmatprep.mubr.f32.mxu0 0.0
    %906 = vmatmul.mubr.f32.gmra.mxu0 %v833
    %v907 = vpop.f32.mrf.mxu0
    %v908 = vadd.f32 0.0, %v907
    %v909 = vpop.f32.mrf.mxu0
    %910 = vmatprep.mubr.f32.mxu0 0.0
    %911 = vmatmul.mubr.f32.gmra.mxu0 %v835
    %v912 = vpop.f32.mrf.mxu0
    %v913 = vadd.f32 0.0, %v912
    %v914 = vpop.f32.mrf.mxu0
    %915 = vdwg.mxu0
    %v916 = vmul.f32 %v908, 0.35355338
    %v917 = vmul.f32 %v913, 0.35355338
    %v918 = vadd.f32 %v916, %v56
    %v919 = vadd.f32 %v917, %v57
    %v920 = vsel %vm307, %v918, -inf
    %921 = vmax.xlane.f32.xlu0 %v920
    %v922 = vpop.xlane.xlu0 %921
    %v923 = vsel %vm307, %v919, -inf
    %924 = vmax.xlane.f32.xlu0 %v923
    %v925 = vpop.xlane.xlu0 %924
    %v926 = vsub.f32 %v918, %v922
    %v927 = vsub.f32 %v919, %v925
    %v928 = vmul.f32 %v926, 1.442695
    %v929 = vpow.pop %v928
    %v930 = vmul.f32 %v927, 1.442695
    %v931 = vpow.pop %v930
    %v932 = vsel %vm307, %v929, 0.0
    %933 = vadd.xlane.f32.xlu0 %v932
    %v934 = vpop.xlane.xlu0 %933
    %v935 = vsel %vm307, %v931, 0.0
    %936 = vadd.xlane.f32.xlu0 %v935
    %v937 = vpop.xlane.xlu0 %936
    %v938 = vrcp.pop %v934
    %v939 = vrcp.pop %v937
    %v940 = vmul.f32 %v929, %v938
    %v941 = vmul.f32 %v931, %v939
    %942 = vrot.lane.b32.xlu0 %v205, 40
    %v943 = vpop.permute.xlu0 %942
    %944 = vrot.lane.b32.xlu0 %v210, 40
    %v945 = vpop.permute.xlu0 %944
    %v949 = vsel %vm307, %v940, 0
    %v952 = vsel %vm307, %v941, 0
    %954 = vmatprep.subr.mxu0 0.0
    %955 = vmatpush1.msra.mxu0 0.0
    %956 = vmatprep.subr.mxu0 0.0
    %957 = vmatpush1.msra.mxu0 0.0
    %958 = vmatprep.subr.mxu0 0.0
    %959 = vmatpush1.msra.mxu0 0.0
    %960 = vmatprep.subr.mxu0 0.0
    %961 = vmatpush1.msra.mxu0 0.0
    %962 = vmatprep.subr.mxu0 0.0
    %963 = vmatpush1.msra.mxu0 0.0
    %964 = vmatprep.subr.mxu0 0.0
    %965 = vmatpush1.msra.mxu0 0.0
    %966 = vmatprep.subr.mxu0 0.0
    %967 = vmatpush1.msra.mxu0 0.0
    %968 = vmatprep.subr.mxu0 0.0
    %969 = vmatpush1.msra.mxu0 0.0
    %970 = vmatprep.subr.mxu0 0.0
    %971 = vmatpush1.msra.mxu0 0.0
    %972 = vmatprep.subr.mxu0 0.0
    %973 = vmatpush1.msra.mxu0 0.0
    %974 = vmatprep.subr.mxu0 0.0
    %975 = vmatpush1.msra.mxu0 0.0
    %976 = vmatprep.subr.mxu0 0.0
    %977 = vmatpush1.msra.mxu0 0.0
    %978 = vmatprep.subr.mxu0 0.0
    %979 = vmatpush1.msra.mxu0 0.0
    %980 = vmatprep.subr.mxu0 0.0
    %981 = vmatpush1.msra.mxu0 0.0
    %982 = vmatprep.subr.mxu0 0.0
    %983 = vmatpush1.msra.mxu0 %v945
    %984 = vmatprep.subr.mxu0 0.0
    %985 = vmatpush1.msra.mxu0 %v943
    %986 = vmatprep.subr.mxu0 0.0
    %987 = vmatpush2.msra.mxu0 0.0
    %988 = vmatprep.subr.mxu0 0.0
    %989 = vmatpush2.msra.mxu0 0.0
    %990 = vmatprep.subr.mxu0 0.0
    %991 = vmatpush2.msra.mxu0 0.0
    %992 = vmatprep.subr.mxu0 0.0
    %993 = vmatpush2.msra.mxu0 0.0
    %994 = vmatprep.subr.mxu0 0.0
    %995 = vmatpush2.msra.mxu0 0.0
    %996 = vmatprep.subr.mxu0 0.0
    %997 = vmatpush2.msra.mxu0 0.0
    %998 = vmatprep.subr.mxu0 0.0
    %999 = vmatpush2.msra.mxu0 0.0
    %1000 = vmatprep.subr.mxu0 0.0
    %1001 = vmatpush2.msra.mxu0 0.0
    %1002 = vmatprep.subr.mxu0 0.0
    %1003 = vmatpush2.msra.mxu0 0.0
    %1004 = vmatprep.subr.mxu0 0.0
    %1005 = vmatpush2.msra.mxu0 0.0
    %1006 = vmatprep.subr.mxu0 0.0
    %1007 = vmatpush2.msra.mxu0 0.0
    %1008 = vmatprep.subr.mxu0 0.0
    %1009 = vmatpush2.msra.mxu0 0.0
    %1010 = vmatprep.subr.mxu0 0.0
    %1011 = vmatpush2.msra.mxu0 0.0
    %1012 = vmatprep.subr.mxu0 0.0
    %1013 = vmatpush2.msra.mxu0 0.0
    %1014 = vmatprep.subr.mxu0 0.0
    %1015 = vmatpush2.msra.mxu0 0.0
    %1016 = vmatprep.subr.mxu0 0.0
    %1017 = vmatpush2.msra.mxu0 0.0
    %1018 = vmatprep.mubr.f32.mxu0 0.0
    %1019 = vmatmul.mubr.f32.gmra.mxu0 %v949
    %v1020 = vpop.f32.mrf.mxu0
    %v1021 = vadd.f32 0.0, %v1020
    %v1022 = vpop.f32.mrf.mxu0
    %1023 = vmatprep.mubr.f32.mxu0 0.0
    %1024 = vmatmul.mubr.f32.gmra.mxu0 %v952
    %v1025 = vpop.f32.mrf.mxu0
    %v1026 = vadd.f32 0.0, %v1025
    %v1027 = vpop.f32.mrf.mxu0
    %1028 = vdwg.mxu0
    %1031 = vrot.lane.b32.xlu0 %v613, 8
    %v1032 = vpop.permute.xlu0 %1031
    %1033 = vrot.lane.b32.xlu0 %v618, 8
    %v1034 = vpop.permute.xlu0 %1033
    %1039 = vrot.lane.b32.xlu0 %v817, 16
    %v1040 = vpop.permute.xlu0 %1039
    %1041 = vrot.lane.b32.xlu0 %v822, 16
    %v1042 = vpop.permute.xlu0 %1041
    %1047 = vrot.lane.b32.xlu0 %v1021, 24
    %v1048 = vpop.permute.xlu0 %1047
    %1049 = vrot.lane.b32.xlu0 %v1026, 24
    %v1050 = vpop.permute.xlu0 %1049
    %v1053 = vsel %vm219, %v409, %v1032
    %v1054 = vsel %vm219, %v414, %v1034
    %v1055 = vsel %vm307, %v1053, %v1040
    %v1056 = vsel %vm307, %v1054, %v1042
    %vm1057 = vcmask 195584
    %v1058 = vsel %vm1057, %v1055, %v1048
    %v1059 = vsel %vm1057, %v1056, %v1050
    %v1061 = vlaneseq
    %v1062 = vshrl.u32 %v1061, 7
    %v1063 = vsub.s32 0, %v1062
    %v1064 = vrot.slane %v110, %v1063
    %v1067 = vsel %vm61, %v1058, 0
    %v1070 = vsel %vm61, %v1059, 0
    %1072 = vmatprep.subr.mxu0 0.0
    %1073 = vmatpush1.msra.mxu0 0.0
    %1074 = vmatprep.subr.mxu0 0.0
    %1075 = vmatpush1.msra.mxu0 0.0
    %1076 = vmatprep.subr.mxu0 0.0
    %1077 = vmatpush1.msra.mxu0 0.0
    %1078 = vmatprep.subr.mxu0 0.0
    %1079 = vmatpush1.msra.mxu0 0.0
    %1080 = vmatprep.subr.mxu0 0.0
    %1081 = vmatpush1.msra.mxu0 0.0
    %1082 = vmatprep.subr.mxu0 0.0
    %1083 = vmatpush1.msra.mxu0 0.0
    %1084 = vmatprep.subr.mxu0 0.0
    %1085 = vmatpush1.msra.mxu0 0.0
    %1086 = vmatprep.subr.mxu0 0.0
    %1087 = vmatpush1.msra.mxu0 0.0
    %1088 = vmatprep.subr.mxu0 0.0
    %1089 = vmatpush1.msra.mxu0 0.0
    %1090 = vmatprep.subr.mxu0 0.0
    %1091 = vmatpush1.msra.mxu0 0.0
    %1092 = vmatprep.subr.mxu0 0.0
    %1093 = vmatpush1.msra.mxu0 0.0
    %1094 = vmatprep.subr.mxu0 0.0
    %1095 = vmatpush1.msra.mxu0 0.0
    %1096 = vmatprep.subr.mxu0 0.0
    %1097 = vmatpush1.msra.mxu0 %v109
    %1098 = vmatprep.subr.mxu0 0.0
    %1099 = vmatpush1.msra.mxu0 %v108
    %1100 = vmatprep.subr.mxu0 0.0
    %1101 = vmatpush1.msra.mxu0 %v107
    %1102 = vmatprep.subr.mxu0 0.0
    %1103 = vmatpush1.msra.mxu0 %v106
    %1104 = vmatprep.subr.mxu0 0.0
    %1105 = vmatpush2.msra.mxu0 0.0
    %1106 = vmatprep.subr.mxu0 0.0
    %1107 = vmatpush2.msra.mxu0 0.0
    %1108 = vmatprep.subr.mxu0 0.0
    %1109 = vmatpush2.msra.mxu0 0.0
    %1110 = vmatprep.subr.mxu0 0.0
    %1111 = vmatpush2.msra.mxu0 0.0
    %1112 = vmatprep.subr.mxu0 0.0
    %1113 = vmatpush2.msra.mxu0 0.0
    %1114 = vmatprep.subr.mxu0 0.0
    %1115 = vmatpush2.msra.mxu0 0.0
    %1116 = vmatprep.subr.mxu0 0.0
    %1117 = vmatpush2.msra.mxu0 0.0
    %1118 = vmatprep.subr.mxu0 0.0
    %1119 = vmatpush2.msra.mxu0 0.0
    %1120 = vmatprep.subr.mxu0 0.0
    %1121 = vmatpush2.msra.mxu0 0.0
    %1122 = vmatprep.subr.mxu0 0.0
    %1123 = vmatpush2.msra.mxu0 0.0
    %1124 = vmatprep.subr.mxu0 0.0
    %1125 = vmatpush2.msra.mxu0 0.0
    %1126 = vmatprep.subr.mxu0 0.0
    %1127 = vmatpush2.msra.mxu0 0.0
    %1128 = vmatprep.subr.mxu0 0.0
    %1129 = vmatpush2.msra.mxu0 0.0
    %1130 = vmatprep.subr.mxu0 0.0
    %1131 = vmatpush2.msra.mxu0 0.0
    %1132 = vmatprep.subr.mxu0 0.0
    %1133 = vmatpush2.msra.mxu0 0.0
    %1134 = vmatprep.subr.mxu0 0.0
    %1135 = vmatpush2.msra.mxu0 0.0
    %1136 = vmatprep.mubr.f32.mxu0 0.0
    %1137 = vmatmul.mubr.f32.gmra.mxu0 %v1067
    %v1138 = vpop.f32.mrf.mxu0
    %v1139 = vadd.f32 %v1064, %v1138
    %v1140 = vpop.f32.mrf.mxu0
    %1141 = vmatprep.mubr.f32.mxu0 0.0
    %1142 = vmatmul.mubr.f32.gmra.mxu0 %v1070
    %v1143 = vpop.f32.mrf.mxu0
    %v1144 = vadd.f32 %v1064, %v1143
    %v1145 = vpop.f32.mrf.mxu0
    %1146 = vdwg.mxu0
    %v1147 = vadd.f32 %v99, %v1139
    %v1148 = vadd.f32 %v100, %v1144
    %v1149 = vsel %vm61, %v1147, 0.0
    %1150 = vadd.xlane.f32.xlu0 %v1149
    %v1151 = vpop.xlane.xlu0 %1150
    %v1152 = vsel %vm61, %v1148, 0.0
    %1153 = vadd.xlane.f32.xlu0 %v1152
    %v1154 = vpop.xlane.xlu0 %1153
    %v1155 = vmul.f32 %v1151, %v68
    %v1156 = vmul.f32 %v1154, %v68
    %v1157 = vsub.f32 %v1147, %v1155
    %v1158 = vsub.f32 %v1148, %v1156
    %v1159 = vmul.f32 %v1157, %v1157
    %v1160 = vmul.f32 %v1158, %v1158
    %v1161 = vsel %vm61, %v1159, 0.0
    %1162 = vadd.xlane.f32.xlu0 %v1161
    %v1163 = vpop.xlane.xlu0 %1162
    %v1164 = vsel %vm61, %v1160, 0.0
    %1165 = vadd.xlane.f32.xlu0 %v1164
    %v1166 = vpop.xlane.xlu0 %1165
    %v1167 = vmul.f32 %v1163, %v68
    %v1168 = vmul.f32 %v1166, %v68
    %v1169 = vadd.f32 %v1167, 1e-12
    %v1170 = vadd.f32 %v1168, 1e-12
    %v1171 = vrsqrt.pop %v1169
    %v1172 = vrsqrt.pop %v1170
    %v1173 = vmul.f32 %v1157, %v1171
    %v1174 = vmul.f32 %v1158, %v1172
    %v1175 = vlaneseq
    %v1176 = vshrl.u32 %v1175, 7
    %v1177 = vsub.s32 0, %v1176
    %v1178 = vrot.slane %v125, %v1177
    %v1179 = vmul.f32 %v1178, %v1173
    %v1180 = vmul.f32 %v1178, %v1174
    %v1181 = vlaneseq
    %v1182 = vshrl.u32 %v1181, 7
    %v1183 = vsub.s32 1, %v1182
    %v1184 = vrot.slane %v125, %v1183
    %v1185 = vadd.f32 %v1179, %v1184
    %v1186 = vadd.f32 %v1180, %v1184
    %v1188 = vlaneseq
    %v1189 = vshrl.u32 %v1188, 7
    %v1190 = vsub.s32 0, %v1189
    %v1191 = vrot.slane %v115, %v1190
    %v1194 = vsel %vm61, %v1185, 0
    %v1197 = vsel %vm61, %v1186, 0
    %1199 = vmatprep.subr.mxu0 0.0
    %1200 = vmatpush1.msra.mxu0 0.0
    %1201 = vmatprep.subr.mxu0 0.0
    %1202 = vmatpush1.msra.mxu0 0.0
    %1203 = vmatprep.subr.mxu0 0.0
    %1204 = vmatpush1.msra.mxu0 0.0
    %1205 = vmatprep.subr.mxu0 0.0
    %1206 = vmatpush1.msra.mxu0 0.0
    %1207 = vmatprep.subr.mxu0 0.0
    %1208 = vmatpush1.msra.mxu0 0.0
    %1209 = vmatprep.subr.mxu0 0.0
    %1210 = vmatpush1.msra.mxu0 0.0
    %1211 = vmatprep.subr.mxu0 0.0
    %1212 = vmatpush1.msra.mxu0 0.0
    %1213 = vmatprep.subr.mxu0 0.0
    %1214 = vmatpush1.msra.mxu0 0.0
    %1215 = vmatprep.subr.mxu0 0.0
    %1216 = vmatpush1.msra.mxu0 0.0
    %1217 = vmatprep.subr.mxu0 0.0
    %1218 = vmatpush1.msra.mxu0 0.0
    %1219 = vmatprep.subr.mxu0 0.0
    %1220 = vmatpush1.msra.mxu0 0.0
    %1221 = vmatprep.subr.mxu0 0.0
    %1222 = vmatpush1.msra.mxu0 0.0
    %1223 = vmatprep.subr.mxu0 0.0
    %1224 = vmatpush1.msra.mxu0 %v114
    %1225 = vmatprep.subr.mxu0 0.0
    %1226 = vmatpush1.msra.mxu0 %v113
    %1227 = vmatprep.subr.mxu0 0.0
    %1228 = vmatpush1.msra.mxu0 %v112
    %1229 = vmatprep.subr.mxu0 0.0
    %1230 = vmatpush1.msra.mxu0 %v111
    %1231 = vmatprep.subr.mxu0 0.0
    %1232 = vmatpush2.msra.mxu0 0.0
    %1233 = vmatprep.subr.mxu0 0.0
    %1234 = vmatpush2.msra.mxu0 0.0
    %1235 = vmatprep.subr.mxu0 0.0
    %1236 = vmatpush2.msra.mxu0 0.0
    %1237 = vmatprep.subr.mxu0 0.0
    %1238 = vmatpush2.msra.mxu0 0.0
    %1239 = vmatprep.subr.mxu0 0.0
    %1240 = vmatpush2.msra.mxu0 0.0
    %1241 = vmatprep.subr.mxu0 0.0
    %1242 = vmatpush2.msra.mxu0 0.0
    %1243 = vmatprep.subr.mxu0 0.0
    %1244 = vmatpush2.msra.mxu0 0.0
    %1245 = vmatprep.subr.mxu0 0.0
    %1246 = vmatpush2.msra.mxu0 0.0
    %1247 = vmatprep.subr.mxu0 0.0
    %1248 = vmatpush2.msra.mxu0 0.0
    %1249 = vmatprep.subr.mxu0 0.0
    %1250 = vmatpush2.msra.mxu0 0.0
    %1251 = vmatprep.subr.mxu0 0.0
    %1252 = vmatpush2.msra.mxu0 0.0
    %1253 = vmatprep.subr.mxu0 0.0
    %1254 = vmatpush2.msra.mxu0 0.0
    %1255 = vmatprep.subr.mxu0 0.0
    %1256 = vmatpush2.msra.mxu0 0.0
    %1257 = vmatprep.subr.mxu0 0.0
    %1258 = vmatpush2.msra.mxu0 0.0
    %1259 = vmatprep.subr.mxu0 0.0
    %1260 = vmatpush2.msra.mxu0 0.0
    %1261 = vmatprep.subr.mxu0 0.0
    %1262 = vmatpush2.msra.mxu0 0.0
    %1263 = vmatprep.mubr.f32.mxu0 0.0
    %1264 = vmatmul.mubr.f32.gmra.mxu0 %v1194
    %v1265 = vpop.f32.mrf.mxu0
    %v1266 = vadd.f32 %v1191, %v1265
    %v1267 = vpop.f32.mrf.mxu0
    %1268 = vmatprep.mubr.f32.mxu0 0.0
    %1269 = vmatmul.mubr.f32.gmra.mxu0 %v1197
    %v1270 = vpop.f32.mrf.mxu0
    %v1271 = vadd.f32 %v1191, %v1270
    %v1272 = vpop.f32.mrf.mxu0
    %1273 = vdwg.mxu0
    %v1274 = vmul.f32 %v1266, 0.5
    %v1275 = vmul.f32 %v1271, 0.5
    %v1276 = vmul.f32 %v1266, 0.044715
    %v1277 = vmul.f32 %v1271, 0.044715
    %v1278 = vmul.f32 %v1276, %v1266
    %v1279 = vmul.f32 %v1277, %v1271
    %v1280 = vmul.f32 %v1278, %v1266
    %v1281 = vmul.f32 %v1279, %v1271
    %v1282 = vadd.f32 %v1266, %v1280
    %v1283 = vadd.f32 %v1271, %v1281
    %v1284 = vmul.f32 %v1282, 0.7978846
    %v1285 = vmul.f32 %v1283, 0.7978846
    %v1286 = vtanh.pop %v1284
    %v1287 = vtanh.pop %v1285
    %v1288 = vadd.f32 %v1286, 1.0
    %v1289 = vadd.f32 %v1287, 1.0
    %v1290 = vmul.f32 %v1274, %v1288
    %v1291 = vmul.f32 %v1275, %v1289
    %v1293 = vlaneseq
    %v1294 = vshrl.u32 %v1293, 7
    %v1295 = vsub.s32 0, %v1294
    %v1296 = vrot.slane %v124, %v1295
    %vm1298 = vcmask 523264
    %v1300 = vsel %vm1298, %v1290, 0
    %v1303 = vsel %vm1298, %v1291, 0
    %1305 = vmatprep.subr.mxu0 0.0
    %1306 = vmatpush1.msra.mxu0 0.0
    %1307 = vmatprep.subr.mxu0 0.0
    %1308 = vmatpush1.msra.mxu0 0.0
    %1309 = vmatprep.subr.mxu0 0.0
    %1310 = vmatpush1.msra.mxu0 0.0
    %1311 = vmatprep.subr.mxu0 0.0
    %1312 = vmatpush1.msra.mxu0 0.0
    %1313 = vmatprep.subr.mxu0 0.0
    %1314 = vmatpush1.msra.mxu0 0.0
    %1315 = vmatprep.subr.mxu0 0.0
    %1316 = vmatpush1.msra.mxu0 0.0
    %1317 = vmatprep.subr.mxu0 0.0
    %1318 = vmatpush1.msra.mxu0 0.0
    %1319 = vmatprep.subr.mxu0 0.0
    %1320 = vmatpush1.msra.mxu0 0.0
    %1321 = vmatprep.subr.mxu0 0.0
    %1322 = vmatpush1.msra.mxu0 %v123
    %1323 = vmatprep.subr.mxu0 0.0
    %1324 = vmatpush1.msra.mxu0 %v122
    %1325 = vmatprep.subr.mxu0 0.0
    %1326 = vmatpush1.msra.mxu0 %v121
    %1327 = vmatprep.subr.mxu0 0.0
    %1328 = vmatpush1.msra.mxu0 %v120
    %1329 = vmatprep.subr.mxu0 0.0
    %1330 = vmatpush1.msra.mxu0 %v119
    %1331 = vmatprep.subr.mxu0 0.0
    %1332 = vmatpush1.msra.mxu0 %v118
    %1333 = vmatprep.subr.mxu0 0.0
    %1334 = vmatpush1.msra.mxu0 %v117
    %1335 = vmatprep.subr.mxu0 0.0
    %1336 = vmatpush1.msra.mxu0 %v116
    %1337 = vmatprep.subr.mxu0 0.0
    %1338 = vmatpush2.msra.mxu0 0.0
    %1339 = vmatprep.subr.mxu0 0.0
    %1340 = vmatpush2.msra.mxu0 0.0
    %1341 = vmatprep.subr.mxu0 0.0
    %1342 = vmatpush2.msra.mxu0 0.0
    %1343 = vmatprep.subr.mxu0 0.0
    %1344 = vmatpush2.msra.mxu0 0.0
    %1345 = vmatprep.subr.mxu0 0.0
    %1346 = vmatpush2.msra.mxu0 0.0
    %1347 = vmatprep.subr.mxu0 0.0
    %1348 = vmatpush2.msra.mxu0 0.0
    %1349 = vmatprep.subr.mxu0 0.0
    %1350 = vmatpush2.msra.mxu0 0.0
    %1351 = vmatprep.subr.mxu0 0.0
    %1352 = vmatpush2.msra.mxu0 0.0
    %1353 = vmatprep.subr.mxu0 0.0
    %1354 = vmatpush2.msra.mxu0 0.0
    %1355 = vmatprep.subr.mxu0 0.0
    %1356 = vmatpush2.msra.mxu0 0.0
    %1357 = vmatprep.subr.mxu0 0.0
    %1358 = vmatpush2.msra.mxu0 0.0
    %1359 = vmatprep.subr.mxu0 0.0
    %1360 = vmatpush2.msra.mxu0 0.0
    %1361 = vmatprep.subr.mxu0 0.0
    %1362 = vmatpush2.msra.mxu0 0.0
    %1363 = vmatprep.subr.mxu0 0.0
    %1364 = vmatpush2.msra.mxu0 0.0
    %1365 = vmatprep.subr.mxu0 0.0
    %1366 = vmatpush2.msra.mxu0 0.0
    %1367 = vmatprep.subr.mxu0 0.0
    %1368 = vmatpush2.msra.mxu0 0.0
    %1369 = vmatprep.mubr.f32.mxu0 0.0
    %1370 = vmatmul.mubr.f32.gmra.mxu0 %v1300
    %v1371 = vpop.f32.mrf.mxu0
    %v1372 = vadd.f32 %v1296, %v1371
    %v1373 = vpop.f32.mrf.mxu0
    %1374 = vmatprep.mubr.f32.mxu0 0.0
    %1375 = vmatmul.mubr.f32.gmra.mxu0 %v1303
    %v1376 = vpop.f32.mrf.mxu0
    %v1377 = vadd.f32 %v1296, %v1376
    %v1378 = vpop.f32.mrf.mxu0
    %1379 = vdwg.mxu0
    %v1380 = vadd.f32 %v1185, %v1372
    %v1381 = vadd.f32 %v1186, %v1377
    %v1382 = vsel %vm61, %v1380, 0.0
    %1383 = vadd.xlane.f32.xlu0 %v1382
    %v1384 = vpop.xlane.xlu0 %1383
    %v1385 = vsel %vm61, %v1381, 0.0
    %1386 = vadd.xlane.f32.xlu0 %v1385
    %v1387 = vpop.xlane.xlu0 %1386
    %v1388 = vmul.f32 %v1384, %v68
    %v1389 = vmul.f32 %v1387, %v68
    %v1390 = vsub.f32 %v1380, %v1388
    %v1391 = vsub.f32 %v1381, %v1389
    %v1392 = vmul.f32 %v1390, %v1390
    %v1393 = vmul.f32 %v1391, %v1391
    %v1394 = vsel %vm61, %v1392, 0.0
    %1395 = vadd.xlane.f32.xlu0 %v1394
    %v1396 = vpop.xlane.xlu0 %1395
    %v1397 = vsel %vm61, %v1393, 0.0
    %1398 = vadd.xlane.f32.xlu0 %v1397
    %v1399 = vpop.xlane.xlu0 %1398
    %v1400 = vmul.f32 %v1396, %v68
    %v1401 = vmul.f32 %v1399, %v68
    %v1402 = vadd.f32 %v1400, 1e-12
    %v1403 = vadd.f32 %v1401, 1e-12
    %v1404 = vrsqrt.pop %v1402
    %v1405 = vrsqrt.pop %v1403
    %v1406 = vmul.f32 %v1390, %v1404
    %v1407 = vmul.f32 %v1391, %v1405
    %v1408 = vlaneseq
    %v1409 = vshrl.u32 %v1408, 7
    %v1410 = vsub.s32 2, %v1409
    %v1411 = vrot.slane %v125, %v1410
    %v1412 = vmul.f32 %v1411, %v1406
    %v1413 = vmul.f32 %v1411, %v1407
    %v1414 = vlaneseq
    %v1415 = vshrl.u32 %v1414, 7
    %v1416 = vsub.s32 3, %v1415
    %v1417 = vrot.slane %v125, %v1416
    %v1418 = vadd.f32 %v1412, %v1417
    %v1419 = vadd.f32 %v1413, %v1417
    %s1420 = scalar_lea.vmem %s3, 32
    %v1421 = vld [vmem:[%s1420] sm:$0xff]
    %v1422 = vld [vmem:[%s1420 + $0x8] sm:$0xff]
    %v1423 = vld [vmem:[%s1420 + $0x10] sm:$0xff]
    %v1424 = vld [vmem:[%s1420 + $0x18] sm:$0xff]
    %s1425 = scalar_lea.vmem %s4, 1
    %v1426 = vld [vmem:[%s1425] sm:$0x1]
    %s1427 = scalar_lea.vmem %s5, 32
    %v1428 = vld [vmem:[%s1427] sm:$0xff]
    %v1429 = vld [vmem:[%s1427 + $0x8] sm:$0xff]
    %v1430 = vld [vmem:[%s1427 + $0x10] sm:$0xff]
    %v1431 = vld [vmem:[%s1427 + $0x18] sm:$0xff]
    %s1432 = scalar_lea.vmem %s6, 1
    %v1433 = vld [vmem:[%s1432] sm:$0x1]
    %s1434 = scalar_lea.vmem %s8, 32
    %v1435 = vld [vmem:[%s1434] sm:$0xff]
    %v1436 = vld [vmem:[%s1434 + $0x8] sm:$0xff]
    %v1437 = vld [vmem:[%s1434 + $0x10] sm:$0xff]
    %v1438 = vld [vmem:[%s1434 + $0x18] sm:$0xff]
    %s1439 = scalar_lea.vmem %s9, 1
    %v1440 = vld [vmem:[%s1439] sm:$0x1]
    %s1441 = scalar_lea.vmem %s10, 64
    %v1442 = vld [vmem:[%s1441] sm:$0xff]
    %v1443 = vld [vmem:[%s1441 + $0x8] sm:$0xff]
    %v1444 = vld [vmem:[%s1441 + $0x10] sm:$0xff]
    %v1445 = vld [vmem:[%s1441 + $0x18] sm:$0xff]
    %v1446 = vld [vmem:[%s1441 + $0x20] sm:$0xff]
    %v1447 = vld [vmem:[%s1441 + $0x28] sm:$0xff]
    %v1448 = vld [vmem:[%s1441 + $0x30] sm:$0xff]
    %v1449 = vld [vmem:[%s1441 + $0x38] sm:$0xff]
    %s1450 = scalar_lea.vmem %s11, 1
    %v1451 = vld [vmem:[%s1450] sm:$0x1]
    %s1452 = scalar_lea.vmem %s7, 4
    %v1453 = vld [vmem:[%s1452] sm:$0xf]
    %v1455 = vlaneseq
    %v1456 = vshrl.u32 %v1455, 7
    %v1457 = vsub.s32 0, %v1456
    %v1458 = vrot.slane %v1426, %v1457
    %v1461 = vsel %vm61, %v1418, 0
    %v1464 = vsel %vm61, %v1419, 0
    %1466 = vmatprep.subr.mxu0 0.0
    %1467 = vmatpush1.msra.mxu0 0.0
    %1468 = vmatprep.subr.mxu0 0.0
    %1469 = vmatpush1.msra.mxu0 0.0
    %1470 = vmatprep.subr.mxu0 0.0
    %1471 = vmatpush1.msra.mxu0 0.0
    %1472 = vmatprep.subr.mxu0 0.0
    %1473 = vmatpush1.msra.mxu0 0.0
    %1474 = vmatprep.subr.mxu0 0.0
    %1475 = vmatpush1.msra.mxu0 0.0
    %1476 = vmatprep.subr.mxu0 0.0
    %1477 = vmatpush1.msra.mxu0 0.0
    %1478 = vmatprep.subr.mxu0 0.0
    %1479 = vmatpush1.msra.mxu0 0.0
    %1480 = vmatprep.subr.mxu0 0.0
    %1481 = vmatpush1.msra.mxu0 0.0
    %1482 = vmatprep.subr.mxu0 0.0
    %1483 = vmatpush1.msra.mxu0 0.0
    %1484 = vmatprep.subr.mxu0 0.0
    %1485 = vmatpush1.msra.mxu0 0.0
    %1486 = vmatprep.subr.mxu0 0.0
    %1487 = vmatpush1.msra.mxu0 0.0
    %1488 = vmatprep.subr.mxu0 0.0
    %1489 = vmatpush1.msra.mxu0 0.0
    %1490 = vmatprep.subr.mxu0 0.0
    %1491 = vmatpush1.msra.mxu0 %v1424
    %1492 = vmatprep.subr.mxu0 0.0
    %1493 = vmatpush1.msra.mxu0 %v1423
    %1494 = vmatprep.subr.mxu0 0.0
    %1495 = vmatpush1.msra.mxu0 %v1422
    %1496 = vmatprep.subr.mxu0 0.0
    %1497 = vmatpush1.msra.mxu0 %v1421
    %1498 = vmatprep.subr.mxu0 0.0
    %1499 = vmatpush2.msra.mxu0 0.0
    %1500 = vmatprep.subr.mxu0 0.0
    %1501 = vmatpush2.msra.mxu0 0.0
    %1502 = vmatprep.subr.mxu0 0.0
    %1503 = vmatpush2.msra.mxu0 0.0
    %1504 = vmatprep.subr.mxu0 0.0
    %1505 = vmatpush2.msra.mxu0 0.0
    %1506 = vmatprep.subr.mxu0 0.0
    %1507 = vmatpush2.msra.mxu0 0.0
    %1508 = vmatprep.subr.mxu0 0.0
    %1509 = vmatpush2.msra.mxu0 0.0
    %1510 = vmatprep.subr.mxu0 0.0
    %1511 = vmatpush2.msra.mxu0 0.0
    %1512 = vmatprep.subr.mxu0 0.0
    %1513 = vmatpush2.msra.mxu0 0.0
    %1514 = vmatprep.subr.mxu0 0.0
    %1515 = vmatpush2.msra.mxu0 0.0
    %1516 = vmatprep.subr.mxu0 0.0
    %1517 = vmatpush2.msra.mxu0 0.0
    %1518 = vmatprep.subr.mxu0 0.0
    %1519 = vmatpush2.msra.mxu0 0.0
    %1520 = vmatprep.subr.mxu0 0.0
    %1521 = vmatpush2.msra.mxu0 0.0
    %1522 = vmatprep.subr.mxu0 0.0
    %1523 = vmatpush2.msra.mxu0 0.0
    %1524 = vmatprep.subr.mxu0 0.0
    %1525 = vmatpush2.msra.mxu0 0.0
    %1526 = vmatprep.subr.mxu0 0.0
    %1527 = vmatpush2.msra.mxu0 0.0
    %1528 = vmatprep.subr.mxu0 0.0
    %1529 = vmatpush2.msra.mxu0 0.0
    %1530 = vmatprep.mubr.f32.mxu0 0.0
    %1531 = vmatmul.mubr.f32.gmra.mxu0 %v1461
    %v1532 = vpop.f32.mrf.mxu0
    %v1533 = vadd.f32 %v1458, %v1532
    %v1534 = vpop.f32.mrf.mxu0
    %1535 = vmatprep.mubr.f32.mxu0 0.0
    %1536 = vmatmul.mubr.f32.gmra.mxu0 %v1464
    %v1537 = vpop.f32.mrf.mxu0
    %v1538 = vadd.f32 %v1458, %v1537
    %v1539 = vpop.f32.mrf.mxu0
    %1540 = vdwg.mxu0
    %1543 = vrot.lane.b32.xlu0 %v1533, 96
    %v1544 = vpop.permute.xlu0 %1543
    %1545 = vrot.lane.b32.xlu0 %v1538, 96
    %v1546 = vpop.permute.xlu0 %1545
    %v1547 = vsel %vm219, %v1533, 0
    %v1549 = vsel %vm219, %v1538, 0
    %v1551 = vsel %vm219, %v1544, 0
    %v1553 = vsel %vm219, %v1546, 0
    %1555 = vmatprep.subr.mxu0 0.0
    %1556 = vmatpush1.xpose.msra.mxu0 0.0
    %1557 = vmatprep.subr.mxu0 0.0
    %1558 = vmatpush1.xpose.msra.mxu0 0.0
    %1559 = vmatprep.subr.mxu0 0.0
    %1560 = vmatpush1.xpose.msra.mxu0 0.0
    %1561 = vmatprep.subr.mxu0 0.0
    %1562 = vmatpush1.xpose.msra.mxu0 0.0
    %1563 = vmatprep.subr.mxu0 0.0
    %1564 = vmatpush1.xpose.msra.mxu0 0.0
    %1565 = vmatprep.subr.mxu0 0.0
    %1566 = vmatpush1.xpose.msra.mxu0 0.0
    %1567 = vmatprep.subr.mxu0 0.0
    %1568 = vmatpush1.xpose.msra.mxu0 0.0
    %1569 = vmatprep.subr.mxu0 0.0
    %1570 = vmatpush1.xpose.msra.mxu0 0.0
    %1571 = vmatprep.subr.mxu0 0.0
    %1572 = vmatpush1.xpose.msra.mxu0 0.0
    %1573 = vmatprep.subr.mxu0 0.0
    %1574 = vmatpush1.xpose.msra.mxu0 0.0
    %1575 = vmatprep.subr.mxu0 0.0
    %1576 = vmatpush1.xpose.msra.mxu0 0.0
    %1577 = vmatprep.subr.mxu0 0.0
    %1578 = vmatpush1.xpose.msra.mxu0 0.0
    %1579 = vmatprep.subr.mxu0 0.0
    %1580 = vmatpush1.xpose.msra.mxu0 0.0
    %1581 = vmatprep.subr.mxu0 0.0
    %1582 = vmatpush1.xpose.msra.mxu0 0.0
    %1583 = vmatprep.subr.mxu0 0.0
    %1584 = vmatpush1.xpose.msra.mxu0 %v1553
    %1585 = vmatprep.subr.mxu0 0.0
    %1586 = vmatpush1.xpose.msra.mxu0 %v1551
    %1587 = vmatprep.subr.mxu0 0.0
    %1588 = vmatpush2.xpose.msra.mxu0 0.0
    %1589 = vmatprep.subr.mxu0 0.0
    %1590 = vmatpush2.xpose.msra.mxu0 0.0
    %1591 = vmatprep.subr.mxu0 0.0
    %1592 = vmatpush2.xpose.msra.mxu0 0.0
    %1593 = vmatprep.subr.mxu0 0.0
    %1594 = vmatpush2.xpose.msra.mxu0 0.0
    %1595 = vmatprep.subr.mxu0 0.0
    %1596 = vmatpush2.xpose.msra.mxu0 0.0
    %1597 = vmatprep.subr.mxu0 0.0
    %1598 = vmatpush2.xpose.msra.mxu0 0.0
    %1599 = vmatprep.subr.mxu0 0.0
    %1600 = vmatpush2.xpose.msra.mxu0 0.0
    %1601 = vmatprep.subr.mxu0 0.0
    %1602 = vmatpush2.xpose.msra.mxu0 0.0
    %1603 = vmatprep.subr.mxu0 0.0
    %1604 = vmatpush2.xpose.msra.mxu0 0.0
    %1605 = vmatprep.subr.mxu0 0.0
    %1606 = vmatpush2.xpose.msra.mxu0 0.0
    %1607 = vmatprep.subr.mxu0 0.0
    %1608 = vmatpush2.xpose.msra.mxu0 0.0
    %1609 = vmatprep.subr.mxu0 0.0
    %1610 = vmatpush2.xpose.msra.mxu0 0.0
    %1611 = vmatprep.subr.mxu0 0.0
    %1612 = vmatpush2.xpose.msra.mxu0 0.0
    %1613 = vmatprep.subr.mxu0 0.0
    %1614 = vmatpush2.xpose.msra.mxu0 0.0
    %1615 = vmatprep.subr.mxu0 0.0
    %1616 = vmatpush2.xpose.msra.mxu0 0.0
    %1617 = vmatprep.subr.mxu0 0.0
    %1618 = vmatpush2.xpose.msra.mxu0 0.0
    %1619 = vmatprep.mubr.f32.mxu0 0.0
    %1620 = vmatmul.mubr.f32.gmra.mxu0 %v1547
    %v1621 = vpop.f32.mrf.mxu0
    %v1622 = vadd.f32 0.0, %v1621
    %v1623 = vpop.f32.mrf.mxu0
    %1624 = vmatprep.mubr.f32.mxu0 0.0
    %1625 = vmatmul.mubr.f32.gmra.mxu0 %v1549
    %v1626 = vpop.f32.mrf.mxu0
    %v1627 = vadd.f32 0.0, %v1626
    %v1628 = vpop.f32.mrf.mxu0
    %1629 = vdwg.mxu0
    %v1630 = vmul.f32 %v1622, 0.35355338
    %v1631 = vmul.f32 %v1627, 0.35355338
    %v1632 = vadd.f32 %v1630, %v56
    %v1633 = vadd.f32 %v1631, %v57
    %v1634 = vsel %vm307, %v1632, -inf
    %1635 = vmax.xlane.f32.xlu0 %v1634
    %v1636 = vpop.xlane.xlu0 %1635
    %v1637 = vsel %vm307, %v1633, -inf
    %1638 = vmax.xlane.f32.xlu0 %v1637
    %v1639 = vpop.xlane.xlu0 %1638
    %v1640 = vsub.f32 %v1632, %v1636
    %v1641 = vsub.f32 %v1633, %v1639
    %v1642 = vmul.f32 %v1640, 1.442695
    %v1643 = vpow.pop %v1642
    %v1644 = vmul.f32 %v1641, 1.442695
    %v1645 = vpow.pop %v1644
    %v1646 = vsel %vm307, %v1643, 0.0
    %1647 = vadd.xlane.f32.xlu0 %v1646
    %v1648 = vpop.xlane.xlu0 %1647
    %v1649 = vsel %vm307, %v1645, 0.0
    %1650 = vadd.xlane.f32.xlu0 %v1649
    %v1651 = vpop.xlane.xlu0 %1650
    %v1652 = vrcp.pop %v1648
    %v1653 = vrcp.pop %v1651
    %v1654 = vmul.f32 %v1643, %v1652
    %v1655 = vmul.f32 %v1645, %v1653
    %1656 = vrot.lane.b32.xlu0 %v1533, 64
    %v1657 = vpop.permute.xlu0 %1656
    %1658 = vrot.lane.b32.xlu0 %v1538, 64
    %v1659 = vpop.permute.xlu0 %1658
    %v1663 = vsel %vm307, %v1654, 0
    %v1666 = vsel %vm307, %v1655, 0
    %1668 = vmatprep.subr.mxu0 0.0
    %1669 = vmatpush1.msra.mxu0 0.0
    %1670 = vmatprep.subr.mxu0 0.0
    %1671 = vmatpush1.msra.mxu0 0.0
    %1672 = vmatprep.subr.mxu0 0.0
    %1673 = vmatpush1.msra.mxu0 0.0
    %1674 = vmatprep.subr.mxu0 0.0
    %1675 = vmatpush1.msra.mxu0 0.0
    %1676 = vmatprep.subr.mxu0 0.0
    %1677 = vmatpush1.msra.mxu0 0.0
    %1678 = vmatprep.subr.mxu0 0.0
    %1679 = vmatpush1.msra.mxu0 0.0
    %1680 = vmatprep.subr.mxu0 0.0
    %1681 = vmatpush1.msra.mxu0 0.0
    %1682 = vmatprep.subr.mxu0 0.0
    %1683 = vmatpush1.msra.mxu0 0.0
    %1684 = vmatprep.subr.mxu0 0.0
    %1685 = vmatpush1.msra.mxu0 0.0
    %1686 = vmatprep.subr.mxu0 0.0
    %1687 = vmatpush1.msra.mxu0 0.0
    %1688 = vmatprep.subr.mxu0 0.0
    %1689 = vmatpush1.msra.mxu0 0.0
    %1690 = vmatprep.subr.mxu0 0.0
    %1691 = vmatpush1.msra.mxu0 0.0
    %1692 = vmatprep.subr.mxu0 0.0
    %1693 = vmatpush1.msra.mxu0 0.0
    %1694 = vmatprep.subr.mxu0 0.0
    %1695 = vmatpush1.msra.mxu0 0.0
    %1696 = vmatprep.subr.mxu0 0.0
    %1697 = vmatpush1.msra.mxu0 %v1659
    %1698 = vmatprep.subr.mxu0 0.0
    %1699 = vmatpush1.msra.mxu0 %v1657
    %1700 = vmatprep.subr.mxu0 0.0
    %1701 = vmatpush2.msra.mxu0 0.0
    %1702 = vmatprep.subr.mxu0 0.0
    %1703 = vmatpush2.msra.mxu0 0.0
    %1704 = vmatprep.subr.mxu0 0.0
    %1705 = vmatpush2.msra.mxu0 0.0
    %1706 = vmatprep.subr.mxu0 0.0
    %1707 = vmatpush2.msra.mxu0 0.0
    %1708 = vmatprep.subr.mxu0 0.0
    %1709 = vmatpush2.msra.mxu0 0.0
    %1710 = vmatprep.subr.mxu0 0.0
    %1711 = vmatpush2.msra.mxu0 0.0
    %1712 = vmatprep.subr.mxu0 0.0
    %1713 = vmatpush2.msra.mxu0 0.0
    %1714 = vmatprep.subr.mxu0 0.0
    %1715 = vmatpush2.msra.mxu0 0.0
    %1716 = vmatprep.subr.mxu0 0.0
    %1717 = vmatpush2.msra.mxu0 0.0
    %1718 = vmatprep.subr.mxu0 0.0
    %1719 = vmatpush2.msra.mxu0 0.0
    %1720 = vmatprep.subr.mxu0 0.0
    %1721 = vmatpush2.msra.mxu0 0.0
    %1722 = vmatprep.subr.mxu0 0.0
    %1723 = vmatpush2.msra.mxu0 0.0
    %1724 = vmatprep.subr.mxu0 0.0
    %1725 = vmatpush2.msra.mxu0 0.0
    %1726 = vmatprep.subr.mxu0 0.0
    %1727 = vmatpush2.msra.mxu0 0.0
    %1728 = vmatprep.subr.mxu0 0.0
    %1729 = vmatpush2.msra.mxu0 0.0
    %1730 = vmatprep.subr.mxu0 0.0
    %1731 = vmatpush2.msra.mxu0 0.0
    %1732 = vmatprep.mubr.f32.mxu0 0.0
    %1733 = vmatmul.mubr.f32.gmra.mxu0 %v1663
    %v1734 = vpop.f32.mrf.mxu0
    %v1735 = vadd.f32 0.0, %v1734
    %v1736 = vpop.f32.mrf.mxu0
    %1737 = vmatprep.mubr.f32.mxu0 0.0
    %1738 = vmatmul.mubr.f32.gmra.mxu0 %v1666
    %v1739 = vpop.f32.mrf.mxu0
    %v1740 = vadd.f32 0.0, %v1739
    %v1741 = vpop.f32.mrf.mxu0
    %1742 = vdwg.mxu0
    %1743 = vrot.lane.b32.xlu0 %v1533, 120
    %v1744 = vpop.permute.xlu0 %1743
    %1745 = vrot.lane.b32.xlu0 %v1538, 120
    %v1746 = vpop.permute.xlu0 %1745
    %1747 = vrot.lane.b32.xlu0 %v1533, 88
    %v1748 = vpop.permute.xlu0 %1747
    %1749 = vrot.lane.b32.xlu0 %v1538, 88
    %v1750 = vpop.permute.xlu0 %1749
    %v1751 = vsel %vm219, %v1744, 0
    %v1753 = vsel %vm219, %v1746, 0
    %v1755 = vsel %vm219, %v1748, 0
    %v1757 = vsel %vm219, %v1750, 0
    %1759 = vmatprep.subr.mxu0 0.0
    %1760 = vmatpush1.xpose.msra.mxu0 0.0
    %1761 = vmatprep.subr.mxu0 0.0
    %1762 = vmatpush1.xpose.msra.mxu0 0.0
    %1763 = vmatprep.subr.mxu0 0.0
    %1764 = vmatpush1.xpose.msra.mxu0 0.0
    %1765 = vmatprep.subr.mxu0 0.0
    %1766 = vmatpush1.xpose.msra.mxu0 0.0
    %1767 = vmatprep.subr.mxu0 0.0
    %1768 = vmatpush1.xpose.msra.mxu0 0.0
    %1769 = vmatprep.subr.mxu0 0.0
    %1770 = vmatpush1.xpose.msra.mxu0 0.0
    %1771 = vmatprep.subr.mxu0 0.0
    %1772 = vmatpush1.xpose.msra.mxu0 0.0
    %1773 = vmatprep.subr.mxu0 0.0
    %1774 = vmatpush1.xpose.msra.mxu0 0.0
    %1775 = vmatprep.subr.mxu0 0.0
    %1776 = vmatpush1.xpose.msra.mxu0 0.0
    %1777 = vmatprep.subr.mxu0 0.0
    %1778 = vmatpush1.xpose.msra.mxu0 0.0
    %1779 = vmatprep.subr.mxu0 0.0
    %1780 = vmatpush1.xpose.msra.mxu0 0.0
    %1781 = vmatprep.subr.mxu0 0.0
    %1782 = vmatpush1.xpose.msra.mxu0 0.0
    %1783 = vmatprep.subr.mxu0 0.0
    %1784 = vmatpush1.xpose.msra.mxu0 0.0
    %1785 = vmatprep.subr.mxu0 0.0
    %1786 = vmatpush1.xpose.msra.mxu0 0.0
    %1787 = vmatprep.subr.mxu0 0.0
    %1788 = vmatpush1.xpose.msra.mxu0 %v1757
    %1789 = vmatprep.subr.mxu0 0.0
    %1790 = vmatpush1.xpose.msra.mxu0 %v1755
    %1791 = vmatprep.subr.mxu0 0.0
    %1792 = vmatpush2.xpose.msra.mxu0 0.0
    %1793 = vmatprep.subr.mxu0 0.0
    %1794 = vmatpush2.xpose.msra.mxu0 0.0
    %1795 = vmatprep.subr.mxu0 0.0
    %1796 = vmatpush2.xpose.msra.mxu0 0.0
    %1797 = vmatprep.subr.mxu0 0.0
    %1798 = vmatpush2.xpose.msra.mxu0 0.0
    %1799 = vmatprep.subr.mxu0 0.0
    %1800 = vmatpush2.xpose.msra.mxu0 0.0
    %1801 = vmatprep.subr.mxu0 0.0
    %1802 = vmatpush2.xpose.msra.mxu0 0.0
    %1803 = vmatprep.subr.mxu0 0.0
    %1804 = vmatpush2.xpose.msra.mxu0 0.0
    %1805 = vmatprep.subr.mxu0 0.0
    %1806 = vmatpush2.xpose.msra.mxu0 0.0
    %1807 = vmatprep.subr.mxu0 0.0
    %1808 = vmatpush2.xpose.msra.mxu0 0.0
    %1809 = vmatprep.subr.mxu0 0.0
    %1810 = vmatpush2.xpose.msra.mxu0 0.0
    %1811 = vmatprep.subr.mxu0 0.0
    %1812 = vmatpush2.xpose.msra.mxu0 0.0
    %1813 = vmatprep.subr.mxu0 0.0
    %1814 = vmatpush2.xpose.msra.mxu0 0.0
    %1815 = vmatprep.subr.mxu0 0.0
    %1816 = vmatpush2.xpose.msra.mxu0 0.0
    %1817 = vmatprep.subr.mxu0 0.0
    %1818 = vmatpush2.xpose.msra.mxu0 0.0
    %1819 = vmatprep.subr.mxu0 0.0
    %1820 = vmatpush2.xpose.msra.mxu0 0.0
    %1821 = vmatprep.subr.mxu0 0.0
    %1822 = vmatpush2.xpose.msra.mxu0 0.0
    %1823 = vmatprep.mubr.f32.mxu0 0.0
    %1824 = vmatmul.mubr.f32.gmra.mxu0 %v1751
    %v1825 = vpop.f32.mrf.mxu0
    %v1826 = vadd.f32 0.0, %v1825
    %v1827 = vpop.f32.mrf.mxu0
    %1828 = vmatprep.mubr.f32.mxu0 0.0
    %1829 = vmatmul.mubr.f32.gmra.mxu0 %v1753
    %v1830 = vpop.f32.mrf.mxu0
    %v1831 = vadd.f32 0.0, %v1830
    %v1832 = vpop.f32.mrf.mxu0
    %1833 = vdwg.mxu0
    %v1834 = vmul.f32 %v1826, 0.35355338
    %v1835 = vmul.f32 %v1831, 0.35355338
    %v1836 = vadd.f32 %v1834, %v56
    %v1837 = vadd.f32 %v1835, %v57
    %v1838 = vsel %vm307, %v1836, -inf
    %1839 = vmax.xlane.f32.xlu0 %v1838
    %v1840 = vpop.xlane.xlu0 %1839
    %v1841 = vsel %vm307, %v1837, -inf
    %1842 = vmax.xlane.f32.xlu0 %v1841
    %v1843 = vpop.xlane.xlu0 %1842
    %v1844 = vsub.f32 %v1836, %v1840
    %v1845 = vsub.f32 %v1837, %v1843
    %v1846 = vmul.f32 %v1844, 1.442695
    %v1847 = vpow.pop %v1846
    %v1848 = vmul.f32 %v1845, 1.442695
    %v1849 = vpow.pop %v1848
    %v1850 = vsel %vm307, %v1847, 0.0
    %1851 = vadd.xlane.f32.xlu0 %v1850
    %v1852 = vpop.xlane.xlu0 %1851
    %v1853 = vsel %vm307, %v1849, 0.0
    %1854 = vadd.xlane.f32.xlu0 %v1853
    %v1855 = vpop.xlane.xlu0 %1854
    %v1856 = vrcp.pop %v1852
    %v1857 = vrcp.pop %v1855
    %v1858 = vmul.f32 %v1847, %v1856
    %v1859 = vmul.f32 %v1849, %v1857
    %1860 = vrot.lane.b32.xlu0 %v1533, 56
    %v1861 = vpop.permute.xlu0 %1860
    %1862 = vrot.lane.b32.xlu0 %v1538, 56
    %v1863 = vpop.permute.xlu0 %1862
    %v1867 = vsel %vm307, %v1858, 0
    %v1870 = vsel %vm307, %v1859, 0
    %1872 = vmatprep.subr.mxu0 0.0
    %1873 = vmatpush1.msra.mxu0 0.0
    %1874 = vmatprep.subr.mxu0 0.0
    %1875 = vmatpush1.msra.mxu0 0.0
    %1876 = vmatprep.subr.mxu0 0.0
    %1877 = vmatpush1.msra.mxu0 0.0
    %1878 = vmatprep.subr.mxu0 0.0
    %1879 = vmatpush1.msra.mxu0 0.0
    %1880 = vmatprep.subr.mxu0 0.0
    %1881 = vmatpush1.msra.mxu0 0.0
    %1882 = vmatprep.subr.mxu0 0.0
    %1883 = vmatpush1.msra.mxu0 0.0
    %1884 = vmatprep.subr.mxu0 0.0
    %1885 = vmatpush1.msra.mxu0 0.0
    %1886 = vmatprep.subr.mxu0 0.0
    %1887 = vmatpush1.msra.mxu0 0.0
    %1888 = vmatprep.subr.mxu0 0.0
    %1889 = vmatpush1.msra.mxu0 0.0
    %1890 = vmatprep.subr.mxu0 0.0
    %1891 = vmatpush1.msra.mxu0 0.0
    %1892 = vmatprep.subr.mxu0 0.0
    %1893 = vmatpush1.msra.mxu0 0.0
    %1894 = vmatprep.subr.mxu0 0.0
    %1895 = vmatpush1.msra.mxu0 0.0
    %1896 = vmatprep.subr.mxu0 0.0
    %1897 = vmatpush1.msra.mxu0 0.0
    %1898 = vmatprep.subr.mxu0 0.0
    %1899 = vmatpush1.msra.mxu0 0.0
    %1900 = vmatprep.subr.mxu0 0.0
    %1901 = vmatpush1.msra.mxu0 %v1863
    %1902 = vmatprep.subr.mxu0 0.0
    %1903 = vmatpush1.msra.mxu0 %v1861
    %1904 = vmatprep.subr.mxu0 0.0
    %1905 = vmatpush2.msra.mxu0 0.0
    %1906 = vmatprep.subr.mxu0 0.0
    %1907 = vmatpush2.msra.mxu0 0.0
    %1908 = vmatprep.subr.mxu0 0.0
    %1909 = vmatpush2.msra.mxu0 0.0
    %1910 = vmatprep.subr.mxu0 0.0
    %1911 = vmatpush2.msra.mxu0 0.0
    %1912 = vmatprep.subr.mxu0 0.0
    %1913 = vmatpush2.msra.mxu0 0.0
    %1914 = vmatprep.subr.mxu0 0.0
    %1915 = vmatpush2.msra.mxu0 0.0
    %1916 = vmatprep.subr.mxu0 0.0
    %1917 = vmatpush2.msra.mxu0 0.0
    %1918 = vmatprep.subr.mxu0 0.0
    %1919 = vmatpush2.msra.mxu0 0.0
    %1920 = vmatprep.subr.mxu0 0.0
    %1921 = vmatpush2.msra.mxu0 0.0
    %1922 = vmatprep.subr.mxu0 0.0
    %1923 = vmatpush2.msra.mxu0 0.0
    %1924 = vmatprep.subr.mxu0 0.0
    %1925 = vmatpush2.msra.mxu0 0.0
    %1926 = vmatprep.subr.mxu0 0.0
    %1927 = vmatpush2.msra.mxu0 0.0
    %1928 = vmatprep.subr.mxu0 0.0
    %1929 = vmatpush2.msra.mxu0 0.0
    %1930 = vmatprep.subr.mxu0 0.0
    %1931 = vmatpush2.msra.mxu0 0.0
    %1932 = vmatprep.subr.mxu0 0.0
    %1933 = vmatpush2.msra.mxu0 0.0
    %1934 = vmatprep.subr.mxu0 0.0
    %1935 = vmatpush2.msra.mxu0 0.0
    %1936 = vmatprep.mubr.f32.mxu0 0.0
    %1937 = vmatmul.mubr.f32.gmra.mxu0 %v1867
    %v1938 = vpop.f32.mrf.mxu0
    %v1939 = vadd.f32 0.0, %v1938
    %v1940 = vpop.f32.mrf.mxu0
    %1941 = vmatprep.mubr.f32.mxu0 0.0
    %1942 = vmatmul.mubr.f32.gmra.mxu0 %v1870
    %v1943 = vpop.f32.mrf.mxu0
    %v1944 = vadd.f32 0.0, %v1943
    %v1945 = vpop.f32.mrf.mxu0
    %1946 = vdwg.mxu0
    %1947 = vrot.lane.b32.xlu0 %v1533, 112
    %v1948 = vpop.permute.xlu0 %1947
    %1949 = vrot.lane.b32.xlu0 %v1538, 112
    %v1950 = vpop.permute.xlu0 %1949
    %1951 = vrot.lane.b32.xlu0 %v1533, 80
    %v1952 = vpop.permute.xlu0 %1951
    %1953 = vrot.lane.b32.xlu0 %v1538, 80
    %v1954 = vpop.permute.xlu0 %1953
    %v1955 = vsel %vm219, %v1948, 0
    %v1957 = vsel %vm219, %v1950, 0
    %v1959 = vsel %vm219, %v1952, 0
    %v1961 = vsel %vm219, %v1954, 0
    %1963 = vmatprep.subr.mxu0 0.0
    %1964 = vmatpush1.xpose.msra.mxu0 0.0
    %1965 = vmatprep.subr.mxu0 0.0
    %1966 = vmatpush1.xpose.msra.mxu0 0.0
    %1967 = vmatprep.subr.mxu0 0.0
    %1968 = vmatpush1.xpose.msra.mxu0 0.0
    %1969 = vmatprep.subr.mxu0 0.0
    %1970 = vmatpush1.xpose.msra.mxu0 0.0
    %1971 = vmatprep.subr.mxu0 0.0
    %1972 = vmatpush1.xpose.msra.mxu0 0.0
    %1973 = vmatprep.subr.mxu0 0.0
    %1974 = vmatpush1.xpose.msra.mxu0 0.0
    %1975 = vmatprep.subr.mxu0 0.0
    %1976 = vmatpush1.xpose.msra.mxu0 0.0
    %1977 = vmatprep.subr.mxu0 0.0
    %1978 = vmatpush1.xpose.msra.mxu0 0.0
    %1979 = vmatprep.subr.mxu0 0.0
    %1980 = vmatpush1.xpose.msra.mxu0 0.0
    %1981 = vmatprep.subr.mxu0 0.0
    %1982 = vmatpush1.xpose.msra.mxu0 0.0
    %1983 = vmatprep.subr.mxu0 0.0
    %1984 = vmatpush1.xpose.msra.mxu0 0.0
    %1985 = vmatprep.subr.mxu0 0.0
    %1986 = vmatpush1.xpose.msra.mxu0 0.0
    %1987 = vmatprep.subr.mxu0 0.0
    %1988 = vmatpush1.xpose.msra.mxu0 0.0
    %1989 = vmatprep.subr.mxu0 0.0
    %1990 = vmatpush1.xpose.msra.mxu0 0.0
    %1991 = vmatprep.subr.mxu0 0.0
    %1992 = vmatpush1.xpose.msra.mxu0 %v1961
    %1993 = vmatprep.subr.mxu0 0.0
    %1994 = vmatpush1.xpose.msra.mxu0 %v1959
    %1995 = vmatprep.subr.mxu0 0.0
    %1996 = vmatpush2.xpose.msra.mxu0 0.0
    %1997 = vmatprep.subr.mxu0 0.0
    %1998 = vmatpush2.xpose.msra.mxu0 0.0
    %1999 = vmatprep.subr.mxu0 0.0
    %2000 = vmatpush2.xpose.msra.mxu0 0.0
    %2001 = vmatprep.subr.mxu0 0.0
    %2002 = vmatpush2.xpose.msra.mxu0 0.0
    %2003 = vmatprep.subr.mxu0 0.0
    %2004 = vmatpush2.xpose.msra.mxu0 0.0
    %2005 = vmatprep.subr.mxu0 0.0
    %2006 = vmatpush2.xpose.msra.mxu0 0.0
    %2007 = vmatprep.subr.mxu0 0.0
    %2008 = vmatpush2.xpose.msra.mxu0 0.0
    %2009 = vmatprep.subr.mxu0 0.0
    %2010 = vmatpush2.xpose.msra.mxu0 0.0
    %2011 = vmatprep.subr.mxu0 0.0
    %2012 = vmatpush2.xpose.msra.mxu0 0.0
    %2013 = vmatprep.subr.mxu0 0.0
    %2014 = vmatpush2.xpose.msra.mxu0 0.0
    %2015 = vmatprep.subr.mxu0 0.0
    %2016 = vmatpush2.xpose.msra.mxu0 0.0
    %2017 = vmatprep.subr.mxu0 0.0
    %2018 = vmatpush2.xpose.msra.mxu0 0.0
    %2019 = vmatprep.subr.mxu0 0.0
    %2020 = vmatpush2.xpose.msra.mxu0 0.0
    %2021 = vmatprep.subr.mxu0 0.0
    %2022 = vmatpush2.xpose.msra.mxu0 0.0
    %2023 = vmatprep.subr.mxu0 0.0
    %2024 = vmatpush2.xpose.msra.mxu0 0.0
    %2025 = vmatprep.subr.mxu0 0.0
    %2026 = vmatpush2.xpose.msra.mxu0 0.0
    %2027 = vmatprep.mubr.f32.mxu0 0.0
    %2028 = vmatmul.mubr.f32.gmra.mxu0 %v1955
    %v2029 = vpop.f32.mrf.mxu0
    %v2030 = vadd.f32 0.0, %v2029
    %v2031 = vpop.f32.mrf.mxu0
    %2032 = vmatprep.mubr.f32.mxu0 0.0
    %2033 = vmatmul.mubr.f32.gmra.mxu0 %v1957
    %v2034 = vpop.f32.mrf.mxu0
    %v2035 = vadd.f32 0.0, %v2034
    %v2036 = vpop.f32.mrf.mxu0
    %2037 = vdwg.mxu0
    %v2038 = vmul.f32 %v2030, 0.35355338
    %v2039 = vmul.f32 %v2035, 0.35355338
    %v2040 = vadd.f32 %v2038, %v56
    %v2041 = vadd.f32 %v2039, %v57
    %v2042 = vsel %vm307, %v2040, -inf
    %2043 = vmax.xlane.f32.xlu0 %v2042
    %v2044 = vpop.xlane.xlu0 %2043
    %v2045 = vsel %vm307, %v2041, -inf
    %2046 = vmax.xlane.f32.xlu0 %v2045
    %v2047 = vpop.xlane.xlu0 %2046
    %v2048 = vsub.f32 %v2040, %v2044
    %v2049 = vsub.f32 %v2041, %v2047
    %v2050 = vmul.f32 %v2048, 1.442695
    %v2051 = vpow.pop %v2050
    %v2052 = vmul.f32 %v2049, 1.442695
    %v2053 = vpow.pop %v2052
    %v2054 = vsel %vm307, %v2051, 0.0
    %2055 = vadd.xlane.f32.xlu0 %v2054
    %v2056 = vpop.xlane.xlu0 %2055
    %v2057 = vsel %vm307, %v2053, 0.0
    %2058 = vadd.xlane.f32.xlu0 %v2057
    %v2059 = vpop.xlane.xlu0 %2058
    %v2060 = vrcp.pop %v2056
    %v2061 = vrcp.pop %v2059
    %v2062 = vmul.f32 %v2051, %v2060
    %v2063 = vmul.f32 %v2053, %v2061
    %2064 = vrot.lane.b32.xlu0 %v1533, 48
    %v2065 = vpop.permute.xlu0 %2064
    %2066 = vrot.lane.b32.xlu0 %v1538, 48
    %v2067 = vpop.permute.xlu0 %2066
    %v2071 = vsel %vm307, %v2062, 0
    %v2074 = vsel %vm307, %v2063, 0
    %2076 = vmatprep.subr.mxu0 0.0
    %2077 = vmatpush1.msra.mxu0 0.0
    %2078 = vmatprep.subr.mxu0 0.0
    %2079 = vmatpush1.msra.mxu0 0.0
    %2080 = vmatprep.subr.mxu0 0.0
    %2081 = vmatpush1.msra.mxu0 0.0
    %2082 = vmatprep.subr.mxu0 0.0
    %2083 = vmatpush1.msra.mxu0 0.0
    %2084 = vmatprep.subr.mxu0 0.0
    %2085 = vmatpush1.msra.mxu0 0.0
    %2086 = vmatprep.subr.mxu0 0.0
    %2087 = vmatpush1.msra.mxu0 0.0
    %2088 = vmatprep.subr.mxu0 0.0
    %2089 = vmatpush1.msra.mxu0 0.0
    %2090 = vmatprep.subr.mxu0 0.0
    %2091 = vmatpush1.msra.mxu0 0.0
    %2092 = vmatprep.subr.mxu0 0.0
    %2093 = vmatpush1.msra.mxu0 0.0
    %2094 = vmatprep.subr.mxu0 0.0
    %2095 = vmatpush1.msra.mxu0 0.0
    %2096 = vmatprep.subr.mxu0 0.0
    %2097 = vmatpush1.msra.mxu0 0.0
    %2098 = vmatprep.subr.mxu0 0.0
    %2099 = vmatpush1.msra.mxu0 0.0
    %2100 = vmatprep.subr.mxu0 0.0
    %2101 = vmatpush1.msra.mxu0 0.0
    %2102 = vmatprep.subr.mxu0 0.0
    %2103 = vmatpush1.msra.mxu0 0.0
    %2104 = vmatprep.subr.mxu0 0.0
    %2105 = vmatpush1.msra.mxu0 %v2067
    %2106 = vmatprep.subr.mxu0 0.0
    %2107 = vmatpush1.msra.mxu0 %v2065
    %2108 = vmatprep.subr.mxu0 0.0
    %2109 = vmatpush2.msra.mxu0 0.0
    %2110 = vmatprep.subr.mxu0 0.0
    %2111 = vmatpush2.msra.mxu0 0.0
    %2112 = vmatprep.subr.mxu0 0.0
    %2113 = vmatpush2.msra.mxu0 0.0
    %2114 = vmatprep.subr.mxu0 0.0
    %2115 = vmatpush2.msra.mxu0 0.0
    %2116 = vmatprep.subr.mxu0 0.0
    %2117 = vmatpush2.msra.mxu0 0.0
    %2118 = vmatprep.subr.mxu0 0.0
    %2119 = vmatpush2.msra.mxu0 0.0
    %2120 = vmatprep.subr.mxu0 0.0
    %2121 = vmatpush2.msra.mxu0 0.0
    %2122 = vmatprep.subr.mxu0 0.0
    %2123 = vmatpush2.msra.mxu0 0.0
    %2124 = vmatprep.subr.mxu0 0.0
    %2125 = vmatpush2.msra.mxu0 0.0
    %2126 = vmatprep.subr.mxu0 0.0
    %2127 = vmatpush2.msra.mxu0 0.0
    %2128 = vmatprep.subr.mxu0 0.0
    %2129 = vmatpush2.msra.mxu0 0.0
    %2130 = vmatprep.subr.mxu0 0.0
    %2131 = vmatpush2.msra.mxu0 0.0
    %2132 = vmatprep.subr.mxu0 0.0
    %2133 = vmatpush2.msra.mxu0 0.0
    %2134 = vmatprep.subr.mxu0 0.0
    %2135 = vmatpush2.msra.mxu0 0.0
    %2136 = vmatprep.subr.mxu0 0.0
    %2137 = vmatpush2.msra.mxu0 0.0
    %2138 = vmatprep.subr.mxu0 0.0
    %2139 = vmatpush2.msra.mxu0 0.0
    %2140 = vmatprep.mubr.f32.mxu0 0.0
    %2141 = vmatmul.mubr.f32.gmra.mxu0 %v2071
    %v2142 = vpop.f32.mrf.mxu0
    %v2143 = vadd.f32 0.0, %v2142
    %v2144 = vpop.f32.mrf.mxu0
    %2145 = vmatprep.mubr.f32.mxu0 0.0
    %2146 = vmatmul.mubr.f32.gmra.mxu0 %v2074
    %v2147 = vpop.f32.mrf.mxu0
    %v2148 = vadd.f32 0.0, %v2147
    %v2149 = vpop.f32.mrf.mxu0
    %2150 = vdwg.mxu0
    %2151 = vrot.lane.b32.xlu0 %v1533, 104
    %v2152 = vpop.permute.xlu0 %2151
    %2153 = vrot.lane.b32.xlu0 %v1538, 104
    %v2154 = vpop.permute.xlu0 %2153
    %2155 = vrot.lane.b32.xlu0 %v1533, 72
    %v2156 = vpop.permute.xlu0 %2155
    %2157 = vrot.lane.b32.xlu0 %v1538, 72
    %v2158 = vpop.permute.xlu0 %2157
    %v2159 = vsel %vm219, %v2152, 0
    %v2161 = vsel %vm219, %v2154, 0
    %v2163 = vsel %vm219, %v2156, 0
    %v2165 = vsel %vm219, %v2158, 0
    %2167 = vmatprep.subr.mxu0 0.0
    %2168 = vmatpush1.xpose.msra.mxu0 0.0
    %2169 = vmatprep.subr.mxu0 0.0
    %2170 = vmatpush1.xpose.msra.mxu0 0.0
    %2171 = vmatprep.subr.mxu0 0.0
    %2172 = vmatpush1.xpose.msra.mxu0 0.0
    %2173 = vmatprep.subr.mxu0 0.0
    %2174 = vmatpush1.xpose.msra.mxu0 0.0
    %2175 = vmatprep.subr.mxu0 0.0
    %2176 = vmatpush1.xpose.msra.mxu0 0.0
    %2177 = vmatprep.subr.mxu0 0.0
    %2178 = vmatpush1.xpose.msra.mxu0 0.0
    %2179 = vmatprep.subr.mxu0 0.0
    %2180 = vmatpush1.xpose.msra.mxu0 0.0
    %2181 = vmatprep.subr.mxu0 0.0
    %2182 = vmatpush1.xpose.msra.mxu0 0.0
    %2183 = vmatprep.subr.mxu0 0.0
    %2184 = vmatpush1.xpose.msra.mxu0 0.0
    %2185 = vmatprep.subr.mxu0 0.0
    %2186 = vmatpush1.xpose.msra.mxu0 0.0
    %2187 = vmatprep.subr.mxu0 0.0
    %2188 = vmatpush1.xpose.msra.mxu0 0.0
    %2189 = vmatprep.subr.mxu0 0.0
    %2190 = vmatpush1.xpose.msra.mxu0 0.0
    %2191 = vmatprep.subr.mxu0 0.0
    %2192 = vmatpush1.xpose.msra.mxu0 0.0
    %2193 = vmatprep.subr.mxu0 0.0
    %2194 = vmatpush1.xpose.msra.mxu0 0.0
    %2195 = vmatprep.subr.mxu0 0.0
    %2196 = vmatpush1.xpose.msra.mxu0 %v2165
    %2197 = vmatprep.subr.mxu0 0.0
    %2198 = vmatpush1.xpose.msra.mxu0 %v2163
    %2199 = vmatprep.subr.mxu0 0.0
    %2200 = vmatpush2.xpose.msra.mxu0 0.0
    %2201 = vmatprep.subr.mxu0 0.0
    %2202 = vmatpush2.xpose.msra.mxu0 0.0
    %2203 = vmatprep.subr.mxu0 0.0
    %2204 = vmatpush2.xpose.msra.mxu0 0.0
    %2205 = vmatprep.subr.mxu0 0.0
    %2206 = vmatpush2.xpose.msra.mxu0 0.0
    %2207 = vmatprep.subr.mxu0 0.0
    %2208 = vmatpush2.xpose.msra.mxu0 0.0
    %2209 = vmatprep.subr.mxu0 0.0
    %2210 = vmatpush2.xpose.msra.mxu0 0.0
    %2211 = vmatprep.subr.mxu0 0.0
    %2212 = vmatpush2.xpose.msra.mxu0 0.0
    %2213 = vmatprep.subr.mxu0 0.0
    %2214 = vmatpush2.xpose.msra.mxu0 0.0
    %2215 = vmatprep.subr.mxu0 0.0
    %2216 = vmatpush2.xpose.msra.mxu0 0.0
    %2217 = vmatprep.subr.mxu0 0.0
    %2218 = vmatpush2.xpose.msra.mxu0 0.0
    %2219 = vmatprep.subr.mxu0 0.0
    %2220 = vmatpush2.xpose.msra.mxu0 0.0
    %2221 = vmatprep.subr.mxu0 0.0
    %2222 = vmatpush2.xpose.msra.mxu0 0.0
    %2223 = vmatprep.subr.mxu0 0.0
    %2224 = vmatpush2.xpose.msra.mxu0 0.0
    %2225 = vmatprep.subr.mxu0 0.0
    %2226 = vmatpush2.xpose.msra.mxu0 0.0
    %2227 = vmatprep.subr.mxu0 0.0
    %2228 = vmatpush2.xpose.msra.mxu0 0.0
    %2229 = vmatprep.subr.mxu0 0.0
    %2230 = vmatpush2.xpose.msra.mxu0 0.0
    %2231 = vmatprep.mubr.f32.mxu0 0.0
    %2232 = vmatmul.mubr.f32.gmra.mxu0 %v2159
    %v2233 = vpop.f32.mrf.mxu0
    %v2234 = vadd.f32 0.0, %v2233
    %v2235 = vpop.f32.mrf.mxu0
    %2236 = vmatprep.mubr.f32.mxu0 0.0
    %2237 = vmatmul.mubr.f32.gmra.mxu0 %v2161
    %v2238 = vpop.f32.mrf.mxu0
    %v2239 = vadd.f32 0.0, %v2238
    %v2240 = vpop.f32.mrf.mxu0
    %2241 = vdwg.mxu0
    %v2242 = vmul.f32 %v2234, 0.35355338
    %v2243 = vmul.f32 %v2239, 0.35355338
    %v2244 = vadd.f32 %v2242, %v56
    %v2245 = vadd.f32 %v2243, %v57
    %v2246 = vsel %vm307, %v2244, -inf
    %2247 = vmax.xlane.f32.xlu0 %v2246
    %v2248 = vpop.xlane.xlu0 %2247
    %v2249 = vsel %vm307, %v2245, -inf
    %2250 = vmax.xlane.f32.xlu0 %v2249
    %v2251 = vpop.xlane.xlu0 %2250
    %v2252 = vsub.f32 %v2244, %v2248
    %v2253 = vsub.f32 %v2245, %v2251
    %v2254 = vmul.f32 %v2252, 1.442695
    %v2255 = vpow.pop %v2254
    %v2256 = vmul.f32 %v2253, 1.442695
    %v2257 = vpow.pop %v2256
    %v2258 = vsel %vm307, %v2255, 0.0
    %2259 = vadd.xlane.f32.xlu0 %v2258
    %v2260 = vpop.xlane.xlu0 %2259
    %v2261 = vsel %vm307, %v2257, 0.0
    %2262 = vadd.xlane.f32.xlu0 %v2261
    %v2263 = vpop.xlane.xlu0 %2262
    %v2264 = vrcp.pop %v2260
    %v2265 = vrcp.pop %v2263
    %v2266 = vmul.f32 %v2255, %v2264
    %v2267 = vmul.f32 %v2257, %v2265
    %2268 = vrot.lane.b32.xlu0 %v1533, 40
    %v2269 = vpop.permute.xlu0 %2268
    %2270 = vrot.lane.b32.xlu0 %v1538, 40
    %v2271 = vpop.permute.xlu0 %2270
    %v2275 = vsel %vm307, %v2266, 0
    %v2278 = vsel %vm307, %v2267, 0
    %2280 = vmatprep.subr.mxu0 0.0
    %2281 = vmatpush1.msra.mxu0 0.0
    %2282 = vmatprep.subr.mxu0 0.0
    %2283 = vmatpush1.msra.mxu0 0.0
    %2284 = vmatprep.subr.mxu0 0.0
    %2285 = vmatpush1.msra.mxu0 0.0
    %2286 = vmatprep.subr.mxu0 0.0
    %2287 = vmatpush1.msra.mxu0 0.0
    %2288 = vmatprep.subr.mxu0 0.0
    %2289 = vmatpush1.msra.mxu0 0.0
    %2290 = vmatprep.subr.mxu0 0.0
    %2291 = vmatpush1.msra.mxu0 0.0
    %2292 = vmatprep.subr.mxu0 0.0
    %2293 = vmatpush1.msra.mxu0 0.0
    %2294 = vmatprep.subr.mxu0 0.0
    %2295 = vmatpush1.msra.mxu0 0.0
    %2296 = vmatprep.subr.mxu0 0.0
    %2297 = vmatpush1.msra.mxu0 0.0
    %2298 = vmatprep.subr.mxu0 0.0
    %2299 = vmatpush1.msra.mxu0 0.0
    %2300 = vmatprep.subr.mxu0 0.0
    %2301 = vmatpush1.msra.mxu0 0.0
    %2302 = vmatprep.subr.mxu0 0.0
    %2303 = vmatpush1.msra.mxu0 0.0
    %2304 = vmatprep.subr.mxu0 0.0
    %2305 = vmatpush1.msra.mxu0 0.0
    %2306 = vmatprep.subr.mxu0 0.0
    %2307 = vmatpush1.msra.mxu0 0.0
    %2308 = vmatprep.subr.mxu0 0.0
    %2309 = vmatpush1.msra.mxu0 %v2271
    %2310 = vmatprep.subr.mxu0 0.0
    %2311 = vmatpush1.msra.mxu0 %v2269
    %2312 = vmatprep.subr.mxu0 0.0
    %2313 = vmatpush2.msra.mxu0 0.0
    %2314 = vmatprep.subr.mxu0 0.0
    %2315 = vmatpush2.msra.mxu0 0.0
    %2316 = vmatprep.subr.mxu0 0.0
    %2317 = vmatpush2.msra.mxu0 0.0
    %2318 = vmatprep.subr.mxu0 0.0
    %2319 = vmatpush2.msra.mxu0 0.0
    %2320 = vmatprep.subr.mxu0 0.0
    %2321 = vmatpush2.msra.mxu0 0.0
    %2322 = vmatprep.subr.mxu0 0.0
    %2323 = vmatpush2.msra.mxu0 0.0
    %2324 = vmatprep.subr.mxu0 0.0
    %2325 = vmatpush2.msra.mxu0 0.0
    %2326 = vmatprep.subr.mxu0 0.0
    %2327 = vmatpush2.msra.mxu0 0.0
    %2328 = vmatprep.subr.mxu0 0.0
    %2329 = vmatpush2.msra.mxu0 0.0
    %2330 = vmatprep.subr.mxu0 0.0
    %2331 = vmatpush2.msra.mxu0 0.0
    %2332 = vmatprep.subr.mxu0 0.0
    %2333 = vmatpush2.msra.mxu0 0.0
    %2334 = vmatprep.subr.mxu0 0.0
    %2335 = vmatpush2.msra.mxu0 0.0
    %2336 = vmatprep.subr.mxu0 0.0
    %2337 = vmatpush2.msra.mxu0 0.0
    %2338 = vmatprep.subr.mxu0 0.0
    %2339 = vmatpush2.msra.mxu0 0.0
    %2340 = vmatprep.subr.mxu0 0.0
    %2341 = vmatpush2.msra.mxu0 0.0
    %2342 = vmatprep.subr.mxu0 0.0
    %2343 = vmatpush2.msra.mxu0 0.0
    %2344 = vmatprep.mubr.f32.mxu0 0.0
    %2345 = vmatmul.mubr.f32.gmra.mxu0 %v2275
    %v2346 = vpop.f32.mrf.mxu0
    %v2347 = vadd.f32 0.0, %v2346
    %v2348 = vpop.f32.mrf.mxu0
    %2349 = vmatprep.mubr.f32.mxu0 0.0
    %2350 = vmatmul.mubr.f32.gmra.mxu0 %v2278
    %v2351 = vpop.f32.mrf.mxu0
    %v2352 = vadd.f32 0.0, %v2351
    %v2353 = vpop.f32.mrf.mxu0
    %2354 = vdwg.mxu0
    %2357 = vrot.lane.b32.xlu0 %v1939, 8
    %v2358 = vpop.permute.xlu0 %2357
    %2359 = vrot.lane.b32.xlu0 %v1944, 8
    %v2360 = vpop.permute.xlu0 %2359
    %2365 = vrot.lane.b32.xlu0 %v2143, 16
    %v2366 = vpop.permute.xlu0 %2365
    %2367 = vrot.lane.b32.xlu0 %v2148, 16
    %v2368 = vpop.permute.xlu0 %2367
    %2373 = vrot.lane.b32.xlu0 %v2347, 24
    %v2374 = vpop.permute.xlu0 %2373
    %2375 = vrot.lane.b32.xlu0 %v2352, 24
    %v2376 = vpop.permute.xlu0 %2375
    %v2379 = vsel %vm219, %v1735, %v2358
    %v2380 = vsel %vm219, %v1740, %v2360
    %v2381 = vsel %vm307, %v2379, %v2366
    %v2382 = vsel %vm307, %v2380, %v2368
    %v2383 = vsel %vm1057, %v2381, %v2374
    %v2384 = vsel %vm1057, %v2382, %v2376
    %v2386 = vlaneseq
    %v2387 = vshrl.u32 %v2386, 7
    %v2388 = vsub.s32 0, %v2387
    %v2389 = vrot.slane %v1433, %v2388
    %v2392 = vsel %vm61, %v2383, 0
    %v2395 = vsel %vm61, %v2384, 0
    %2397 = vmatprep.subr.mxu0 0.0
    %2398 = vmatpush1.msra.mxu0 0.0
    %2399 = vmatprep.subr.mxu0 0.0
    %2400 = vmatpush1.msra.mxu0 0.0
    %2401 = vmatprep.subr.mxu0 0.0
    %2402 = vmatpush1.msra.mxu0 0.0
    %2403 = vmatprep.subr.mxu0 0.0
    %2404 = vmatpush1.msra.mxu0 0.0
    %2405 = vmatprep.subr.mxu0 0.0
    %2406 = vmatpush1.msra.mxu0 0.0
    %2407 = vmatprep.subr.mxu0 0.0
    %2408 = vmatpush1.msra.mxu0 0.0
    %2409 = vmatprep.subr.mxu0 0.0
    %2410 = vmatpush1.msra.mxu0 0.0
    %2411 = vmatprep.subr.mxu0 0.0
    %2412 = vmatpush1.msra.mxu0 0.0
    %2413 = vmatprep.subr.mxu0 0.0
    %2414 = vmatpush1.msra.mxu0 0.0
    %2415 = vmatprep.subr.mxu0 0.0
    %2416 = vmatpush1.msra.mxu0 0.0
    %2417 = vmatprep.subr.mxu0 0.0
    %2418 = vmatpush1.msra.mxu0 0.0
    %2419 = vmatprep.subr.mxu0 0.0
    %2420 = vmatpush1.msra.mxu0 0.0
    %2421 = vmatprep.subr.mxu0 0.0
    %2422 = vmatpush1.msra.mxu0 %v1431
    %2423 = vmatprep.subr.mxu0 0.0
    %2424 = vmatpush1.msra.mxu0 %v1430
    %2425 = vmatprep.subr.mxu0 0.0
    %2426 = vmatpush1.msra.mxu0 %v1429
    %2427 = vmatprep.subr.mxu0 0.0
    %2428 = vmatpush1.msra.mxu0 %v1428
    %2429 = vmatprep.subr.mxu0 0.0
    %2430 = vmatpush2.msra.mxu0 0.0
    %2431 = vmatprep.subr.mxu0 0.0
    %2432 = vmatpush2.msra.mxu0 0.0
    %2433 = vmatprep.subr.mxu0 0.0
    %2434 = vmatpush2.msra.mxu0 0.0
    %2435 = vmatprep.subr.mxu0 0.0
    %2436 = vmatpush2.msra.mxu0 0.0
    %2437 = vmatprep.subr.mxu0 0.0
    %2438 = vmatpush2.msra.mxu0 0.0
    %2439 = vmatprep.subr.mxu0 0.0
    %2440 = vmatpush2.msra.mxu0 0.0
    %2441 = vmatprep.subr.mxu0 0.0
    %2442 = vmatpush2.msra.mxu0 0.0
    %2443 = vmatprep.subr.mxu0 0.0
    %2444 = vmatpush2.msra.mxu0 0.0
    %2445 = vmatprep.subr.mxu0 0.0
    %2446 = vmatpush2.msra.mxu0 0.0
    %2447 = vmatprep.subr.mxu0 0.0
    %2448 = vmatpush2.msra.mxu0 0.0
    %2449 = vmatprep.subr.mxu0 0.0
    %2450 = vmatpush2.msra.mxu0 0.0
    %2451 = vmatprep.subr.mxu0 0.0
    %2452 = vmatpush2.msra.mxu0 0.0
    %2453 = vmatprep.subr.mxu0 0.0
    %2454 = vmatpush2.msra.mxu0 0.0
    %2455 = vmatprep.subr.mxu0 0.0
    %2456 = vmatpush2.msra.mxu0 0.0
    %2457 = vmatprep.subr.mxu0 0.0
    %2458 = vmatpush2.msra.mxu0 0.0
    %2459 = vmatprep.subr.mxu0 0.0
    %2460 = vmatpush2.msra.mxu0 0.0
    %2461 = vmatprep.mubr.f32.mxu0 0.0
    %2462 = vmatmul.mubr.f32.gmra.mxu0 %v2392
    %v2463 = vpop.f32.mrf.mxu0
    %v2464 = vadd.f32 %v2389, %v2463
    %v2465 = vpop.f32.mrf.mxu0
    %2466 = vmatprep.mubr.f32.mxu0 0.0
    %2467 = vmatmul.mubr.f32.gmra.mxu0 %v2395
    %v2468 = vpop.f32.mrf.mxu0
    %v2469 = vadd.f32 %v2389, %v2468
    %v2470 = vpop.f32.mrf.mxu0
    %2471 = vdwg.mxu0
    %v2472 = vadd.f32 %v1418, %v2464
    %v2473 = vadd.f32 %v1419, %v2469
    %v2474 = vsel %vm61, %v2472, 0.0
    %2475 = vadd.xlane.f32.xlu0 %v2474
    %v2476 = vpop.xlane.xlu0 %2475
    %v2477 = vsel %vm61, %v2473, 0.0
    %2478 = vadd.xlane.f32.xlu0 %v2477
    %v2479 = vpop.xlane.xlu0 %2478
    %v2480 = vmul.f32 %v2476, %v68
    %v2481 = vmul.f32 %v2479, %v68
    %v2482 = vsub.f32 %v2472, %v2480
    %v2483 = vsub.f32 %v2473, %v2481
    %v2484 = vmul.f32 %v2482, %v2482
    %v2485 = vmul.f32 %v2483, %v2483
    %v2486 = vsel %vm61, %v2484, 0.0
    %2487 = vadd.xlane.f32.xlu0 %v2486
    %v2488 = vpop.xlane.xlu0 %2487
    %v2489 = vsel %vm61, %v2485, 0.0
    %2490 = vadd.xlane.f32.xlu0 %v2489
    %v2491 = vpop.xlane.xlu0 %2490
    %v2492 = vmul.f32 %v2488, %v68
    %v2493 = vmul.f32 %v2491, %v68
    %v2494 = vadd.f32 %v2492, 1e-12
    %v2495 = vadd.f32 %v2493, 1e-12
    %v2496 = vrsqrt.pop %v2494
    %v2497 = vrsqrt.pop %v2495
    %v2498 = vmul.f32 %v2482, %v2496
    %v2499 = vmul.f32 %v2483, %v2497
    %v2500 = vlaneseq
    %v2501 = vshrl.u32 %v2500, 7
    %v2502 = vsub.s32 0, %v2501
    %v2503 = vrot.slane %v1453, %v2502
    %v2504 = vmul.f32 %v2503, %v2498
    %v2505 = vmul.f32 %v2503, %v2499
    %v2506 = vlaneseq
    %v2507 = vshrl.u32 %v2506, 7
    %v2508 = vsub.s32 1, %v2507
    %v2509 = vrot.slane %v1453, %v2508
    %v2510 = vadd.f32 %v2504, %v2509
    %v2511 = vadd.f32 %v2505, %v2509
    %v2513 = vlaneseq
    %v2514 = vshrl.u32 %v2513, 7
    %v2515 = vsub.s32 0, %v2514
    %v2516 = vrot.slane %v1440, %v2515
    %v2519 = vsel %vm61, %v2510, 0
    %v2522 = vsel %vm61, %v2511, 0
    %2524 = vmatprep.subr.mxu0 0.0
    %2525 = vmatpush1.msra.mxu0 0.0
    %2526 = vmatprep.subr.mxu0 0.0
    %2527 = vmatpush1.msra.mxu0 0.0
    %2528 = vmatprep.subr.mxu0 0.0
    %2529 = vmatpush1.msra.mxu0 0.0
    %2530 = vmatprep.subr.mxu0 0.0
    %2531 = vmatpush1.msra.mxu0 0.0
    %2532 = vmatprep.subr.mxu0 0.0
    %2533 = vmatpush1.msra.mxu0 0.0
    %2534 = vmatprep.subr.mxu0 0.0
    %2535 = vmatpush1.msra.mxu0 0.0
    %2536 = vmatprep.subr.mxu0 0.0
    %2537 = vmatpush1.msra.mxu0 0.0
    %2538 = vmatprep.subr.mxu0 0.0
    %2539 = vmatpush1.msra.mxu0 0.0
    %2540 = vmatprep.subr.mxu0 0.0
    %2541 = vmatpush1.msra.mxu0 0.0
    %2542 = vmatprep.subr.mxu0 0.0
    %2543 = vmatpush1.msra.mxu0 0.0
    %2544 = vmatprep.subr.mxu0 0.0
    %2545 = vmatpush1.msra.mxu0 0.0
    %2546 = vmatprep.subr.mxu0 0.0
    %2547 = vmatpush1.msra.mxu0 0.0
    %2548 = vmatprep.subr.mxu0 0.0
    %2549 = vmatpush1.msra.mxu0 %v1438
    %2550 = vmatprep.subr.mxu0 0.0
    %2551 = vmatpush1.msra.mxu0 %v1437
    %2552 = vmatprep.subr.mxu0 0.0
    %2553 = vmatpush1.msra.mxu0 %v1436
    %2554 = vmatprep.subr.mxu0 0.0
    %2555 = vmatpush1.msra.mxu0 %v1435
    %2556 = vmatprep.subr.mxu0 0.0
    %2557 = vmatpush2.msra.mxu0 0.0
    %2558 = vmatprep.subr.mxu0 0.0
    %2559 = vmatpush2.msra.mxu0 0.0
    %2560 = vmatprep.subr.mxu0 0.0
    %2561 = vmatpush2.msra.mxu0 0.0
    %2562 = vmatprep.subr.mxu0 0.0
    %2563 = vmatpush2.msra.mxu0 0.0
    %2564 = vmatprep.subr.mxu0 0.0
    %2565 = vmatpush2.msra.mxu0 0.0
    %2566 = vmatprep.subr.mxu0 0.0
    %2567 = vmatpush2.msra.mxu0 0.0
    %2568 = vmatprep.subr.mxu0 0.0
    %2569 = vmatpush2.msra.mxu0 0.0
    %2570 = vmatprep.subr.mxu0 0.0
    %2571 = vmatpush2.msra.mxu0 0.0
    %2572 = vmatprep.subr.mxu0 0.0
    %2573 = vmatpush2.msra.mxu0 0.0
    %2574 = vmatprep.subr.mxu0 0.0
    %2575 = vmatpush2.msra.mxu0 0.0
    %2576 = vmatprep.subr.mxu0 0.0
    %2577 = vmatpush2.msra.mxu0 0.0
    %2578 = vmatprep.subr.mxu0 0.0
    %2579 = vmatpush2.msra.mxu0 0.0
    %2580 = vmatprep.subr.mxu0 0.0
    %2581 = vmatpush2.msra.mxu0 0.0
    %2582 = vmatprep.subr.mxu0 0.0
    %2583 = vmatpush2.msra.mxu0 0.0
    %2584 = vmatprep.subr.mxu0 0.0
    %2585 = vmatpush2.msra.mxu0 0.0
    %2586 = vmatprep.subr.mxu0 0.0
    %2587 = vmatpush2.msra.mxu0 0.0
    %2588 = vmatprep.mubr.f32.mxu0 0.0
    %2589 = vmatmul.mubr.f32.gmra.mxu0 %v2519
    %v2590 = vpop.f32.mrf.mxu0
    %v2591 = vadd.f32 %v2516, %v2590
    %v2592 = vpop.f32.mrf.mxu0
    %2593 = vmatprep.mubr.f32.mxu0 0.0
    %2594 = vmatmul.mubr.f32.gmra.mxu0 %v2522
    %v2595 = vpop.f32.mrf.mxu0
    %v2596 = vadd.f32 %v2516, %v2595
    %v2597 = vpop.f32.mrf.mxu0
    %2598 = vdwg.mxu0
    %v2599 = vmul.f32 %v2591, 0.5
    %v2600 = vmul.f32 %v2596, 0.5
    %v2601 = vmul.f32 %v2591, 0.044715
    %v2602 = vmul.f32 %v2596, 0.044715
    %v2603 = vmul.f32 %v2601, %v2591
    %v2604 = vmul.f32 %v2602, %v2596
    %v2605 = vmul.f32 %v2603, %v2591
    %v2606 = vmul.f32 %v2604, %v2596
    %v2607 = vadd.f32 %v2591, %v2605
    %v2608 = vadd.f32 %v2596, %v2606
    %v2609 = vmul.f32 %v2607, 0.7978846
    %v2610 = vmul.f32 %v2608, 0.7978846
    %v2611 = vtanh.pop %v2609
    %v2612 = vtanh.pop %v2610
    %v2613 = vadd.f32 %v2611, 1.0
    %v2614 = vadd.f32 %v2612, 1.0
    %v2615 = vmul.f32 %v2599, %v2613
    %v2616 = vmul.f32 %v2600, %v2614
    %v2618 = vlaneseq
    %v2619 = vshrl.u32 %v2618, 7
    %v2620 = vsub.s32 0, %v2619
    %v2621 = vrot.slane %v1451, %v2620
    %v2624 = vsel %vm1298, %v2615, 0
    %v2627 = vsel %vm1298, %v2616, 0
    %2629 = vmatprep.subr.mxu0 0.0
    %2630 = vmatpush1.msra.mxu0 0.0
    %2631 = vmatprep.subr.mxu0 0.0
    %2632 = vmatpush1.msra.mxu0 0.0
    %2633 = vmatprep.subr.mxu0 0.0
    %2634 = vmatpush1.msra.mxu0 0.0
    %2635 = vmatprep.subr.mxu0 0.0
    %2636 = vmatpush1.msra.mxu0 0.0
    %2637 = vmatprep.subr.mxu0 0.0
    %2638 = vmatpush1.msra.mxu0 0.0
    %2639 = vmatprep.subr.mxu0 0.0
    %2640 = vmatpush1.msra.mxu0 0.0
    %2641 = vmatprep.subr.mxu0 0.0
    %2642 = vmatpush1.msra.mxu0 0.0
    %2643 = vmatprep.subr.mxu0 0.0
    %2644 = vmatpush1.msra.mxu0 0.0
    %2645 = vmatprep.subr.mxu0 0.0
    %2646 = vmatpush1.msra.mxu0 %v1449
    %2647 = vmatprep.subr.mxu0 0.0
    %2648 = vmatpush1.msra.mxu0 %v1448
    %2649 = vmatprep.subr.mxu0 0.0
    %2650 = vmatpush1.msra.mxu0 %v1447
    %2651 = vmatprep.subr.mxu0 0.0
    %2652 = vmatpush1.msra.mxu0 %v1446
    %2653 = vmatprep.subr.mxu0 0.0
    %2654 = vmatpush1.msra.mxu0 %v1445
    %2655 = vmatprep.subr.mxu0 0.0
    %2656 = vmatpush1.msra.mxu0 %v1444
    %2657 = vmatprep.subr.mxu0 0.0
    %2658 = vmatpush1.msra.mxu0 %v1443
    %2659 = vmatprep.subr.mxu0 0.0
    %2660 = vmatpush1.msra.mxu0 %v1442
    %2661 = vmatprep.subr.mxu0 0.0
    %2662 = vmatpush2.msra.mxu0 0.0
    %2663 = vmatprep.subr.mxu0 0.0
    %2664 = vmatpush2.msra.mxu0 0.0
    %2665 = vmatprep.subr.mxu0 0.0
    %2666 = vmatpush2.msra.mxu0 0.0
    %2667 = vmatprep.subr.mxu0 0.0
    %2668 = vmatpush2.msra.mxu0 0.0
    %2669 = vmatprep.subr.mxu0 0.0
    %2670 = vmatpush2.msra.mxu0 0.0
    %2671 = vmatprep.subr.mxu0 0.0
    %2672 = vmatpush2.msra.mxu0 0.0
    %2673 = vmatprep.subr.mxu0 0.0
    %2674 = vmatpush2.msra.mxu0 0.0
    %2675 = vmatprep.subr.mxu0 0.0
    %2676 = vmatpush2.msra.mxu0 0.0
    %2677 = vmatprep.subr.mxu0 0.0
    %2678 = vmatpush2.msra.mxu0 0.0
    %2679 = vmatprep.subr.mxu0 0.0
    %2680 = vmatpush2.msra.mxu0 0.0
    %2681 = vmatprep.subr.mxu0 0.0
    %2682 = vmatpush2.msra.mxu0 0.0
    %2683 = vmatprep.subr.mxu0 0.0
    %2684 = vmatpush2.msra.mxu0 0.0
    %2685 = vmatprep.subr.mxu0 0.0
    %2686 = vmatpush2.msra.mxu0 0.0
    %2687 = vmatprep.subr.mxu0 0.0
    %2688 = vmatpush2.msra.mxu0 0.0
    %2689 = vmatprep.subr.mxu0 0.0
    %2690 = vmatpush2.msra.mxu0 0.0
    %2691 = vmatprep.subr.mxu0 0.0
    %2692 = vmatpush2.msra.mxu0 0.0
    %2693 = vmatprep.mubr.f32.mxu0 0.0
    %2694 = vmatmul.mubr.f32.gmra.mxu0 %v2624
    %v2695 = vpop.f32.mrf.mxu0
    %v2696 = vadd.f32 %v2621, %v2695
    %v2697 = vpop.f32.mrf.mxu0
    %2698 = vmatprep.mubr.f32.mxu0 0.0
    %2699 = vmatmul.mubr.f32.gmra.mxu0 %v2627
    %v2700 = vpop.f32.mrf.mxu0
    %v2701 = vadd.f32 %v2621, %v2700
    %v2702 = vpop.f32.mrf.mxu0
    %2703 = vdwg.mxu0
    %v2704 = vadd.f32 %v2510, %v2696
    %v2705 = vadd.f32 %v2511, %v2701
    %v2706 = vsel %vm61, %v2704, 0.0
    %2707 = vadd.xlane.f32.xlu0 %v2706
    %v2708 = vpop.xlane.xlu0 %2707
    %v2709 = vsel %vm61, %v2705, 0.0
    %2710 = vadd.xlane.f32.xlu0 %v2709
    %v2711 = vpop.xlane.xlu0 %2710
    %v2712 = vmul.f32 %v2708, %v68
    %v2713 = vmul.f32 %v2711, %v68
    %v2714 = vsub.f32 %v2704, %v2712
    %v2715 = vsub.f32 %v2705, %v2713
    %v2716 = vmul.f32 %v2714, %v2714
    %v2717 = vmul.f32 %v2715, %v2715
    %v2718 = vsel %vm61, %v2716, 0.0
    %2719 = vadd.xlane.f32.xlu0 %v2718
    %v2720 = vpop.xlane.xlu0 %2719
    %v2721 = vsel %vm61, %v2717, 0.0
    %2722 = vadd.xlane.f32.xlu0 %v2721
    %v2723 = vpop.xlane.xlu0 %2722
    %v2724 = vmul.f32 %v2720, %v68
    %v2725 = vmul.f32 %v2723, %v68
    %v2726 = vadd.f32 %v2724, 1e-12
    %v2727 = vadd.f32 %v2725, 1e-12
    %v2728 = vrsqrt.pop %v2726
    %v2729 = vrsqrt.pop %v2727
    %v2730 = vmul.f32 %v2714, %v2728
    %v2731 = vmul.f32 %v2715, %v2729
    %v2732 = vlaneseq
    %v2733 = vshrl.u32 %v2732, 7
    %v2734 = vsub.s32 2, %v2733
    %v2735 = vrot.slane %v1453, %v2734
    %v2736 = vmul.f32 %v2735, %v2730
    %v2737 = vmul.f32 %v2735, %v2731
    %v2738 = vlaneseq
    %v2739 = vshrl.u32 %v2738, 7
    %v2740 = vsub.s32 3, %v2739
    %v2741 = vrot.slane %v1453, %v2740
    %v2742 = vadd.f32 %v2736, %v2741
    %v2743 = vadd.f32 %v2737, %v2741
    %v2745 = vrot.slane %v2742, 1
    %2746 = vrot.lane.b32.xlu0 %v2745, 32
    %v2747 = vpop.permute.xlu0 %2746
    %v2749 = vrot.slane %v2742, 2
    %2750 = vrot.lane.b32.xlu0 %v2749, 64
    %v2751 = vpop.permute.xlu0 %2750
    %v2753 = vrot.slane %v2742, 3
    %2754 = vrot.lane.b32.xlu0 %v2753, 96
    %v2755 = vpop.permute.xlu0 %2754
    %v2757 = vrot.slane %v2742, 4
    %v2759 = vrot.slane %v2742, 5
    %2760 = vrot.lane.b32.xlu0 %v2759, 32
    %v2761 = vpop.permute.xlu0 %2760
    %v2763 = vrot.slane %v2742, 6
    %2764 = vrot.lane.b32.xlu0 %v2763, 64
    %v2765 = vpop.permute.xlu0 %2764
    %v2767 = vrot.slane %v2742, 7
    %2768 = vrot.lane.b32.xlu0 %v2767, 96
    %v2769 = vpop.permute.xlu0 %2768
    %v2771 = vsel %vm61, %v2742, %v2747
    %v2772 = vsel %vm1298, %v2771, %v2751
    %vm2773 = vcmask 785408
    %v2774 = vsel %vm2773, %v2772, %v2755
    %v2775 = vsel %vm61, %v2757, %v2761
    %v2776 = vsel %vm1298, %v2775, %v2765
    %v2777 = vsel %vm2773, %v2776, %v2769
    %v2779 = vrot.slane %v2743, 1
    %2780 = vrot.lane.b32.xlu0 %v2779, 32
    %v2781 = vpop.permute.xlu0 %2780
    %v2783 = vrot.slane %v2743, 2
    %2784 = vrot.lane.b32.xlu0 %v2783, 64
    %v2785 = vpop.permute.xlu0 %2784
    %v2787 = vrot.slane %v2743, 3
    %2788 = vrot.lane.b32.xlu0 %v2787, 96
    %v2789 = vpop.permute.xlu0 %2788
    %v2791 = vrot.slane %v2743, 4
    %v2793 = vrot.slane %v2743, 5
    %2794 = vrot.lane.b32.xlu0 %v2793, 32
    %v2795 = vpop.permute.xlu0 %2794
    %v2797 = vrot.slane %v2743, 6
    %2798 = vrot.lane.b32.xlu0 %v2797, 64
    %v2799 = vpop.permute.xlu0 %2798
    %v2801 = vrot.slane %v2743, 7
    %2802 = vrot.lane.b32.xlu0 %v2801, 96
    %v2803 = vpop.permute.xlu0 %2802
    %v2805 = vsel %vm61, %v2743, %v2781
    %v2806 = vsel %vm1298, %v2805, %v2785
    %v2807 = vsel %vm2773, %v2806, %v2789
    %v2808 = vsel %vm61, %v2791, %v2795
    %v2809 = vsel %vm1298, %v2808, %v2799
    %v2810 = vsel %vm2773, %v2809, %v2803
    %v2813 = vrot.slane %v2807, 7
    %v2814 = vrot.slane %v2810, 7
    %vm2817 = vcmask 1040384
    %v2818 = vsel %vm2817, %v2774, %v2813
    %v2819 = vsel %vm2817, %v2777, %v2814
    %v2822 = vcombine.low %v2818, %v2819
    %v2824 = vunpack.c.l.s4 1983009808
    %v2825 = vunpack.c.0.s8 %v2824
    %v2826 = vlaneseq
    %v2827 = vshrl.u32 %v2826, 7
    %v2828 = vsub.s32 %v2825, %v2827
    %v2829 = vrot.slane %v2822, %v2828
    %2831 = vst [vmem:[%s17] sm:$0xf] %v2829
    %v2832 = vld [vmem:[%s12] sm:$0xff]
    %v2833 = vld [vmem:[%s12 + $0x8] sm:$0xff]
    %v2834 = vld [vmem:[%s12 + $0x10] sm:$0xff]
    %v2835 = vld [vmem:[%s12 + $0x18] sm:$0xff]
    %v2836 = vld [vmem:[%s12 + $0x20] sm:$0xff]
    %v2837 = vld [vmem:[%s12 + $0x28] sm:$0xff]
    %v2838 = vld [vmem:[%s12 + $0x30] sm:$0xff]
    %v2839 = vld [vmem:[%s12 + $0x38] sm:$0xff]
    %v2840 = vld [vmem:[%s12 + $0x40] sm:$0xff]
    %v2841 = vld [vmem:[%s12 + $0x48] sm:$0xff]
    %v2842 = vld [vmem:[%s12 + $0x50] sm:$0xff]
    %v2843 = vld [vmem:[%s12 + $0x58] sm:$0xff]
    %v2844 = vld [vmem:[%s12 + $0x60] sm:$0xff]
    %v2845 = vld [vmem:[%s12 + $0x68] sm:$0xff]
    %v2846 = vld [vmem:[%s12 + $0x70] sm:$0xff]
    %v2847 = vld [vmem:[%s12 + $0x78] sm:$0xff]
    %v2848 = vld [vmem:[%s12 + $0x80] sm:$0xff]
    %v2849 = vld [vmem:[%s12 + $0x88] sm:$0xff]
    %v2850 = vld [vmem:[%s12 + $0x90] sm:$0xff]
    %v2851 = vld [vmem:[%s12 + $0x98] sm:$0xff]
    %v2852 = vld [vmem:[%s12 + $0xa0] sm:$0xff]
    %v2853 = vld [vmem:[%s12 + $0xa8] sm:$0xff]
    %v2854 = vld [vmem:[%s12 + $0xb0] sm:$0xff]
    %v2855 = vld [vmem:[%s12 + $0xb8] sm:$0xff]
    %v2856 = vld [vmem:[%s12 + $0xc0] sm:$0xff]
    %v2857 = vld [vmem:[%s12 + $0xc8] sm:$0xff]
    %v2858 = vld [vmem:[%s12 + $0xd0] sm:$0xff]
    %v2859 = vld [vmem:[%s12 + $0xd8] sm:$0xff]
    %v2860 = vld [vmem:[%s12 + $0xe0] sm:$0xff]
    %v2861 = vld [vmem:[%s12 + $0xe8] sm:$0xff]
    %v2862 = vld [vmem:[%s12 + $0xf0] sm:$0xff]
    %v2863 = vld [vmem:[%s12 + $0xf8] sm:$0xff]
    %v2864 = vld [vmem:[%s13] sm:$0x1]
    %v2866 = vlaneseq
    %v2867 = vshrl.u32 %v2866, 7
    %v2868 = vsub.s32 0, %v2867
    %v2869 = vrot.slane %v2864, %v2868
    %2871 = vmatprep.subr.mxu0 0.0
    %2872 = vmatpush1.msra.mxu0 %v2847
    %2873 = vmatprep.subr.mxu0 0.0
    %2874 = vmatpush1.msra.mxu0 %v2846
    %2875 = vmatprep.subr.mxu0 0.0
    %2876 = vmatpush1.msra.mxu0 %v2845
    %2877 = vmatprep.subr.mxu0 0.0
    %2878 = vmatpush1.msra.mxu0 %v2844
    %2879 = vmatprep.subr.mxu0 0.0
    %2880 = vmatpush1.msra.mxu0 %v2843
    %2881 = vmatprep.subr.mxu0 0.0
    %2882 = vmatpush1.msra.mxu0 %v2842
    %2883 = vmatprep.subr.mxu0 0.0
    %2884 = vmatpush1.msra.mxu0 %v2841
    %2885 = vmatprep.subr.mxu0 0.0
    %2886 = vmatpush1.msra.mxu0 %v2840
    %2887 = vmatprep.subr.mxu0 0.0
    %2888 = vmatpush1.msra.mxu0 %v2839
    %2889 = vmatprep.subr.mxu0 0.0
    %2890 = vmatpush1.msra.mxu0 %v2838
    %2891 = vmatprep.subr.mxu0 0.0
    %2892 = vmatpush1.msra.mxu0 %v2837
    %2893 = vmatprep.subr.mxu0 0.0
    %2894 = vmatpush1.msra.mxu0 %v2836
    %2895 = vmatprep.subr.mxu0 0.0
    %2896 = vmatpush1.msra.mxu0 %v2835
    %2897 = vmatprep.subr.mxu0 0.0
    %2898 = vmatpush1.msra.mxu0 %v2834
    %2899 = vmatprep.subr.mxu0 0.0
    %2900 = vmatpush1.msra.mxu0 %v2833
    %2901 = vmatprep.subr.mxu0 0.0
    %2902 = vmatpush1.msra.mxu0 %v2832
    %2903 = vmatprep.subr.mxu0 0.0
    %2904 = vmatpush2.msra.mxu0 %v2863
    %2905 = vmatprep.subr.mxu0 0.0
    %2906 = vmatpush2.msra.mxu0 %v2862
    %2907 = vmatprep.subr.mxu0 0.0
    %2908 = vmatpush2.msra.mxu0 %v2861
    %2909 = vmatprep.subr.mxu0 0.0
    %2910 = vmatpush2.msra.mxu0 %v2860
    %2911 = vmatprep.subr.mxu0 0.0
    %2912 = vmatpush2.msra.mxu0 %v2859
    %2913 = vmatprep.subr.mxu0 0.0
    %2914 = vmatpush2.msra.mxu0 %v2858
    %2915 = vmatprep.subr.mxu0 0.0
    %2916 = vmatpush2.msra.mxu0 %v2857
    %2917 = vmatprep.subr.mxu0 0.0
    %2918 = vmatpush2.msra.mxu0 %v2856
    %2919 = vmatprep.subr.mxu0 0.0
    %2920 = vmatpush2.msra.mxu0 %v2855
    %2921 = vmatprep.subr.mxu0 0.0
    %2922 = vmatpush2.msra.mxu0 %v2854
    %2923 = vmatprep.subr.mxu0 0.0
    %2924 = vmatpush2.msra.mxu0 %v2853
    %2925 = vmatprep.subr.mxu0 0.0
    %2926 = vmatpush2.msra.mxu0 %v2852
    %2927 = vmatprep.subr.mxu0 0.0
    %2928 = vmatpush2.msra.mxu0 %v2851
    %2929 = vmatprep.subr.mxu0 0.0
    %2930 = vmatpush2.msra.mxu0 %v2850
    %2931 = vmatprep.subr.mxu0 0.0
    %2932 = vmatpush2.msra.mxu0 %v2849
    %2933 = vmatprep.subr.mxu0 0.0
    %2934 = vmatpush2.msra.mxu0 %v2848
    %2935 = vmatprep.mubr.f32.mxu0 %v2819
    %2936 = vmatmul.mubr.f32.gmra.mxu0 %v2818
    %v2937 = vpop.f32.mrf.mxu0
    %v2938 = vadd.f32 %v2869, %v2937
    %v2939 = vpop.f32.mrf.mxu0
    %2940 = vdwg.mxu0
    %v2941 = vld [vmem:[%s14] sm:$0xff]
    %v2942 = vld [vmem:[%s15] sm:$0x1]
    %v2944 = vlaneseq
    %v2945 = vshrl.u32 %v2944, 7
    %v2946 = vsub.s32 0, %v2945
    %v2947 = vrot.slane %v2942, %v2946
    %v2950 = vsel %vm219, %v2938, 0
    %2952 = vmatprep.subr.mxu0 0.0
    %2953 = vmatpush1.msra.mxu0 0.0
    %2954 = vmatprep.subr.mxu0 0.0
    %2955 = vmatpush1.msra.mxu0 0.0
    %2956 = vmatprep.subr.mxu0 0.0
    %2957 = vmatpush1.msra.mxu0 0.0
    %2958 = vmatprep.subr.mxu0 0.0
    %2959 = vmatpush1.msra.mxu0 0.0
    %2960 = vmatprep.subr.mxu0 0.0
    %2961 = vmatpush1.msra.mxu0 0.0
    %2962 = vmatprep.subr.mxu0 0.0
    %2963 = vmatpush1.msra.mxu0 0.0
    %2964 = vmatprep.subr.mxu0 0.0
    %2965 = vmatpush1.msra.mxu0 0.0
    %2966 = vmatprep.subr.mxu0 0.0
    %2967 = vmatpush1.msra.mxu0 0.0
    %2968 = vmatprep.subr.mxu0 0.0
    %2969 = vmatpush1.msra.mxu0 0.0
    %2970 = vmatprep.subr.mxu0 0.0
    %2971 = vmatpush1.msra.mxu0 0.0
    %2972 = vmatprep.subr.mxu0 0.0
    %2973 = vmatpush1.msra.mxu0 0.0
    %2974 = vmatprep.subr.mxu0 0.0
    %2975 = vmatpush1.msra.mxu0 0.0
    %2976 = vmatprep.subr.mxu0 0.0
    %2977 = vmatpush1.msra.mxu0 0.0
    %2978 = vmatprep.subr.mxu0 0.0
    %2979 = vmatpush1.msra.mxu0 0.0
    %2980 = vmatprep.subr.mxu0 0.0
    %2981 = vmatpush1.msra.mxu0 0.0
    %2982 = vmatprep.subr.mxu0 0.0
    %2983 = vmatpush1.msra.mxu0 %v2941
    %2984 = vmatprep.subr.mxu0 0.0
    %2985 = vmatpush2.msra.mxu0 0.0
    %2986 = vmatprep.subr.mxu0 0.0
    %2987 = vmatpush2.msra.mxu0 0.0
    %2988 = vmatprep.subr.mxu0 0.0
    %2989 = vmatpush2.msra.mxu0 0.0
    %2990 = vmatprep.subr.mxu0 0.0
    %2991 = vmatpush2.msra.mxu0 0.0
    %2992 = vmatprep.subr.mxu0 0.0
    %2993 = vmatpush2.msra.mxu0 0.0
    %2994 = vmatprep.subr.mxu0 0.0
    %2995 = vmatpush2.msra.mxu0 0.0
    %2996 = vmatprep.subr.mxu0 0.0
    %2997 = vmatpush2.msra.mxu0 0.0
    %2998 = vmatprep.subr.mxu0 0.0
    %2999 = vmatpush2.msra.mxu0 0.0
    %3000 = vmatprep.subr.mxu0 0.0
    %3001 = vmatpush2.msra.mxu0 0.0
    %3002 = vmatprep.subr.mxu0 0.0
    %3003 = vmatpush2.msra.mxu0 0.0
    %3004 = vmatprep.subr.mxu0 0.0
    %3005 = vmatpush2.msra.mxu0 0.0
    %3006 = vmatprep.subr.mxu0 0.0
    %3007 = vmatpush2.msra.mxu0 0.0
    %3008 = vmatprep.subr.mxu0 0.0
    %3009 = vmatpush2.msra.mxu0 0.0
    %3010 = vmatprep.subr.mxu0 0.0
    %3011 = vmatpush2.msra.mxu0 0.0
    %3012 = vmatprep.subr.mxu0 0.0
    %3013 = vmatpush2.msra.mxu0 0.0
    %3014 = vmatprep.subr.mxu0 0.0
    %3015 = vmatpush2.msra.mxu0 0.0
    %3016 = vmatprep.mubr.f32.mxu0 0.0
    %3017 = vmatmul.mubr.f32.gmra.mxu0 %v2950
    %v3018 = vpop.f32.mrf.mxu0
    %v3019 = vadd.f32 %v2947, %v3018
    %v3020 = vpop.f32.mrf.mxu0
    %3021 = vdwg.mxu0
    %vm3022 = vcmask 25600
    %3023 = vst.msk [vmem:[#allocation2] sm:$0x3] %vm3022, %v3019
    // Predicated region
    $region66: #{bert_ae_forward.1} parent=1 // pred_check
      _
    $region67: #{bert_ae_forward.1} parent=1 // pred_check_branch
      %3025 = sbr.rel (0) target = $region69
    $region68: #{bert_ae_forward.1} parent=1 // pred_region
      %s3027 = ssub.s32 32, 32
      %3028 = vsyncadd [#allocation3], %s3027
      %s3030 = sshll.u32 [#allocation2], 4
      %s3031 = int_to_ptr.vmem [resolvable:$true] %s3030
      %3033 = dma.vmem_to_hbm [thread:$0]  %s3031, 32, %s16, [#allocation3]
    $region69: #{bert_ae_forward.1} parent=1 // pred_fallthru
      _
    // Predicated region
    $region70: #{bert_ae_forward.1} parent=1 // pred_check
      _
    $region71: #{bert_ae_forward.1} parent=1 // pred_check_branch
      %3035 = sbr.rel (0) target = $region73
    $region72: #{bert_ae_forward.1} parent=1 // pred_region
      _
    $region73: #{bert_ae_forward.1} parent=1 // pred_fallthru
      _
    // Predicated region
    $region74: #{bert_ae_forward.1} parent=1 // pred_check
      _
    $region75: #{bert_ae_forward.1} parent=1 // pred_check_branch
      %3037 = sbr.rel (0) target = $region77
    $region76: #{bert_ae_forward.1} parent=1 // pred_region
      %3038 = dma.done [#allocation3], 32
    $region77: #{bert_ae_forward.1} parent=1 // pred_fallthru
      _
    // Predicated region
    $region78: #{bert_ae_forward.1} parent=1 // pred_check
      _
    $region79: #{bert_ae_forward.1} parent=1 // pred_check_branch
      %3040 = sbr.rel (0) target = $region81
    $region80: #{bert_ae_forward.1} parent=1 // pred_region
      _
    $region81: #{bert_ae_forward.1} parent=1 // pred_fallthru
      _
    %3041 = vsyncpa [#allocation3], 1

</llo_original>
